<compile_context>
chip_gen: v7x
topology: tpu7x:2x2x1
jax: 0.10.0
libtpu: 0.0.40
codegen_flags: <defaults>
</compile_context>

<pallas_src>
import functools

import numpy as np
import jax
import jax.numpy as jnp
from jax import lax
from jax.experimental import pallas as pl
from jax.experimental.pallas import tpu as pltpu


# ---------------------------------------------------------------------------
# Constant selector matrices for "2x nearest upsample + pad 1 + 3x3 conv".
# ---------------------------------------------------------------------------
def _tap_matrix(n_in, d):
    """(2*n_in, n_in) 0/1 matrix: row i selects the source row/col that feeds
    conv tap offset d at output position i (an all-zero row == zero padding)."""
    n_out = 2 * n_in
    m = np.zeros((n_out, n_in), np.float32)
    for i in range(n_out):
        y = i + d                      # position in the zero-padded, upsampled axis
        if 1 <= y <= n_out:
            m[i, (y - 1) // 2] = 1.0   # nearest-neighbour source index
    return m


def _pick_batch_tile(batch, max_tile=8):
    """Largest divisor of `batch` <= max_tile that keeps >= 2 grid steps
    (so both v7x TensorCores stay busy); falls back to 1."""
    best = 1
    for t in range(1, min(batch, max_tile) + 1):
        if batch % t == 0 and batch // t >= 2:
            best = t
    return best


# ---------------------------------------------------------------------------
# Parameters (PyTorch-equivalent layout) + one-time folding for the kernel.
# ---------------------------------------------------------------------------
def init_decoder_params(key, nc, ndf, nz, isize):
    out_size = isize // 16
    keys = jax.random.split(key, 8)

    def norm(kk, shape, s=0.05):
        return (s * jax.random.normal(kk, shape)).astype(jnp.float32)

    dout = ndf * 8 * out_size * out_size
    params = {
        "dense_w": norm(keys[0], (nz, dout)),
        "dense_b": norm(keys[1], (dout,)),
        "convs": [],
    }
    chans = [ndf * 8, ndf * 4, ndf * 2, ndf, nc]
    eps = 1e-3                                    # BatchNorm2d(C, 0.001)
    for i in range(4):
        cin, cout = chans[i], chans[i + 1]
        wk, bk, gk, bek = jax.random.split(keys[2 + i], 4)
        conv = {"w": norm(wk, (3, 3, cin, cout)), "b": norm(bk, (cout,))}
        if i < 3:
            gamma = (1.0 + 0.1 * jax.random.normal(gk, (cout,))).astype(jnp.float32)
            beta = (0.1 * jax.random.normal(bek, (cout,))).astype(jnp.float32)
            running_mean = jnp.zeros((cout,), jnp.float32)
            running_var = jnp.ones((cout,), jnp.float32)
            bn_scale = gamma / jnp.sqrt(running_var + eps)
            conv["bn_scale"] = bn_scale
            conv["bn_shift"] = beta - running_mean * bn_scale
        params["convs"].append(conv)
    return params


def fold_decoder_params(params, *, nc, ndf, nz, isize, batch_tile):
    """Fold PyTorch-form weights into the kernel's matmul operands (once)."""
    bt = batch_tile
    s0 = isize // 16
    c0 = ndf * 8
    wc0 = s0 * c0
    hi_prec = lax.Precision.HIGHEST

    # Dense weight laid out so (x @ wd)[:, i*W0*C0 + j*C0 + c] is the dense
    # output for (channel c, height i, width j): one matmul, then per-height
    # lane slices are written into the (H0*Bt, W0*C0) activation layout.
    wd = (params["dense_w"].reshape(nz, c0, s0, s0)
          .transpose(0, 2, 3, 1).reshape(nz, s0 * s0 * c0)).astype(jnp.bfloat16)
    bd = (params["dense_b"].reshape(c0, s0, s0)
          .transpose(1, 2, 0).reshape(s0, s0 * c0))            # f32 (H0, W0*C0)

    stages = []
    hin = win = s0
    n_stages = len(params["convs"])
    for si, conv in enumerate(params["convs"]):
        w, b = conv["w"], conv["b"]                             # (3,3,Cin,Cout), (Cout,)
        cin, cout = int(w.shape[2]), int(w.shape[3])
        hout, wout = 2 * hin, 2 * win
        cout_p = cout
        if si == n_stages - 1:
            # Pad final output channels so Wout*Cout is a 128 multiple
            # (lane-dense slices + unmasked output stores).  Padded columns
            # of M and bias are exactly zero and sliced off in the wrapper.
            while (wout * cout_p) % 128 != 0:
                cout_p += 1
            if cout_p != cout:
                w = jnp.pad(w, ((0, 0), (0, 0), (0, 0), (0, cout_p - cout)))
                b = jnp.pad(b, ((0, cout_p - cout),))

        # Row selectors, kron-folded with I_Bt (rows ordered as i*Bt + b).
        r = np.stack([_tap_matrix(hin, d) for d in range(3)])   # (3, Hout, Hin)
        rb = np.stack([np.kron(r[d], np.eye(bt, dtype=np.float32)) for d in range(3)])

        # Column selector kron-folded with the conv weights:
        # M[dy, s*Cin+ci, j*Cout+co] = sum_dx C[dx, j, s] * w[dy, dx, ci, co],
        # then the three taps concatenated along N for one wide MXU matmul.
        c = jnp.asarray(np.stack([_tap_matrix(win, d) for d in range(3)]))  # (3,Wout,Win)
        m = jnp.einsum("xjs,yxio->ysijo", c, w,
                       precision=hi_prec).reshape(3, win * cin, wout * cout_p)
        m_cat = jnp.concatenate([m[0], m[1], m[2]], axis=1)     # (Win*Cin, 3*Wout*Coutp)

        st = {
            "R": jnp.asarray(rb).astype(jnp.bfloat16),          # exact 0/1 in bf16
            "M": m_cat.astype(jnp.bfloat16),
            "bias": jnp.tile(b, wout).reshape(1, wout * cout_p),          # f32
        }
        if "bn_scale" in conv:
            st["scale"] = jnp.tile(conv["bn_scale"], wout).reshape(1, wout * cout_p)
            st["shift"] = jnp.tile(conv["bn_shift"], wout).reshape(1, wout * cout_p)
        stages.append(st)
        hin, win = hout, wout
    return {"wd": wd, "bd": bd, "stages": stages}


# ---------------------------------------------------------------------------
# The fused kernel.
# ---------------------------------------------------------------------------
def _make_decoder_kernel(bt, h0_rows, wc0, stage_meta):
    """stage_meta: tuple of (Hout, Wout*Cout, has_act) per conv stage."""

    def kernel(*refs):
        x_ref, wd_ref, bd_ref = refs[0], refs[1], refs[2]
        out_ref, h0_scr = refs[-2], refs[-1]
        stage_refs = refs[3:-2]

        # ---- Linear(nz, C0*H0*W0) + ReLU, emitted in (H0*Bt, W0*C0) layout --
        x_bf = x_ref[0].astype(jnp.bfloat16)                    # (Bt, nz)
        y0 = jnp.dot(x_bf, wd_ref[...],
                     preferred_element_type=jnp.float32)        # (Bt, H0*W0*C0)
        bd = bd_ref[...]                                        # (H0, W0*C0)
        for i in range(h0_rows):                                # tiny: H0 = isize//16
            blk = jnp.maximum(y0[:, i * wc0:(i + 1) * wc0] + bd[i:i + 1, :], 0.0)
            h0_scr[pl.ds(i * bt, bt), :] = blk                  # rows i*Bt .. i*Bt+Bt-1
        h = h0_scr[...]                                         # f32 (H0*Bt, W0*C0)

        # ---- 4x (2x nearest upsample + conv3x3 [+ LeakyReLU + BatchNorm]) ---
        idx = 0
        for hout, wc_out, has_act in stage_meta:
            r_ref, m_ref, b_ref = stage_refs[idx], stage_refs[idx + 1], stage_refs[idx + 2]
            idx += 3
            if has_act:
                sc_ref, sh_ref = stage_refs[idx], stage_refs[idx + 1]
                idx += 2

            hb = h.astype(jnp.bfloat16)                         # (Bt*Hin, Win*Cin)
            # One wide bf16 MXU matmul covering all three conv-kernel rows
            # (reassociated: contraction over Hin rows, not Hout).
            u = jnp.dot(hb, m_ref[...],
                        preferred_element_type=jnp.float32)     # (Bt*Hin, 3*wc_out)
            ub = u.astype(jnp.bfloat16)
            y = b_ref[...]                                      # (1, wc_out) f32
            for dy in range(3):                                 # tiny K = Bt*Hin dots
                y = y + jnp.dot(r_ref[dy], ub[:, dy * wc_out:(dy + 1) * wc_out],
                                preferred_element_type=jnp.float32)
            if has_act:
                y = jnp.where(y > 0, y, 0.2 * y)                # LeakyReLU(0.2)
                y = y * sc_ref[...] + sh_ref[...]               # eval-mode BatchNorm
            h = y                                               # (Bt*Hout, wc_out) f32

        out_ref[0] = h                                          # (Bt*H_last, wc_last)

    return kernel


def _const_spec(shape):
    zeros = (0,) * len(shape)
    return pl.BlockSpec(tuple(int(s) for s in shape), lambda g, _z=zeros: _z)


def decoder_forward(folded, x, *, nc, bt):
    B, nz = x.shape
    if B % bt != 0:
        raise ValueError(f"batch {B} not divisible by batch tile {bt}")
    G = B // bt

    wd, bd = folded["wd"], folded["bd"]
    h0_rows, wc0 = int(bd.shape[0]), int(bd.shape[1])

    x_resh = x.reshape(G, bt, nz)
    inputs = [x_resh, wd, bd]
    in_specs = [
        pl.BlockSpec((1, bt, nz), lambda g: (g, 0, 0)),
        _const_spec(wd.shape),
        _const_spec(bd.shape),
    ]
    stage_meta = []
    for st in folded["stages"]:
        has_act = "scale" in st
        hout = int(st["R"].shape[1]) // bt
        wc_out = int(st["M"].shape[1]) // 3
        stage_meta.append((hout, wc_out, has_act))
        arrs = [st["R"], st["M"], st["bias"]]
        if has_act:
            arrs += [st["scale"], st["shift"]]
        for a in arrs:
            inputs.append(a)
            in_specs.append(_const_spec(a.shape))

    h_last, wc_last, _ = stage_meta[-1]
    kernel = _make_decoder_kernel(bt, h0_rows, wc0, tuple(stage_meta))

    out = pl.pallas_call(
        kernel,
        out_shape=jax.ShapeDtypeStruct((G, bt * h_last, wc_last), jnp.float32),
        grid_spec=pltpu.PrefetchScalarGridSpec(
            num_scalar_prefetch=0,
            grid=(G,),
            in_specs=in_specs,
            out_specs=pl.BlockSpec((1, bt * h_last, wc_last), lambda g: (g, 0, 0)),
            scratch_shapes=[pltpu.VMEM((h0_rows * bt, wc0), jnp.float32)],
        ),
        compiler_params=pltpu.CompilerParams(dimension_semantics=("parallel",)),
    )(*inputs)

    # Images are square here, so W_last == H_last; recover the (padded) channel
    # count, un-interleave (height, image) rows and (width, channel) lanes,
    # and drop the zero-padded channels to match the PyTorch NCHW output.
    w_last = h_last
    c_p = wc_last // w_last
    out = out.reshape(G, h_last, bt, w_last, c_p)
    out = out.transpose(0, 2, 4, 1, 3).reshape(B, c_p, h_last, w_last)
    return out[:, :nc]


# ---------------------------------------------------------------------------
# Pure-JAX (XLA) reference of the same eval-mode forward, for validation.
# ---------------------------------------------------------------------------
def decoder_reference(params, x, *, nc, ndf, nz, isize):
    s0 = isize // 16
    B = x.shape[0]
    h = jnp.maximum(x @ params["dense_w"] + params["dense_b"], 0.0)
    h = h.reshape(B, ndf * 8, s0, s0)                         # NCHW
    for conv in params["convs"]:
        h = jnp.repeat(jnp.repeat(h, 2, axis=2), 2, axis=3)   # nearest 2x
        h = lax.conv_general_dilated(
            h, conv["w"], window_strides=(1, 1), padding=((1, 1), (1, 1)),
            dimension_numbers=("NCHW", "HWIO", "NCHW"))
        h = h + conv["b"].reshape(1, -1, 1, 1)
        if "bn_scale" in conv:
            h = jnp.where(h > 0, h, 0.2 * h)
            h = (h * conv["bn_scale"].reshape(1, -1, 1, 1)
                 + conv["bn_shift"].reshape(1, -1, 1, 1))
    return h


if __name__ == "__main__":
    nc, ndf, nz, isize = 3, 8, 16, 32
    B = 4
    key = jax.random.PRNGKey(0)
    pkey, xkey = jax.random.split(key)
    params = init_decoder_params(pkey, nc, ndf, nz, isize)
    x = jax.random.normal(xkey, (B, nz), dtype=jnp.float32)   # latent input

    bt = _pick_batch_tile(B)                                  # B=4 -> Bt=2, grid=(2,)
    folded = fold_decoder_params(params, nc=nc, ndf=ndf, nz=nz, isize=isize,
                                 batch_tile=bt)
    fwd = jax.jit(functools.partial(decoder_forward, nc=nc, bt=bt))
    out = jax.block_until_ready(fwd(folded, x))
    assert out.shape == (B, nc, isize, isize), out.shape
    assert out.dtype == jnp.float32

    ref = jax.block_until_ready(
        decoder_reference(params, x, nc=nc, ndf=ndf, nz=nz, isize=isize))
    err = float(jnp.max(jnp.abs(out - ref)))
    assert jnp.allclose(out, ref, rtol=5e-2, atol=2e-2), err
    print("KERNEL_OK")
</pallas_src>

<mosaic_0001>
module attributes {stable_mosaic.version = 11 : i64} {
  func.func @kernel(%arg0: i32, %arg1: memref<1x2x16xf32, #tpu.memory_space<vmem>>, %arg2: memref<16x256xbf16, #tpu.memory_space<vmem>>, %arg3: memref<2x128xf32, #tpu.memory_space<vmem>>, %arg4: memref<3x8x4xbf16, #tpu.memory_space<vmem>>, %arg5: memref<128x384xbf16, #tpu.memory_space<vmem>>, %arg6: memref<1x128xf32, #tpu.memory_space<vmem>>, %arg7: memref<1x128xf32, #tpu.memory_space<vmem>>, %arg8: memref<1x128xf32, #tpu.memory_space<vmem>>, %arg9: memref<3x16x8xbf16, #tpu.memory_space<vmem>>, %arg10: memref<128x384xbf16, #tpu.memory_space<vmem>>, %arg11: memref<1x128xf32, #tpu.memory_space<vmem>>, %arg12: memref<1x128xf32, #tpu.memory_space<vmem>>, %arg13: memref<1x128xf32, #tpu.memory_space<vmem>>, %arg14: memref<3x32x16xbf16, #tpu.memory_space<vmem>>, %arg15: memref<128x384xbf16, #tpu.memory_space<vmem>>, %arg16: memref<1x128xf32, #tpu.memory_space<vmem>>, %arg17: memref<1x128xf32, #tpu.memory_space<vmem>>, %arg18: memref<1x128xf32, #tpu.memory_space<vmem>>, %arg19: memref<3x64x32xbf16, #tpu.memory_space<vmem>>, %arg20: memref<128x384xbf16, #tpu.memory_space<vmem>>, %arg21: memref<1x128xf32, #tpu.memory_space<vmem>>, %arg22: memref<1x64x128xf32, #tpu.memory_space<vmem>>, %arg23: memref<4x128xf32, #tpu.memory_space<vmem>>) attributes {dimension_semantics = [#tpu.dimension_semantics<parallel>], iteration_bounds = array<i64: 2>, scalar_prefetch = 0 : i64, scratch_operands = 1 : i64, tpu.core_type = #tpu.core_type<tc>, window_params = [{transform_indices = @transform_0, window_bounds = array<i64: 1, 2, 16>}, {pipeline_mode = #tpu.pipeline_mode<synchronous>, transform_indices = @transform_1, window_bounds = array<i64: 16, 256>}, {pipeline_mode = #tpu.pipeline_mode<synchronous>, transform_indices = @transform_2, window_bounds = array<i64: 2, 128>}, {pipeline_mode = #tpu.pipeline_mode<synchronous>, transform_indices = @transform_3, window_bounds = array<i64: 3, 8, 4>}, {pipeline_mode = #tpu.pipeline_mode<synchronous>, transform_indices = @transform_4, window_bounds = array<i64: 128, 384>}, {pipeline_mode = #tpu.pipeline_mode<synchronous>, transform_indices = @transform_5, window_bounds = array<i64: 1, 128>}, {pipeline_mode = #tpu.pipeline_mode<synchronous>, transform_indices = @transform_6, window_bounds = array<i64: 1, 128>}, {pipeline_mode = #tpu.pipeline_mode<synchronous>, transform_indices = @transform_7, window_bounds = array<i64: 1, 128>}, {pipeline_mode = #tpu.pipeline_mode<synchronous>, transform_indices = @transform_8, window_bounds = array<i64: 3, 16, 8>}, {pipeline_mode = #tpu.pipeline_mode<synchronous>, transform_indices = @transform_9, window_bounds = array<i64: 128, 384>}, {pipeline_mode = #tpu.pipeline_mode<synchronous>, transform_indices = @transform_10, window_bounds = array<i64: 1, 128>}, {pipeline_mode = #tpu.pipeline_mode<synchronous>, transform_indices = @transform_11, window_bounds = array<i64: 1, 128>}, {pipeline_mode = #tpu.pipeline_mode<synchronous>, transform_indices = @transform_12, window_bounds = array<i64: 1, 128>}, {pipeline_mode = #tpu.pipeline_mode<synchronous>, transform_indices = @transform_13, window_bounds = array<i64: 3, 32, 16>}, {pipeline_mode = #tpu.pipeline_mode<synchronous>, transform_indices = @transform_14, window_bounds = array<i64: 128, 384>}, {pipeline_mode = #tpu.pipeline_mode<synchronous>, transform_indices = @transform_15, window_bounds = array<i64: 1, 128>}, {pipeline_mode = #tpu.pipeline_mode<synchronous>, transform_indices = @transform_16, window_bounds = array<i64: 1, 128>}, {pipeline_mode = #tpu.pipeline_mode<synchronous>, transform_indices = @transform_17, window_bounds = array<i64: 1, 128>}, {pipeline_mode = #tpu.pipeline_mode<synchronous>, transform_indices = @transform_18, window_bounds = array<i64: 3, 64, 32>}, {pipeline_mode = #tpu.pipeline_mode<synchronous>, transform_indices = @transform_19, window_bounds = array<i64: 128, 384>}, {pipeline_mode = #tpu.pipeline_mode<synchronous>, transform_indices = @transform_20, window_bounds = array<i64: 1, 128>}, {transform_indices = @transform_21, window_bounds = array<i64: 1, 64, 128>}]} {
    %c0 = arith.constant 0 : index
    %c0_0 = arith.constant 0 : index
    %c0_1 = arith.constant 0 : index
    %0 = vector.load %arg1[%c0, %c0_0, %c0_1] : memref<1x2x16xf32, #tpu.memory_space<vmem>>, vector<1x2x16xf32>
    %1 = vector.shape_cast %0 : vector<1x2x16xf32> to vector<2x16xf32>
    %2 = arith.truncf %1 : vector<2x16xf32> to vector<2x16xbf16>
    %c0_2 = arith.constant 0 : index
    %c0_3 = arith.constant 0 : index
    %3 = vector.load %arg2[%c0_2, %c0_3] : memref<16x256xbf16, #tpu.memory_space<vmem>>, vector<16x256xbf16>
    %cst = arith.constant dense<0.000000e+00> : vector<2x256xf32>
    %4 = tpu.matmul %2, %3, %cst {dimension_numbers = #tpu.dot_dimension_numbers<[1], [0], [0], [1], [0, 0, 1, 1], [], []>} : vector<2x16xbf16>, vector<16x256xbf16>, vector<2x256xf32> -> vector<2x256xf32>
    %c0_4 = arith.constant 0 : index
    %c0_5 = arith.constant 0 : index
    %5 = vector.load %arg3[%c0_4, %c0_5] : memref<2x128xf32, #tpu.memory_space<vmem>>, vector<2x128xf32>
    %6 = vector.extract_strided_slice %4 {offsets = [0, 0], sizes = [2, 128], strides = [1, 1]} : vector<2x256xf32> to vector<2x128xf32>
    %7 = vector.extract_strided_slice %5 {offsets = [0, 0], sizes = [1, 128], strides = [1, 1]} : vector<2x128xf32> to vector<1x128xf32>
    %8 = vector.broadcast %7 : vector<1x128xf32> to vector<2x128xf32>
    %9 = arith.addf %6, %8 : vector<2x128xf32>
    %cst_6 = arith.constant 0.000000e+00 : f32
    %10 = vector.broadcast %cst_6 : f32 to vector<2x128xf32>
    %11 = arith.maximumf %9, %10 : vector<2x128xf32>
    %c0_7 = arith.constant 0 : index
    %c0_8 = arith.constant 0 : index
    %12 = vector.load %arg23[%c0_7, %c0_8] : memref<4x128xf32, #tpu.memory_space<vmem>>, vector<2x128xf32>
    tpu.vector_store %arg23[%c0_7, %c0_8], %11 {strides = array<i32>} : memref<4x128xf32, #tpu.memory_space<vmem>>, vector<2x128xf32>,
    %13 = vector.extract_strided_slice %4 {offsets = [0, 128], sizes = [2, 128], strides = [1, 1]} : vector<2x256xf32> to vector<2x128xf32>
    %14 = vector.extract_strided_slice %5 {offsets = [1, 0], sizes = [1, 128], strides = [1, 1]} : vector<2x128xf32> to vector<1x128xf32>
    %15 = vector.broadcast %14 : vector<1x128xf32> to vector<2x128xf32>
    %16 = arith.addf %13, %15 : vector<2x128xf32>
    %cst_9 = arith.constant 0.000000e+00 : f32
    %17 = vector.broadcast %cst_9 : f32 to vector<2x128xf32>
    %18 = arith.maximumf %16, %17 : vector<2x128xf32>
    %c2 = arith.constant 2 : index
    %c0_10 = arith.constant 0 : index
    %19 = vector.load %arg23[%c2, %c0_10] : memref<4x128xf32, #tpu.memory_space<vmem>>, vector<2x128xf32>
    tpu.vector_store %arg23[%c2, %c0_10], %18 {strides = array<i32>} : memref<4x128xf32, #tpu.memory_space<vmem>>, vector<2x128xf32>,
    %c0_11 = arith.constant 0 : index
    %c0_12 = arith.constant 0 : index
    %20 = vector.load %arg23[%c0_11, %c0_12] : memref<4x128xf32, #tpu.memory_space<vmem>>, vector<4x128xf32>
    %21 = arith.truncf %20 : vector<4x128xf32> to vector<4x128xbf16>
    %c0_13 = arith.constant 0 : index
    %c0_14 = arith.constant 0 : index
    %22 = vector.load %arg5[%c0_13, %c0_14] : memref<128x384xbf16, #tpu.memory_space<vmem>>, vector<128x384xbf16>
    %cst_15 = arith.constant dense<0.000000e+00> : vector<4x384xf32>
    %23 = tpu.matmul %21, %22, %cst_15 {dimension_numbers = #tpu.dot_dimension_numbers<[1], [0], [0], [1], [0, 0, 1, 1], [], []>} : vector<4x128xbf16>, vector<128x384xbf16>, vector<4x384xf32> -> vector<4x384xf32>
    %24 = arith.truncf %23 : vector<4x384xf32> to vector<4x384xbf16>
    %c0_16 = arith.constant 0 : index
    %c0_17 = arith.constant 0 : index
    %25 = vector.load %arg6[%c0_16, %c0_17] : memref<1x128xf32, #tpu.memory_space<vmem>>, vector<1x128xf32>
    %c0_18 = arith.constant 0 : index
    %c0_19 = arith.constant 0 : index
    %c0_20 = arith.constant 0 : index
    %26 = vector.load %arg4[%c0_18, %c0_19, %c0_20] : memref<3x8x4xbf16, #tpu.memory_space<vmem>>, vector<1x8x4xbf16>
    %27 = vector.shape_cast %26 : vector<1x8x4xbf16> to vector<8x4xbf16>
    %28 = vector.extract_strided_slice %24 {offsets = [0, 0], sizes = [4, 128], strides = [1, 1]} : vector<4x384xbf16> to vector<4x128xbf16>
    %cst_21 = arith.constant dense<0.000000e+00> : vector<8x128xf32>
    %29 = tpu.matmul %27, %28, %cst_21 {dimension_numbers = #tpu.dot_dimension_numbers<[1], [0], [0], [1], [0, 0, 1, 1], [], []>} : vector<8x4xbf16>, vector<4x128xbf16>, vector<8x128xf32> -> vector<8x128xf32>
    %30 = vector.broadcast %25 : vector<1x128xf32> to vector<8x128xf32>
    %31 = arith.addf %30, %29 : vector<8x128xf32>
    %c1 = arith.constant 1 : index
    %c0_22 = arith.constant 0 : index
    %c0_23 = arith.constant 0 : index
    %32 = vector.load %arg4[%c1, %c0_22, %c0_23] : memref<3x8x4xbf16, #tpu.memory_space<vmem>>, vector<1x8x4xbf16>
    %33 = vector.shape_cast %32 : vector<1x8x4xbf16> to vector<8x4xbf16>
    %34 = vector.extract_strided_slice %24 {offsets = [0, 128], sizes = [4, 128], strides = [1, 1]} : vector<4x384xbf16> to vector<4x128xbf16>
    %cst_24 = arith.constant dense<0.000000e+00> : vector<8x128xf32>
    %35 = tpu.matmul %33, %34, %cst_24 {dimension_numbers = #tpu.dot_dimension_numbers<[1], [0], [0], [1], [0, 0, 1, 1], [], []>} : vector<8x4xbf16>, vector<4x128xbf16>, vector<8x128xf32> -> vector<8x128xf32>
    %36 = arith.addf %31, %35 : vector<8x128xf32>
    %c2_25 = arith.constant 2 : index
    %c0_26 = arith.constant 0 : index
    %c0_27 = arith.constant 0 : index
    %37 = vector.load %arg4[%c2_25, %c0_26, %c0_27] : memref<3x8x4xbf16, #tpu.memory_space<vmem>>, vector<1x8x4xbf16>
    %38 = vector.shape_cast %37 : vector<1x8x4xbf16> to vector<8x4xbf16>
    %39 = vector.extract_strided_slice %24 {offsets = [0, 256], sizes = [4, 128], strides = [1, 1]} : vector<4x384xbf16> to vector<4x128xbf16>
    %cst_28 = arith.constant dense<0.000000e+00> : vector<8x128xf32>
    %40 = tpu.matmul %38, %39, %cst_28 {dimension_numbers = #tpu.dot_dimension_numbers<[1], [0], [0], [1], [0, 0, 1, 1], [], []>} : vector<8x4xbf16>, vector<4x128xbf16>, vector<8x128xf32> -> vector<8x128xf32>
    %41 = arith.addf %36, %40 : vector<8x128xf32>
    %cst_29 = arith.constant 0.000000e+00 : f32
    %42 = vector.broadcast %cst_29 : f32 to vector<8x128xf32>
    %43 = arith.cmpf ogt, %41, %42 : vector<8x128xf32>
    %cst_30 = arith.constant 2.000000e-01 : f32
    %44 = vector.broadcast %cst_30 : f32 to vector<8x128xf32>
    %45 = arith.mulf %44, %41 : vector<8x128xf32>
    %46 = arith.select %43, %41, %45 : vector<8x128xi1>, vector<8x128xf32>
    %c0_31 = arith.constant 0 : index
    %c0_32 = arith.constant 0 : index
    %47 = vector.load %arg7[%c0_31, %c0_32] : memref<1x128xf32, #tpu.memory_space<vmem>>, vector<1x128xf32>
    %48 = vector.broadcast %47 : vector<1x128xf32> to vector<8x128xf32>
    %49 = arith.mulf %46, %48 : vector<8x128xf32>
    %c0_33 = arith.constant 0 : index
    %c0_34 = arith.constant 0 : index
    %50 = vector.load %arg8[%c0_33, %c0_34] : memref<1x128xf32, #tpu.memory_space<vmem>>, vector<1x128xf32>
    %51 = vector.broadcast %50 : vector<1x128xf32> to vector<8x128xf32>
    %52 = arith.addf %49, %51 : vector<8x128xf32>
    %53 = arith.truncf %52 : vector<8x128xf32> to vector<8x128xbf16>
    %c0_35 = arith.constant 0 : index
    %c0_36 = arith.constant 0 : index
    %54 = vector.load %arg10[%c0_35, %c0_36] : memref<128x384xbf16, #tpu.memory_space<vmem>>, vector<128x384xbf16>
    %cst_37 = arith.constant dense<0.000000e+00> : vector<8x384xf32>
    %55 = tpu.matmul %53, %54, %cst_37 {dimension_numbers = #tpu.dot_dimension_numbers<[1], [0], [0], [1], [0, 0, 1, 1], [], []>} : vector<8x128xbf16>, vector<128x384xbf16>, vector<8x384xf32> -> vector<8x384xf32>
    %56 = arith.truncf %55 : vector<8x384xf32> to vector<8x384xbf16>
    %c0_38 = arith.constant 0 : index
    %c0_39 = arith.constant 0 : index
    %57 = vector.load %arg11[%c0_38, %c0_39] : memref<1x128xf32, #tpu.memory_space<vmem>>, vector<1x128xf32>
    %c0_40 = arith.constant 0 : index
    %c0_41 = arith.constant 0 : index
    %c0_42 = arith.constant 0 : index
    %58 = vector.load %arg9[%c0_40, %c0_41, %c0_42] : memref<3x16x8xbf16, #tpu.memory_space<vmem>>, vector<1x16x8xbf16>
    %59 = vector.shape_cast %58 : vector<1x16x8xbf16> to vector<16x8xbf16>
    %60 = vector.extract_strided_slice %56 {offsets = [0, 0], sizes = [8, 128], strides = [1, 1]} : vector<8x384xbf16> to vector<8x128xbf16>
    %cst_43 = arith.constant dense<0.000000e+00> : vector<16x128xf32>
    %61 = tpu.matmul %59, %60, %cst_43 {dimension_numbers = #tpu.dot_dimension_numbers<[1], [0], [0], [1], [0, 0, 1, 1], [], []>} : vector<16x8xbf16>, vector<8x128xbf16>, vector<16x128xf32> -> vector<16x128xf32>
    %62 = vector.broadcast %57 : vector<1x128xf32> to vector<16x128xf32>
    %63 = arith.addf %62, %61 : vector<16x128xf32>
    %c1_44 = arith.constant 1 : index
    %c0_45 = arith.constant 0 : index
    %c0_46 = arith.constant 0 : index
    %64 = vector.load %arg9[%c1_44, %c0_45, %c0_46] : memref<3x16x8xbf16, #tpu.memory_space<vmem>>, vector<1x16x8xbf16>
    %65 = vector.shape_cast %64 : vector<1x16x8xbf16> to vector<16x8xbf16>
    %66 = vector.extract_strided_slice %56 {offsets = [0, 128], sizes = [8, 128], strides = [1, 1]} : vector<8x384xbf16> to vector<8x128xbf16>
    %cst_47 = arith.constant dense<0.000000e+00> : vector<16x128xf32>
    %67 = tpu.matmul %65, %66, %cst_47 {dimension_numbers = #tpu.dot_dimension_numbers<[1], [0], [0], [1], [0, 0, 1, 1], [], []>} : vector<16x8xbf16>, vector<8x128xbf16>, vector<16x128xf32> -> vector<16x128xf32>
    %68 = arith.addf %63, %67 : vector<16x128xf32>
    %c2_48 = arith.constant 2 : index
    %c0_49 = arith.constant 0 : index
    %c0_50 = arith.constant 0 : index
    %69 = vector.load %arg9[%c2_48, %c0_49, %c0_50] : memref<3x16x8xbf16, #tpu.memory_space<vmem>>, vector<1x16x8xbf16>
    %70 = vector.shape_cast %69 : vector<1x16x8xbf16> to vector<16x8xbf16>
    %71 = vector.extract_strided_slice %56 {offsets = [0, 256], sizes = [8, 128], strides = [1, 1]} : vector<8x384xbf16> to vector<8x128xbf16>
    %cst_51 = arith.constant dense<0.000000e+00> : vector<16x128xf32>
    %72 = tpu.matmul %70, %71, %cst_51 {dimension_numbers = #tpu.dot_dimension_numbers<[1], [0], [0], [1], [0, 0, 1, 1], [], []>} : vector<16x8xbf16>, vector<8x128xbf16>, vector<16x128xf32> -> vector<16x128xf32>
    %73 = arith.addf %68, %72 : vector<16x128xf32>
    %cst_52 = arith.constant 0.000000e+00 : f32
    %74 = vector.broadcast %cst_52 : f32 to vector<16x128xf32>
    %75 = arith.cmpf ogt, %73, %74 : vector<16x128xf32>
    %cst_53 = arith.constant 2.000000e-01 : f32
    %76 = vector.broadcast %cst_53 : f32 to vector<16x128xf32>
    %77 = arith.mulf %76, %73 : vector<16x128xf32>
    %78 = arith.select %75, %73, %77 : vector<16x128xi1>, vector<16x128xf32>
    %c0_54 = arith.constant 0 : index
    %c0_55 = arith.constant 0 : index
    %79 = vector.load %arg12[%c0_54, %c0_55] : memref<1x128xf32, #tpu.memory_space<vmem>>, vector<1x128xf32>
    %80 = vector.broadcast %79 : vector<1x128xf32> to vector<16x128xf32>
    %81 = arith.mulf %78, %80 : vector<16x128xf32>
    %c0_56 = arith.constant 0 : index
    %c0_57 = arith.constant 0 : index
    %82 = vector.load %arg13[%c0_56, %c0_57] : memref<1x128xf32, #tpu.memory_space<vmem>>, vector<1x128xf32>
    %83 = vector.broadcast %82 : vector<1x128xf32> to vector<16x128xf32>
    %84 = arith.addf %81, %83 : vector<16x128xf32>
    %85 = arith.truncf %84 : vector<16x128xf32> to vector<16x128xbf16>
    %c0_58 = arith.constant 0 : index
    %c0_59 = arith.constant 0 : index
    %86 = vector.load %arg15[%c0_58, %c0_59] : memref<128x384xbf16, #tpu.memory_space<vmem>>, vector<128x384xbf16>
    %cst_60 = arith.constant dense<0.000000e+00> : vector<16x384xf32>
    %87 = tpu.matmul %85, %86, %cst_60 {dimension_numbers = #tpu.dot_dimension_numbers<[1], [0], [0], [1], [0, 0, 1, 1], [], []>} : vector<16x128xbf16>, vector<128x384xbf16>, vector<16x384xf32> -> vector<16x384xf32>
    %88 = arith.truncf %87 : vector<16x384xf32> to vector<16x384xbf16>
    %c0_61 = arith.constant 0 : index
    %c0_62 = arith.constant 0 : index
    %89 = vector.load %arg16[%c0_61, %c0_62] : memref<1x128xf32, #tpu.memory_space<vmem>>, vector<1x128xf32>
    %c0_63 = arith.constant 0 : index
    %c0_64 = arith.constant 0 : index
    %c0_65 = arith.constant 0 : index
    %90 = vector.load %arg14[%c0_63, %c0_64, %c0_65] : memref<3x32x16xbf16, #tpu.memory_space<vmem>>, vector<1x32x16xbf16>
    %91 = vector.shape_cast %90 : vector<1x32x16xbf16> to vector<32x16xbf16>
    %92 = vector.extract_strided_slice %88 {offsets = [0, 0], sizes = [16, 128], strides = [1, 1]} : vector<16x384xbf16> to vector<16x128xbf16>
    %cst_66 = arith.constant dense<0.000000e+00> : vector<32x128xf32>
    %93 = tpu.matmul %91, %92, %cst_66 {dimension_numbers = #tpu.dot_dimension_numbers<[1], [0], [0], [1], [0, 0, 1, 1], [], []>} : vector<32x16xbf16>, vector<16x128xbf16>, vector<32x128xf32> -> vector<32x128xf32>
    %94 = vector.broadcast %89 : vector<1x128xf32> to vector<32x128xf32>
    %95 = arith.addf %94, %93 : vector<32x128xf32>
    %c1_67 = arith.constant 1 : index
    %c0_68 = arith.constant 0 : index
    %c0_69 = arith.constant 0 : index
    %96 = vector.load %arg14[%c1_67, %c0_68, %c0_69] : memref<3x32x16xbf16, #tpu.memory_space<vmem>>, vector<1x32x16xbf16>
    %97 = vector.shape_cast %96 : vector<1x32x16xbf16> to vector<32x16xbf16>
    %98 = vector.extract_strided_slice %88 {offsets = [0, 128], sizes = [16, 128], strides = [1, 1]} : vector<16x384xbf16> to vector<16x128xbf16>
    %cst_70 = arith.constant dense<0.000000e+00> : vector<32x128xf32>
    %99 = tpu.matmul %97, %98, %cst_70 {dimension_numbers = #tpu.dot_dimension_numbers<[1], [0], [0], [1], [0, 0, 1, 1], [], []>} : vector<32x16xbf16>, vector<16x128xbf16>, vector<32x128xf32> -> vector<32x128xf32>
    %100 = arith.addf %95, %99 : vector<32x128xf32>
    %c2_71 = arith.constant 2 : index
    %c0_72 = arith.constant 0 : index
    %c0_73 = arith.constant 0 : index
    %101 = vector.load %arg14[%c2_71, %c0_72, %c0_73] : memref<3x32x16xbf16, #tpu.memory_space<vmem>>, vector<1x32x16xbf16>
    %102 = vector.shape_cast %101 : vector<1x32x16xbf16> to vector<32x16xbf16>
    %103 = vector.extract_strided_slice %88 {offsets = [0, 256], sizes = [16, 128], strides = [1, 1]} : vector<16x384xbf16> to vector<16x128xbf16>
    %cst_74 = arith.constant dense<0.000000e+00> : vector<32x128xf32>
    %104 = tpu.matmul %102, %103, %cst_74 {dimension_numbers = #tpu.dot_dimension_numbers<[1], [0], [0], [1], [0, 0, 1, 1], [], []>} : vector<32x16xbf16>, vector<16x128xbf16>, vector<32x128xf32> -> vector<32x128xf32>
    %105 = arith.addf %100, %104 : vector<32x128xf32>
    %cst_75 = arith.constant 0.000000e+00 : f32
    %106 = vector.broadcast %cst_75 : f32 to vector<32x128xf32>
    %107 = arith.cmpf ogt, %105, %106 : vector<32x128xf32>
    %cst_76 = arith.constant 2.000000e-01 : f32
    %108 = vector.broadcast %cst_76 : f32 to vector<32x128xf32>
    %109 = arith.mulf %108, %105 : vector<32x128xf32>
    %110 = arith.select %107, %105, %109 : vector<32x128xi1>, vector<32x128xf32>
    %c0_77 = arith.constant 0 : index
    %c0_78 = arith.constant 0 : index
    %111 = vector.load %arg17[%c0_77, %c0_78] : memref<1x128xf32, #tpu.memory_space<vmem>>, vector<1x128xf32>
    %112 = vector.broadcast %111 : vector<1x128xf32> to vector<32x128xf32>
    %113 = arith.mulf %110, %112 : vector<32x128xf32>
    %c0_79 = arith.constant 0 : index
    %c0_80 = arith.constant 0 : index
    %114 = vector.load %arg18[%c0_79, %c0_80] : memref<1x128xf32, #tpu.memory_space<vmem>>, vector<1x128xf32>
    %115 = vector.broadcast %114 : vector<1x128xf32> to vector<32x128xf32>
    %116 = arith.addf %113, %115 : vector<32x128xf32>
    %117 = arith.truncf %116 : vector<32x128xf32> to vector<32x128xbf16>
    %c0_81 = arith.constant 0 : index
    %c0_82 = arith.constant 0 : index
    %118 = vector.load %arg20[%c0_81, %c0_82] : memref<128x384xbf16, #tpu.memory_space<vmem>>, vector<128x384xbf16>
    %cst_83 = arith.constant dense<0.000000e+00> : vector<32x384xf32>
    %119 = tpu.matmul %117, %118, %cst_83 {dimension_numbers = #tpu.dot_dimension_numbers<[1], [0], [0], [1], [0, 0, 1, 1], [], []>} : vector<32x128xbf16>, vector<128x384xbf16>, vector<32x384xf32> -> vector<32x384xf32>
    %120 = arith.truncf %119 : vector<32x384xf32> to vector<32x384xbf16>
    %c0_84 = arith.constant 0 : index
    %c0_85 = arith.constant 0 : index
    %121 = vector.load %arg21[%c0_84, %c0_85] : memref<1x128xf32, #tpu.memory_space<vmem>>, vector<1x128xf32>
    %c0_86 = arith.constant 0 : index
    %c0_87 = arith.constant 0 : index
    %c0_88 = arith.constant 0 : index
    %122 = vector.load %arg19[%c0_86, %c0_87, %c0_88] : memref<3x64x32xbf16, #tpu.memory_space<vmem>>, vector<1x64x32xbf16>
    %123 = vector.shape_cast %122 : vector<1x64x32xbf16> to vector<64x32xbf16>
    %124 = vector.extract_strided_slice %120 {offsets = [0, 0], sizes = [32, 128], strides = [1, 1]} : vector<32x384xbf16> to vector<32x128xbf16>
    %cst_89 = arith.constant dense<0.000000e+00> : vector<64x128xf32>
    %125 = tpu.matmul %123, %124, %cst_89 {dimension_numbers = #tpu.dot_dimension_numbers<[1], [0], [0], [1], [0, 0, 1, 1], [], []>} : vector<64x32xbf16>, vector<32x128xbf16>, vector<64x128xf32> -> vector<64x128xf32>
    %126 = vector.broadcast %121 : vector<1x128xf32> to vector<64x128xf32>
    %127 = arith.addf %126, %125 : vector<64x128xf32>
    %c1_90 = arith.constant 1 : index
    %c0_91 = arith.constant 0 : index
    %c0_92 = arith.constant 0 : index
    %128 = vector.load %arg19[%c1_90, %c0_91, %c0_92] : memref<3x64x32xbf16, #tpu.memory_space<vmem>>, vector<1x64x32xbf16>
    %129 = vector.shape_cast %128 : vector<1x64x32xbf16> to vector<64x32xbf16>
    %130 = vector.extract_strided_slice %120 {offsets = [0, 128], sizes = [32, 128], strides = [1, 1]} : vector<32x384xbf16> to vector<32x128xbf16>
    %cst_93 = arith.constant dense<0.000000e+00> : vector<64x128xf32>
    %131 = tpu.matmul %129, %130, %cst_93 {dimension_numbers = #tpu.dot_dimension_numbers<[1], [0], [0], [1], [0, 0, 1, 1], [], []>} : vector<64x32xbf16>, vector<32x128xbf16>, vector<64x128xf32> -> vector<64x128xf32>
    %132 = arith.addf %127, %131 : vector<64x128xf32>
    %c2_94 = arith.constant 2 : index
    %c0_95 = arith.constant 0 : index
    %c0_96 = arith.constant 0 : index
    %133 = vector.load %arg19[%c2_94, %c0_95, %c0_96] : memref<3x64x32xbf16, #tpu.memory_space<vmem>>, vector<1x64x32xbf16>
    %134 = vector.shape_cast %133 : vector<1x64x32xbf16> to vector<64x32xbf16>
    %135 = vector.extract_strided_slice %120 {offsets = [0, 256], sizes = [32, 128], strides = [1, 1]} : vector<32x384xbf16> to vector<32x128xbf16>
    %cst_97 = arith.constant dense<0.000000e+00> : vector<64x128xf32>
    %136 = tpu.matmul %134, %135, %cst_97 {dimension_numbers = #tpu.dot_dimension_numbers<[1], [0], [0], [1], [0, 0, 1, 1], [], []>} : vector<64x32xbf16>, vector<32x128xbf16>, vector<64x128xf32> -> vector<64x128xf32>
    %137 = arith.addf %132, %136 : vector<64x128xf32>
    %c0_98 = arith.constant 0 : index
    %c0_99 = arith.constant 0 : index
    %c0_100 = arith.constant 0 : index
    %138 = vector.load %arg22[%c0_98, %c0_99, %c0_100] : memref<1x64x128xf32, #tpu.memory_space<vmem>>, vector<1x64x128xf32>
    %139 = vector.shape_cast %138 : vector<1x64x128xf32> to vector<64x128xf32>
    %140 = vector.shape_cast %137 : vector<64x128xf32> to vector<1x64x128xf32>
    tpu.vector_store %arg22[%c0_98, %c0_99, %c0_100], %140 {strides = array<i32>} : memref<1x64x128xf32, #tpu.memory_space<vmem>>, vector<1x64x128xf32>,
    return
  }
  func.func @transform_0(%arg0: i32) -> (i32, i32, i32) {
    %c0_i32 = arith.constant 0 : i32
    %c0_i32_0 = arith.constant 0 : i32
    %c0_i32_1 = arith.constant 0 : i32
    return %arg0, %c0_i32, %c0_i32_0 : i32, i32, i32
  }
  func.func @transform_1(%arg0: i32) -> (i32, i32) {
    %c0_i32 = arith.constant 0 : i32
    %c0_i32_0 = arith.constant 0 : i32
    %c0_i32_1 = arith.constant 0 : i32
    return %c0_i32, %c0_i32_0 : i32, i32
  }
  func.func @transform_2(%arg0: i32) -> (i32, i32) {
    %c0_i32 = arith.constant 0 : i32
    %c0_i32_0 = arith.constant 0 : i32
    %c0_i32_1 = arith.constant 0 : i32
    return %c0_i32, %c0_i32_0 : i32, i32
  }
  func.func @transform_3(%arg0: i32) -> (i32, i32, i32) {
    %c0_i32 = arith.constant 0 : i32
    %c0_i32_0 = arith.constant 0 : i32
    %c0_i32_1 = arith.constant 0 : i32
    %c0_i32_2 = arith.constant 0 : i32
    return %c0_i32, %c0_i32_0, %c0_i32_1 : i32, i32, i32
  }
  func.func @transform_4(%arg0: i32) -> (i32, i32) {
    %c0_i32 = arith.constant 0 : i32
    %c0_i32_0 = arith.constant 0 : i32
    %c0_i32_1 = arith.constant 0 : i32
    return %c0_i32, %c0_i32_0 : i32, i32
  }
  func.func @transform_5(%arg0: i32) -> (i32, i32) {
    %c0_i32 = arith.constant 0 : i32
    %c0_i32_0 = arith.constant 0 : i32
    %c0_i32_1 = arith.constant 0 : i32
    return %c0_i32, %c0_i32_0 : i32, i32
  }
  func.func @transform_6(%arg0: i32) -> (i32, i32) {
    %c0_i32 = arith.constant 0 : i32
    %c0_i32_0 = arith.constant 0 : i32
    %c0_i32_1 = arith.constant 0 : i32
    return %c0_i32, %c0_i32_0 : i32, i32
  }
  func.func @transform_7(%arg0: i32) -> (i32, i32) {
    %c0_i32 = arith.constant 0 : i32
    %c0_i32_0 = arith.constant 0 : i32
    %c0_i32_1 = arith.constant 0 : i32
    return %c0_i32, %c0_i32_0 : i32, i32
  }
  func.func @transform_8(%arg0: i32) -> (i32, i32, i32) {
    %c0_i32 = arith.constant 0 : i32
    %c0_i32_0 = arith.constant 0 : i32
    %c0_i32_1 = arith.constant 0 : i32
    %c0_i32_2 = arith.constant 0 : i32
    return %c0_i32, %c0_i32_0, %c0_i32_1 : i32, i32, i32
  }
  func.func @transform_9(%arg0: i32) -> (i32, i32) {
    %c0_i32 = arith.constant 0 : i32
    %c0_i32_0 = arith.constant 0 : i32
    %c0_i32_1 = arith.constant 0 : i32
    return %c0_i32, %c0_i32_0 : i32, i32
  }
  func.func @transform_10(%arg0: i32) -> (i32, i32) {
    %c0_i32 = arith.constant 0 : i32
    %c0_i32_0 = arith.constant 0 : i32
    %c0_i32_1 = arith.constant 0 : i32
    return %c0_i32, %c0_i32_0 : i32, i32
  }
  func.func @transform_11(%arg0: i32) -> (i32, i32) {
    %c0_i32 = arith.constant 0 : i32
    %c0_i32_0 = arith.constant 0 : i32
    %c0_i32_1 = arith.constant 0 : i32
    return %c0_i32, %c0_i32_0 : i32, i32
  }
  func.func @transform_12(%arg0: i32) -> (i32, i32) {
    %c0_i32 = arith.constant 0 : i32
    %c0_i32_0 = arith.constant 0 : i32
    %c0_i32_1 = arith.constant 0 : i32
    return %c0_i32, %c0_i32_0 : i32, i32
  }
  func.func @transform_13(%arg0: i32) -> (i32, i32, i32) {
    %c0_i32 = arith.constant 0 : i32
    %c0_i32_0 = arith.constant 0 : i32
    %c0_i32_1 = arith.constant 0 : i32
    %c0_i32_2 = arith.constant 0 : i32
    return %c0_i32, %c0_i32_0, %c0_i32_1 : i32, i32, i32
  }
  func.func @transform_14(%arg0: i32) -> (i32, i32) {
    %c0_i32 = arith.constant 0 : i32
    %c0_i32_0 = arith.constant 0 : i32
    %c0_i32_1 = arith.constant 0 : i32
    return %c0_i32, %c0_i32_0 : i32, i32
  }
  func.func @transform_15(%arg0: i32) -> (i32, i32) {
    %c0_i32 = arith.constant 0 : i32
    %c0_i32_0 = arith.constant 0 : i32
    %c0_i32_1 = arith.constant 0 : i32
    return %c0_i32, %c0_i32_0 : i32, i32
  }
  func.func @transform_16(%arg0: i32) -> (i32, i32) {
    %c0_i32 = arith.constant 0 : i32
    %c0_i32_0 = arith.constant 0 : i32
    %c0_i32_1 = arith.constant 0 : i32
    return %c0_i32, %c0_i32_0 : i32, i32
  }
  func.func @transform_17(%arg0: i32) -> (i32, i32) {
    %c0_i32 = arith.constant 0 : i32
    %c0_i32_0 = arith.constant 0 : i32
    %c0_i32_1 = arith.constant 0 : i32
    return %c0_i32, %c0_i32_0 : i32, i32
  }
  func.func @transform_18(%arg0: i32) -> (i32, i32, i32) {
    %c0_i32 = arith.constant 0 : i32
    %c0_i32_0 = arith.constant 0 : i32
    %c0_i32_1 = arith.constant 0 : i32
    %c0_i32_2 = arith.constant 0 : i32
    return %c0_i32, %c0_i32_0, %c0_i32_1 : i32, i32, i32
  }
  func.func @transform_19(%arg0: i32) -> (i32, i32) {
    %c0_i32 = arith.constant 0 : i32
    %c0_i32_0 = arith.constant 0 : i32
    %c0_i32_1 = arith.constant 0 : i32
    return %c0_i32, %c0_i32_0 : i32, i32
  }
  func.func @transform_20(%arg0: i32) -> (i32, i32) {
    %c0_i32 = arith.constant 0 : i32
    %c0_i32_0 = arith.constant 0 : i32
    %c0_i32_1 = arith.constant 0 : i32
    return %c0_i32, %c0_i32_0 : i32, i32
  }
  func.func @transform_21(%arg0: i32) -> (i32, i32, i32) {
    %c0_i32 = arith.constant 0 : i32
    %c0_i32_0 = arith.constant 0 : i32
    %c0_i32_1 = arith.constant 0 : i32
    return %arg0, %c0_i32, %c0_i32_0 : i32, i32, i32
  }
}

</mosaic_0001>

<llo_original>
// kernel: decoder_forward.1
$region0: #{decoder_forward.1}
  #allocation0 [shape = 'u32[]', space=smem, size = 0x4, offset = 0x4, fixed_abs, tag = 'smem constant byte address 0x4 - core index']
  #allocation1 [shape = 'u32[144,128]{1,0:T(1,128)}', space=vmem, size = 0x12000, scoped, tag = 'internal scratch']
  #allocation2 [shape = 'f32[4,128]{1,0:T(4,128)}', space=vmem, size = 0x800, scoped, tag = 'scratch operand']
  %s0 = inlined_call_operand.hbm [shape: f32[2,2,16], index: 0, kind: input, shape index: {}]
  %s1 = inlined_call_operand.hbm [shape: bf16[16,256], index: 1, kind: input, shape index: {}]
  %s2 = inlined_call_operand.hbm [shape: f32[2,128], index: 2, kind: input, shape index: {}]
  %s3 = inlined_call_operand.vmem [shape: bf16[3,8,4], index: 3, kind: input, shape index: {}]
  %s4 = inlined_call_operand.hbm [shape: bf16[128,384], index: 4, kind: input, shape index: {}]
  %s5 = inlined_call_operand.hbm [shape: f32[1,128], index: 5, kind: input, shape index: {}]
  %s6 = inlined_call_operand.hbm [shape: f32[1,128], index: 6, kind: input, shape index: {}]
  %s7 = inlined_call_operand.hbm [shape: f32[1,128], index: 7, kind: input, shape index: {}]
  %s8 = inlined_call_operand.vmem [shape: bf16[3,16,8], index: 8, kind: input, shape index: {}]
  %s9 = inlined_call_operand.hbm [shape: bf16[128,384], index: 9, kind: input, shape index: {}]
  %s10 = inlined_call_operand.hbm [shape: f32[1,128], index: 10, kind: input, shape index: {}]
  %s11 = inlined_call_operand.hbm [shape: f32[1,128], index: 11, kind: input, shape index: {}]
  %s12 = inlined_call_operand.hbm [shape: f32[1,128], index: 12, kind: input, shape index: {}]
  %s13 = inlined_call_operand.vmem [shape: bf16[3,32,16], index: 13, kind: input, shape index: {}]
  %s14 = inlined_call_operand.hbm [shape: bf16[128,384], index: 14, kind: input, shape index: {}]
  %s15 = inlined_call_operand.hbm [shape: f32[1,128], index: 15, kind: input, shape index: {}]
  %s16 = inlined_call_operand.hbm [shape: f32[1,128], index: 16, kind: input, shape index: {}]
  %s17 = inlined_call_operand.hbm [shape: f32[1,128], index: 17, kind: input, shape index: {}]
  %s18 = inlined_call_operand.vmem [shape: bf16[3,64,32], index: 18, kind: input, shape index: {}]
  %s19 = inlined_call_operand.hbm [shape: bf16[128,384], index: 19, kind: input, shape index: {}]
  %s20 = inlined_call_operand.hbm [shape: f32[1,128], index: 20, kind: input, shape index: {}]
  %s21 = inlined_call_operand.vmem [shape: f32[2,64,128], index: 21, kind: output, shape index: {}]
  %s22 = sld [smem:[#allocation0]]
  $region185: #{decoder_forward.1} parent=0
    _
  %s24 = ssub.s32 1, %s22
  %s25 = scalar_select 0, %s24, %s22
  $region1: #{decoder_forward.1} parent=0
    #allocation3 [shape = 'u8[2048]{0}', space=vmem, size = 0x800, scoped, tag = 'input window, operand 0']
    #allocation4 [shape = 's32[2]{0}', space=sflag, size = 0x8, scoped, tag = 'scoped memory for decoder_forward.1']
    #allocation5 [shape = 'u8[8192]{0}', space=vmem, size = 0x2000, scoped, tag = 'input window, operand 1, single buffered']
    #allocation6 [shape = 's32[1]{0}', space=sflag, size = 0x4, scoped, tag = 'scoped memory for decoder_forward.1']
    #allocation7 [shape = 'u8[1024]{0}', space=vmem, size = 0x400, scoped, tag = 'input window, operand 2, single buffered']
    #allocation8 [shape = 'u8[98304]{0}', space=vmem, size = 0x18000, scoped, tag = 'input window, operand 4, single buffered']
    #allocation9 [shape = 's32[1]{0}', space=sflag, size = 0x4, scoped, tag = 'scoped memory for decoder_forward.1']
    #allocation10 [shape = 'u8[512]{0}', space=vmem, size = 0x400, scoped, tag = 'input window, operand 5, single buffered']
    #allocation11 [shape = 'u8[512]{0}', space=vmem, size = 0x400, scoped, tag = 'input window, operand 6, single buffered']
    #allocation12 [shape = 's32[1]{0}', space=sflag, size = 0x4, scoped, tag = 'scoped memory for decoder_forward.1']
    #allocation13 [shape = 'u8[512]{0}', space=vmem, size = 0x400, scoped, tag = 'input window, operand 7, single buffered']
    #allocation14 [shape = 'u8[98304]{0}', space=vmem, size = 0x18000, scoped, tag = 'input window, operand 9, single buffered']
    #allocation15 [shape = 's32[1]{0}', space=sflag, size = 0x4, scoped, tag = 'scoped memory for decoder_forward.1']
    #allocation16 [shape = 'u8[512]{0}', space=vmem, size = 0x400, scoped, tag = 'input window, operand 10, single buffered']
    #allocation17 [shape = 'u8[512]{0}', space=vmem, size = 0x400, scoped, tag = 'input window, operand 11, single buffered']
    #allocation18 [shape = 's32[1]{0}', space=sflag, size = 0x4, scoped, tag = 'scoped memory for decoder_forward.1']
    #allocation19 [shape = 'u8[512]{0}', space=vmem, size = 0x400, scoped, tag = 'input window, operand 12, single buffered']
    #allocation20 [shape = 'u8[98304]{0}', space=vmem, size = 0x18000, scoped, tag = 'input window, operand 14, single buffered']
    #allocation21 [shape = 's32[1]{0}', space=sflag, size = 0x4, scoped, tag = 'scoped memory for decoder_forward.1']
    #allocation22 [shape = 'u8[512]{0}', space=vmem, size = 0x400, scoped, tag = 'input window, operand 15, single buffered']
    #allocation23 [shape = 'u8[512]{0}', space=vmem, size = 0x400, scoped, tag = 'input window, operand 16, single buffered']
    #allocation24 [shape = 's32[1]{0}', space=sflag, size = 0x4, scoped, tag = 'scoped memory for decoder_forward.1']
    #allocation25 [shape = 'u8[512]{0}', space=vmem, size = 0x400, scoped, tag = 'input window, operand 17, single buffered']
    #allocation26 [shape = 'u8[98304]{0}', space=vmem, size = 0x18000, scoped, tag = 'input window, operand 19, single buffered']
    #allocation27 [shape = 's32[1]{0}', space=sflag, size = 0x4, scoped, tag = 'scoped memory for decoder_forward.1']
    #allocation28 [shape = 'u8[512]{0}', space=vmem, size = 0x400, scoped, tag = 'input window, operand 20, single buffered']
    %26 = vsyncpa [#allocation4], 0
    %s27 = scalar_lea.sflag [#allocation4], 1
    %28 = vsyncpa %s27, 0
    %29 = vsyncpa [#allocation6], 0
    %30 = vsyncpa [#allocation9], 0
    %31 = vsyncpa [#allocation12], 0
    %32 = vsyncpa [#allocation15], 0
    %33 = vsyncpa [#allocation18], 0
    %34 = vsyncpa [#allocation21], 0
    %35 = vsyncpa [#allocation24], 0
    %36 = vsyncpa [#allocation27], 0
    loop: start=0, step=1, limit=4
    $region2: #{decoder_forward.1} parent=1 // loop_pre_header
      _
    $region3: #{decoder_forward.1} parent=1 // loop_header
      %s38 = sphi 0, %s42
      %p39 = scmp.ge.s32.totalorder %s38, 4
      %s48 = sphi 0, %s50
      %s51 = sphi 0, %s48
      %s52 = sphi 0, %s51
      %s68 = sphi 0, %s52
      %s72 = sphi 0, %s72
      %s74 = sphi 0, %s72
      %s75 = sphi 0, %s74
      %s89 = sphi 0, %s75
      %s93 = sphi 0, %s93
      %s95 = sphi 0, %s93
      %s96 = sphi 0, %s95
      %s110 = sphi 0, %s96
      %s114 = sphi 0, %s114
      %s116 = sphi 0, %s114
      %s117 = sphi 0, %s116
      %s131 = sphi 0, %s117
      %s135 = sphi 0, %s135
      %s137 = sphi 0, %s135
      %s138 = sphi 0, %s137
      %s152 = sphi 0, %s138
      %s156 = sphi 0, %s156
      %s158 = sphi 0, %s156
      %s159 = sphi 0, %s158
      %s173 = sphi 0, %s159
      %s177 = sphi 0, %s177
      %s179 = sphi 0, %s177
      %s180 = sphi 0, %s179
      %s194 = sphi 0, %s180
      %s198 = sphi 0, %s198
      %s200 = sphi 0, %s198
      %s201 = sphi 0, %s200
      %s215 = sphi 0, %s201
      %s219 = sphi 0, %s219
      %s221 = sphi 0, %s219
      %s222 = sphi 0, %s221
      %s236 = sphi 0, %s222
      %s240 = sphi 0, %s240
      %s242 = sphi 0, %s240
      %s243 = sphi 0, %s242
      %s257 = sphi 0, %s243
      %s261 = sphi 0, %s261
      %s263 = sphi 0, %s261
      %s264 = sphi 0, %s263
      %s278 = sphi 0, %s264
      %s282 = sphi 0, %s282
      %s284 = sphi 0, %s282
      %s285 = sphi 0, %s284
      %s299 = sphi 0, %s285
      %s303 = sphi 0, %s303
      %s305 = sphi 0, %s303
      %s306 = sphi 0, %s305
      %s320 = sphi 0, %s306
      %s324 = sphi 0, %s324
      %s326 = sphi 0, %s324
      %s327 = sphi 0, %s326
      %s341 = sphi 0, %s327
      %s345 = sphi 0, %s345
      %s347 = sphi 0, %s345
      %s348 = sphi 0, %s347
      %s362 = sphi 0, %s348
      %s366 = sphi 0, %s366
      %s368 = sphi 0, %s366
      %s369 = sphi 0, %s368
      %s383 = sphi 0, %s369
      %s387 = sphi 0, %s387
      %s389 = sphi 0, %s387
      %s390 = sphi 0, %s389
      %s404 = sphi 0, %s390
      %s408 = sphi 0, %s408
      %s410 = sphi 0, %s408
      %s411 = sphi 0, %s410
      %s425 = sphi 0, %s411
      %s429 = sphi 0, %s429
      %s431 = sphi 0, %s429
      %s432 = sphi 0, %s431
      %s446 = sphi 0, %s432
      %s450 = sphi 0, %s450
      %s452 = sphi 0, %s450
      %s453 = sphi 0, %s452
      %s467 = sphi 0, %s453
      %s471 = sphi 0, %s471
      %s473 = sphi 0, %s471
      %s474 = sphi 0, %s473
      %s488 = sphi 0, %s474
      %s494 = sphi 0, %s496
      %s497 = sphi 0, %s494
      %s498 = sphi 0, %s497
      %s514 = sphi 0, %s498
    $region4: #{decoder_forward.1} parent=1 // loop_header_branch
      %41 = sbr.rel (%p39) target = $region8
    $region5: #{decoder_forward.1} parent=1 // loop_body
      %s43 = ssub.s32 %s38, 1
      %s44 = ssub.s32 %s38, 2
      %s45 = sadd.s32 %s38, 1
      %s46 = ssub.s32 %s38, %s45
      %p47 = scmp.eq.s32.totalorder %s46, 0
      %s49 = sadd.s32 %s48, 1
      %s50 = scalar_select %p47, %s48, %s49
      %p53 = pneg %p47
      %p54 = scmp.eq.s32.totalorder %s38, 1
      %p55 = por %p53, %p54
      %p56 = scmp.ne.s32.totalorder %s48, %s51
      %p57 = scmp.eq.s32.totalorder %s38, 0
      %p58 = por %p56, %p57
      %p59 = scmp.ne.s32.totalorder %s48, %s51
      %p60 = scmp.eq.s32.totalorder %s43, 1
      %p61 = por %p59, %p60
      %p62 = scmp.ne.s32.totalorder %s51, %s52
      %p63 = scmp.eq.s32.totalorder %s43, 0
      %p64 = por %p62, %p63
      %p65 = scmp.ne.s32.totalorder %s51, %s52
      %p66 = scmp.eq.s32.totalorder %s44, 1
      %p67 = por %p65, %p66
      %p69 = scmp.ne.s32.totalorder %s52, %s68
      %p70 = scmp.eq.s32.totalorder %s44, 0
      %p71 = por %p69, %p70
      %s73 = sadd.s32 %s72, 1
      %p76 = scmp.eq.s32.totalorder %s38, 1
      %p77 = scmp.ne.s32.totalorder %s72, %s74
      %p78 = scmp.eq.s32.totalorder %s38, 0
      %p79 = por %p77, %p78
      %p80 = scmp.ne.s32.totalorder %s72, %s74
      %p81 = scmp.eq.s32.totalorder %s43, 1
      %p82 = por %p80, %p81
      %p83 = scmp.ne.s32.totalorder %s74, %s75
      %p84 = scmp.eq.s32.totalorder %s43, 0
      %p85 = por %p83, %p84
      %p86 = scmp.ne.s32.totalorder %s74, %s75
      %p87 = scmp.eq.s32.totalorder %s44, 1
      %p88 = por %p86, %p87
      %p90 = scmp.ne.s32.totalorder %s75, %s89
      %p91 = scmp.eq.s32.totalorder %s44, 0
      %p92 = por %p90, %p91
      %s94 = sadd.s32 %s93, 1
      %p97 = scmp.eq.s32.totalorder %s38, 1
      %p98 = scmp.ne.s32.totalorder %s93, %s95
      %p99 = scmp.eq.s32.totalorder %s38, 0
      %p100 = por %p98, %p99
      %p101 = scmp.ne.s32.totalorder %s93, %s95
      %p102 = scmp.eq.s32.totalorder %s43, 1
      %p103 = por %p101, %p102
      %p104 = scmp.ne.s32.totalorder %s95, %s96
      %p105 = scmp.eq.s32.totalorder %s43, 0
      %p106 = por %p104, %p105
      %p107 = scmp.ne.s32.totalorder %s95, %s96
      %p108 = scmp.eq.s32.totalorder %s44, 1
      %p109 = por %p107, %p108
      %p111 = scmp.ne.s32.totalorder %s96, %s110
      %p112 = scmp.eq.s32.totalorder %s44, 0
      %p113 = por %p111, %p112
      %s115 = sadd.s32 %s114, 1
      %p118 = scmp.eq.s32.totalorder %s38, 1
      %p119 = scmp.ne.s32.totalorder %s114, %s116
      %p120 = scmp.eq.s32.totalorder %s38, 0
      %p121 = por %p119, %p120
      %p122 = scmp.ne.s32.totalorder %s114, %s116
      %p123 = scmp.eq.s32.totalorder %s43, 1
      %p124 = por %p122, %p123
      %p125 = scmp.ne.s32.totalorder %s116, %s117
      %p126 = scmp.eq.s32.totalorder %s43, 0
      %p127 = por %p125, %p126
      %p128 = scmp.ne.s32.totalorder %s116, %s117
      %p129 = scmp.eq.s32.totalorder %s44, 1
      %p130 = por %p128, %p129
      %p132 = scmp.ne.s32.totalorder %s117, %s131
      %p133 = scmp.eq.s32.totalorder %s44, 0
      %p134 = por %p132, %p133
      %s136 = sadd.s32 %s135, 1
      %p139 = scmp.eq.s32.totalorder %s38, 1
      %p140 = scmp.ne.s32.totalorder %s135, %s137
      %p141 = scmp.eq.s32.totalorder %s38, 0
      %p142 = por %p140, %p141
      %p143 = scmp.ne.s32.totalorder %s135, %s137
      %p144 = scmp.eq.s32.totalorder %s43, 1
      %p145 = por %p143, %p144
      %p146 = scmp.ne.s32.totalorder %s137, %s138
      %p147 = scmp.eq.s32.totalorder %s43, 0
      %p148 = por %p146, %p147
      %p149 = scmp.ne.s32.totalorder %s137, %s138
      %p150 = scmp.eq.s32.totalorder %s44, 1
      %p151 = por %p149, %p150
      %p153 = scmp.ne.s32.totalorder %s138, %s152
      %p154 = scmp.eq.s32.totalorder %s44, 0
      %p155 = por %p153, %p154
      %s157 = sadd.s32 %s156, 1
      %p160 = scmp.eq.s32.totalorder %s38, 1
      %p161 = scmp.ne.s32.totalorder %s156, %s158
      %p162 = scmp.eq.s32.totalorder %s38, 0
      %p163 = por %p161, %p162
      %p164 = scmp.ne.s32.totalorder %s156, %s158
      %p165 = scmp.eq.s32.totalorder %s43, 1
      %p166 = por %p164, %p165
      %p167 = scmp.ne.s32.totalorder %s158, %s159
      %p168 = scmp.eq.s32.totalorder %s43, 0
      %p169 = por %p167, %p168
      %p170 = scmp.ne.s32.totalorder %s158, %s159
      %p171 = scmp.eq.s32.totalorder %s44, 1
      %p172 = por %p170, %p171
      %p174 = scmp.ne.s32.totalorder %s159, %s173
      %p175 = scmp.eq.s32.totalorder %s44, 0
      %p176 = por %p174, %p175
      %s178 = sadd.s32 %s177, 1
      %p181 = scmp.eq.s32.totalorder %s38, 1
      %p182 = scmp.ne.s32.totalorder %s177, %s179
      %p183 = scmp.eq.s32.totalorder %s38, 0
      %p184 = por %p182, %p183
      %p185 = scmp.ne.s32.totalorder %s177, %s179
      %p186 = scmp.eq.s32.totalorder %s43, 1
      %p187 = por %p185, %p186
      %p188 = scmp.ne.s32.totalorder %s179, %s180
      %p189 = scmp.eq.s32.totalorder %s43, 0
      %p190 = por %p188, %p189
      %p191 = scmp.ne.s32.totalorder %s179, %s180
      %p192 = scmp.eq.s32.totalorder %s44, 1
      %p193 = por %p191, %p192
      %p195 = scmp.ne.s32.totalorder %s180, %s194
      %p196 = scmp.eq.s32.totalorder %s44, 0
      %p197 = por %p195, %p196
      %s199 = sadd.s32 %s198, 1
      %p202 = scmp.eq.s32.totalorder %s38, 1
      %p203 = scmp.ne.s32.totalorder %s198, %s200
      %p204 = scmp.eq.s32.totalorder %s38, 0
      %p205 = por %p203, %p204
      %p206 = scmp.ne.s32.totalorder %s198, %s200
      %p207 = scmp.eq.s32.totalorder %s43, 1
      %p208 = por %p206, %p207
      %p209 = scmp.ne.s32.totalorder %s200, %s201
      %p210 = scmp.eq.s32.totalorder %s43, 0
      %p211 = por %p209, %p210
      %p212 = scmp.ne.s32.totalorder %s200, %s201
      %p213 = scmp.eq.s32.totalorder %s44, 1
      %p214 = por %p212, %p213
      %p216 = scmp.ne.s32.totalorder %s201, %s215
      %p217 = scmp.eq.s32.totalorder %s44, 0
      %p218 = por %p216, %p217
      %s220 = sadd.s32 %s219, 1
      %p223 = scmp.eq.s32.totalorder %s38, 1
      %p224 = scmp.ne.s32.totalorder %s219, %s221
      %p225 = scmp.eq.s32.totalorder %s38, 0
      %p226 = por %p224, %p225
      %p227 = scmp.ne.s32.totalorder %s219, %s221
      %p228 = scmp.eq.s32.totalorder %s43, 1
      %p229 = por %p227, %p228
      %p230 = scmp.ne.s32.totalorder %s221, %s222
      %p231 = scmp.eq.s32.totalorder %s43, 0
      %p232 = por %p230, %p231
      %p233 = scmp.ne.s32.totalorder %s221, %s222
      %p234 = scmp.eq.s32.totalorder %s44, 1
      %p235 = por %p233, %p234
      %p237 = scmp.ne.s32.totalorder %s222, %s236
      %p238 = scmp.eq.s32.totalorder %s44, 0
      %p239 = por %p237, %p238
      %s241 = sadd.s32 %s240, 1
      %p244 = scmp.eq.s32.totalorder %s38, 1
      %p245 = scmp.ne.s32.totalorder %s240, %s242
      %p246 = scmp.eq.s32.totalorder %s38, 0
      %p247 = por %p245, %p246
      %p248 = scmp.ne.s32.totalorder %s240, %s242
      %p249 = scmp.eq.s32.totalorder %s43, 1
      %p250 = por %p248, %p249
      %p251 = scmp.ne.s32.totalorder %s242, %s243
      %p252 = scmp.eq.s32.totalorder %s43, 0
      %p253 = por %p251, %p252
      %p254 = scmp.ne.s32.totalorder %s242, %s243
      %p255 = scmp.eq.s32.totalorder %s44, 1
      %p256 = por %p254, %p255
      %p258 = scmp.ne.s32.totalorder %s243, %s257
      %p259 = scmp.eq.s32.totalorder %s44, 0
      %p260 = por %p258, %p259
      %s262 = sadd.s32 %s261, 1
      %p265 = scmp.eq.s32.totalorder %s38, 1
      %p266 = scmp.ne.s32.totalorder %s261, %s263
      %p267 = scmp.eq.s32.totalorder %s38, 0
      %p268 = por %p266, %p267
      %p269 = scmp.ne.s32.totalorder %s261, %s263
      %p270 = scmp.eq.s32.totalorder %s43, 1
      %p271 = por %p269, %p270
      %p272 = scmp.ne.s32.totalorder %s263, %s264
      %p273 = scmp.eq.s32.totalorder %s43, 0
      %p274 = por %p272, %p273
      %p275 = scmp.ne.s32.totalorder %s263, %s264
      %p276 = scmp.eq.s32.totalorder %s44, 1
      %p277 = por %p275, %p276
      %p279 = scmp.ne.s32.totalorder %s264, %s278
      %p280 = scmp.eq.s32.totalorder %s44, 0
      %p281 = por %p279, %p280
      %s283 = sadd.s32 %s282, 1
      %p286 = scmp.eq.s32.totalorder %s38, 1
      %p287 = scmp.ne.s32.totalorder %s282, %s284
      %p288 = scmp.eq.s32.totalorder %s38, 0
      %p289 = por %p287, %p288
      %p290 = scmp.ne.s32.totalorder %s282, %s284
      %p291 = scmp.eq.s32.totalorder %s43, 1
      %p292 = por %p290, %p291
      %p293 = scmp.ne.s32.totalorder %s284, %s285
      %p294 = scmp.eq.s32.totalorder %s43, 0
      %p295 = por %p293, %p294
      %p296 = scmp.ne.s32.totalorder %s284, %s285
      %p297 = scmp.eq.s32.totalorder %s44, 1
      %p298 = por %p296, %p297
      %p300 = scmp.ne.s32.totalorder %s285, %s299
      %p301 = scmp.eq.s32.totalorder %s44, 0
      %p302 = por %p300, %p301
      %s304 = sadd.s32 %s303, 1
      %p307 = scmp.eq.s32.totalorder %s38, 1
      %p308 = scmp.ne.s32.totalorder %s303, %s305
      %p309 = scmp.eq.s32.totalorder %s38, 0
      %p310 = por %p308, %p309
      %p311 = scmp.ne.s32.totalorder %s303, %s305
      %p312 = scmp.eq.s32.totalorder %s43, 1
      %p313 = por %p311, %p312
      %p314 = scmp.ne.s32.totalorder %s305, %s306
      %p315 = scmp.eq.s32.totalorder %s43, 0
      %p316 = por %p314, %p315
      %p317 = scmp.ne.s32.totalorder %s305, %s306
      %p318 = scmp.eq.s32.totalorder %s44, 1
      %p319 = por %p317, %p318
      %p321 = scmp.ne.s32.totalorder %s306, %s320
      %p322 = scmp.eq.s32.totalorder %s44, 0
      %p323 = por %p321, %p322
      %s325 = sadd.s32 %s324, 1
      %p328 = scmp.eq.s32.totalorder %s38, 1
      %p329 = scmp.ne.s32.totalorder %s324, %s326
      %p330 = scmp.eq.s32.totalorder %s38, 0
      %p331 = por %p329, %p330
      %p332 = scmp.ne.s32.totalorder %s324, %s326
      %p333 = scmp.eq.s32.totalorder %s43, 1
      %p334 = por %p332, %p333
      %p335 = scmp.ne.s32.totalorder %s326, %s327
      %p336 = scmp.eq.s32.totalorder %s43, 0
      %p337 = por %p335, %p336
      %p338 = scmp.ne.s32.totalorder %s326, %s327
      %p339 = scmp.eq.s32.totalorder %s44, 1
      %p340 = por %p338, %p339
      %p342 = scmp.ne.s32.totalorder %s327, %s341
      %p343 = scmp.eq.s32.totalorder %s44, 0
      %p344 = por %p342, %p343
      %s346 = sadd.s32 %s345, 1
      %p349 = scmp.eq.s32.totalorder %s38, 1
      %p350 = scmp.ne.s32.totalorder %s345, %s347
      %p351 = scmp.eq.s32.totalorder %s38, 0
      %p352 = por %p350, %p351
      %p353 = scmp.ne.s32.totalorder %s345, %s347
      %p354 = scmp.eq.s32.totalorder %s43, 1
      %p355 = por %p353, %p354
      %p356 = scmp.ne.s32.totalorder %s347, %s348
      %p357 = scmp.eq.s32.totalorder %s43, 0
      %p358 = por %p356, %p357
      %p359 = scmp.ne.s32.totalorder %s347, %s348
      %p360 = scmp.eq.s32.totalorder %s44, 1
      %p361 = por %p359, %p360
      %p363 = scmp.ne.s32.totalorder %s348, %s362
      %p364 = scmp.eq.s32.totalorder %s44, 0
      %p365 = por %p363, %p364
      %s367 = sadd.s32 %s366, 1
      %p370 = scmp.eq.s32.totalorder %s38, 1
      %p371 = scmp.ne.s32.totalorder %s366, %s368
      %p372 = scmp.eq.s32.totalorder %s38, 0
      %p373 = por %p371, %p372
      %p374 = scmp.ne.s32.totalorder %s366, %s368
      %p375 = scmp.eq.s32.totalorder %s43, 1
      %p376 = por %p374, %p375
      %p377 = scmp.ne.s32.totalorder %s368, %s369
      %p378 = scmp.eq.s32.totalorder %s43, 0
      %p379 = por %p377, %p378
      %p380 = scmp.ne.s32.totalorder %s368, %s369
      %p381 = scmp.eq.s32.totalorder %s44, 1
      %p382 = por %p380, %p381
      %p384 = scmp.ne.s32.totalorder %s369, %s383
      %p385 = scmp.eq.s32.totalorder %s44, 0
      %p386 = por %p384, %p385
      %s388 = sadd.s32 %s387, 1
      %p391 = scmp.eq.s32.totalorder %s38, 1
      %p392 = scmp.ne.s32.totalorder %s387, %s389
      %p393 = scmp.eq.s32.totalorder %s38, 0
      %p394 = por %p392, %p393
      %p395 = scmp.ne.s32.totalorder %s387, %s389
      %p396 = scmp.eq.s32.totalorder %s43, 1
      %p397 = por %p395, %p396
      %p398 = scmp.ne.s32.totalorder %s389, %s390
      %p399 = scmp.eq.s32.totalorder %s43, 0
      %p400 = por %p398, %p399
      %p401 = scmp.ne.s32.totalorder %s389, %s390
      %p402 = scmp.eq.s32.totalorder %s44, 1
      %p403 = por %p401, %p402
      %p405 = scmp.ne.s32.totalorder %s390, %s404
      %p406 = scmp.eq.s32.totalorder %s44, 0
      %p407 = por %p405, %p406
      %s409 = sadd.s32 %s408, 1
      %p412 = scmp.eq.s32.totalorder %s38, 1
      %p413 = scmp.ne.s32.totalorder %s408, %s410
      %p414 = scmp.eq.s32.totalorder %s38, 0
      %p415 = por %p413, %p414
      %p416 = scmp.ne.s32.totalorder %s408, %s410
      %p417 = scmp.eq.s32.totalorder %s43, 1
      %p418 = por %p416, %p417
      %p419 = scmp.ne.s32.totalorder %s410, %s411
      %p420 = scmp.eq.s32.totalorder %s43, 0
      %p421 = por %p419, %p420
      %p422 = scmp.ne.s32.totalorder %s410, %s411
      %p423 = scmp.eq.s32.totalorder %s44, 1
      %p424 = por %p422, %p423
      %p426 = scmp.ne.s32.totalorder %s411, %s425
      %p427 = scmp.eq.s32.totalorder %s44, 0
      %p428 = por %p426, %p427
      %s430 = sadd.s32 %s429, 1
      %p433 = scmp.eq.s32.totalorder %s38, 1
      %p434 = scmp.ne.s32.totalorder %s429, %s431
      %p435 = scmp.eq.s32.totalorder %s38, 0
      %p436 = por %p434, %p435
      %p437 = scmp.ne.s32.totalorder %s429, %s431
      %p438 = scmp.eq.s32.totalorder %s43, 1
      %p439 = por %p437, %p438
      %p440 = scmp.ne.s32.totalorder %s431, %s432
      %p441 = scmp.eq.s32.totalorder %s43, 0
      %p442 = por %p440, %p441
      %p443 = scmp.ne.s32.totalorder %s431, %s432
      %p444 = scmp.eq.s32.totalorder %s44, 1
      %p445 = por %p443, %p444
      %p447 = scmp.ne.s32.totalorder %s432, %s446
      %p448 = scmp.eq.s32.totalorder %s44, 0
      %p449 = por %p447, %p448
      %s451 = sadd.s32 %s450, 1
      %p454 = scmp.eq.s32.totalorder %s38, 1
      %p455 = scmp.ne.s32.totalorder %s450, %s452
      %p456 = scmp.eq.s32.totalorder %s38, 0
      %p457 = por %p455, %p456
      %p458 = scmp.ne.s32.totalorder %s450, %s452
      %p459 = scmp.eq.s32.totalorder %s43, 1
      %p460 = por %p458, %p459
      %p461 = scmp.ne.s32.totalorder %s452, %s453
      %p462 = scmp.eq.s32.totalorder %s43, 0
      %p463 = por %p461, %p462
      %p464 = scmp.ne.s32.totalorder %s452, %s453
      %p465 = scmp.eq.s32.totalorder %s44, 1
      %p466 = por %p464, %p465
      %p468 = scmp.ne.s32.totalorder %s453, %s467
      %p469 = scmp.eq.s32.totalorder %s44, 0
      %p470 = por %p468, %p469
      %s472 = sadd.s32 %s471, 1
      %p475 = scmp.eq.s32.totalorder %s38, 1
      %p476 = scmp.ne.s32.totalorder %s471, %s473
      %p477 = scmp.eq.s32.totalorder %s38, 0
      %p478 = por %p476, %p477
      %p479 = scmp.ne.s32.totalorder %s471, %s473
      %p480 = scmp.eq.s32.totalorder %s43, 1
      %p481 = por %p479, %p480
      %p482 = scmp.ne.s32.totalorder %s473, %s474
      %p483 = scmp.eq.s32.totalorder %s43, 0
      %p484 = por %p482, %p483
      %p485 = scmp.ne.s32.totalorder %s473, %s474
      %p486 = scmp.eq.s32.totalorder %s44, 1
      %p487 = por %p485, %p486
      %p489 = scmp.ne.s32.totalorder %s474, %s488
      %p490 = scmp.eq.s32.totalorder %s44, 0
      %p491 = por %p489, %p490
      %s492 = ssub.s32 %s38, %s45
      %p493 = scmp.eq.s32.totalorder %s492, 0
      %s495 = sadd.s32 %s494, 1
      %s496 = scalar_select %p493, %s494, %s495
      %p499 = pneg %p493
      %p500 = scmp.eq.s32.totalorder %s38, 1
      %p501 = por %p499, %p500
      %p502 = scmp.ne.s32.totalorder %s494, %s497
      %p503 = scmp.eq.s32.totalorder %s38, 0
      %p504 = por %p502, %p503
      %p505 = scmp.ne.s32.totalorder %s494, %s497
      %p506 = scmp.eq.s32.totalorder %s43, 1
      %p507 = por %p505, %p506
      %p508 = scmp.ne.s32.totalorder %s497, %s498
      %p509 = scmp.eq.s32.totalorder %s43, 0
      %p510 = por %p508, %p509
      %p511 = scmp.ne.s32.totalorder %s497, %s498
      %p512 = scmp.eq.s32.totalorder %s44, 1
      %p513 = por %p511, %p512
      %p515 = scmp.ne.s32.totalorder %s498, %s514
      %p516 = scmp.eq.s32.totalorder %s44, 0
      %p517 = por %p515, %p516
      %p518 = scmp.le.s32.totalorder 1, %s38
      %p519 = scmp.lt.s32.totalorder %s38, 3
      %p520 = pnand %p518, %p519
      %p521 = pneg %p520
      // Predicated region
      $region9: #{decoder_forward.1} parent=5 // pred_check
        _
      $region10: #{decoder_forward.1} parent=5 // pred_check_branch
        %523 = sbr.rel (%p520) target = $region12
      $region11: #{decoder_forward.1} parent=5 // pred_region
        %s524 = ssub.s32 %s38, 1
        // Predicated region
        $region13: #{decoder_forward.1} parent=11 // pred_check
          %p525 = pneg %p85
        $region14: #{decoder_forward.1} parent=11 // pred_check_branch
          %527 = sbr.rel (%p525) target = $region16
        $region15: #{decoder_forward.1} parent=11 // pred_region
          %s529 = ssub.s32 256, 256
          %530 = vsyncadd [#allocation6], %s529
          %s531 = sshll.u32 [#allocation5], 4
          %s532 = int_to_ptr.vmem [resolvable:$true] %s531
          %537 = dma.hbm_to_vmem [thread:$0]  %s1, 256, %s532, [#allocation6], 128, 128, 8
        $region16: #{decoder_forward.1} parent=11 // pred_fallthru
          _
        // Predicated region
        $region17: #{decoder_forward.1} parent=11 // pred_check
          %p538 = pneg %p106
        $region18: #{decoder_forward.1} parent=11 // pred_check_branch
          %540 = sbr.rel (%p538) target = $region20
        $region19: #{decoder_forward.1} parent=11 // pred_region
          %s542 = ssub.s32 32, 32
          %543 = vsyncadd [#allocation6], %s542
          %s545 = sshll.u32 [#allocation7], 4
          %s546 = int_to_ptr.vmem [resolvable:$true] %s545
          %548 = dma.hbm_to_vmem [thread:$0]  %s2, 32, %s546, [#allocation6]
        $region20: #{decoder_forward.1} parent=11 // pred_fallthru
          _
        // Predicated region
        $region21: #{decoder_forward.1} parent=11 // pred_check
          %p549 = pneg %p127
        $region22: #{decoder_forward.1} parent=11 // pred_check_branch
          %551 = sbr.rel (%p549) target = $region24
        $region23: #{decoder_forward.1} parent=11 // pred_region
          _
        $region24: #{decoder_forward.1} parent=11 // pred_fallthru
          _
        // Predicated region
        $region25: #{decoder_forward.1} parent=11 // pred_check
          %p552 = pneg %p148
        $region26: #{decoder_forward.1} parent=11 // pred_check_branch
          %554 = sbr.rel (%p552) target = $region28
        $region27: #{decoder_forward.1} parent=11 // pred_region
          %s556 = ssub.s32 3072, 3072
          %557 = vsyncadd [#allocation9], %s556
          %s558 = sshll.u32 [#allocation8], 4
          %s559 = int_to_ptr.vmem [resolvable:$true] %s558
          %564 = dma.hbm_to_vmem [thread:$0]  %s4, 3072, %s559, [#allocation9], 192, 192, 12
        $region28: #{decoder_forward.1} parent=11 // pred_fallthru
          _
        // Predicated region
        $region29: #{decoder_forward.1} parent=11 // pred_check
          %p565 = pneg %p169
        $region30: #{decoder_forward.1} parent=11 // pred_check_branch
          %567 = sbr.rel (%p565) target = $region32
        $region31: #{decoder_forward.1} parent=11 // pred_region
          %s569 = ssub.s32 16, 16
          %570 = vsyncadd [#allocation9], %s569
          %s572 = sshll.u32 [#allocation10], 4
          %s573 = int_to_ptr.vmem [resolvable:$true] %s572
          %575 = dma.hbm_to_vmem [thread:$0]  %s5, 16, %s573, [#allocation9]
        $region32: #{decoder_forward.1} parent=11 // pred_fallthru
          _
        // Predicated region
        $region33: #{decoder_forward.1} parent=11 // pred_check
          %p576 = pneg %p190
        $region34: #{decoder_forward.1} parent=11 // pred_check_branch
          %578 = sbr.rel (%p576) target = $region36
        $region35: #{decoder_forward.1} parent=11 // pred_region
          %s580 = ssub.s32 16, 16
          %581 = vsyncadd [#allocation12], %s580
          %s583 = sshll.u32 [#allocation11], 4
          %s584 = int_to_ptr.vmem [resolvable:$true] %s583
          %586 = dma.hbm_to_vmem [thread:$0]  %s6, 16, %s584, [#allocation12]
        $region36: #{decoder_forward.1} parent=11 // pred_fallthru
          _
        // Predicated region
        $region37: #{decoder_forward.1} parent=11 // pred_check
          %p587 = pneg %p211
        $region38: #{decoder_forward.1} parent=11 // pred_check_branch
          %589 = sbr.rel (%p587) target = $region40
        $region39: #{decoder_forward.1} parent=11 // pred_region
          %s591 = ssub.s32 16, 16
          %592 = vsyncadd [#allocation12], %s591
          %s594 = sshll.u32 [#allocation13], 4
          %s595 = int_to_ptr.vmem [resolvable:$true] %s594
          %597 = dma.hbm_to_vmem [thread:$0]  %s7, 16, %s595, [#allocation12]
        $region40: #{decoder_forward.1} parent=11 // pred_fallthru
          _
        // Predicated region
        $region41: #{decoder_forward.1} parent=11 // pred_check
          %p598 = pneg %p232
        $region42: #{decoder_forward.1} parent=11 // pred_check_branch
          %600 = sbr.rel (%p598) target = $region44
        $region43: #{decoder_forward.1} parent=11 // pred_region
          _
        $region44: #{decoder_forward.1} parent=11 // pred_fallthru
          _
        // Predicated region
        $region45: #{decoder_forward.1} parent=11 // pred_check
          %p601 = pneg %p253
        $region46: #{decoder_forward.1} parent=11 // pred_check_branch
          %603 = sbr.rel (%p601) target = $region48
        $region47: #{decoder_forward.1} parent=11 // pred_region
          %s605 = ssub.s32 3072, 3072
          %606 = vsyncadd [#allocation15], %s605
          %s607 = sshll.u32 [#allocation14], 4
          %s608 = int_to_ptr.vmem [resolvable:$true] %s607
          %613 = dma.hbm_to_vmem [thread:$0]  %s9, 3072, %s608, [#allocation15], 192, 192, 12
        $region48: #{decoder_forward.1} parent=11 // pred_fallthru
          _
        // Predicated region
        $region49: #{decoder_forward.1} parent=11 // pred_check
          %p614 = pneg %p274
        $region50: #{decoder_forward.1} parent=11 // pred_check_branch
          %616 = sbr.rel (%p614) target = $region52
        $region51: #{decoder_forward.1} parent=11 // pred_region
          %s618 = ssub.s32 16, 16
          %619 = vsyncadd [#allocation15], %s618
          %s621 = sshll.u32 [#allocation16], 4
          %s622 = int_to_ptr.vmem [resolvable:$true] %s621
          %624 = dma.hbm_to_vmem [thread:$0]  %s10, 16, %s622, [#allocation15]
        $region52: #{decoder_forward.1} parent=11 // pred_fallthru
          _
        // Predicated region
        $region53: #{decoder_forward.1} parent=11 // pred_check
          %p625 = pneg %p295
        $region54: #{decoder_forward.1} parent=11 // pred_check_branch
          %627 = sbr.rel (%p625) target = $region56
        $region55: #{decoder_forward.1} parent=11 // pred_region
          %s629 = ssub.s32 16, 16
          %630 = vsyncadd [#allocation18], %s629
          %s632 = sshll.u32 [#allocation17], 4
          %s633 = int_to_ptr.vmem [resolvable:$true] %s632
          %635 = dma.hbm_to_vmem [thread:$0]  %s11, 16, %s633, [#allocation18]
        $region56: #{decoder_forward.1} parent=11 // pred_fallthru
          _
        // Predicated region
        $region57: #{decoder_forward.1} parent=11 // pred_check
          %p636 = pneg %p316
        $region58: #{decoder_forward.1} parent=11 // pred_check_branch
          %638 = sbr.rel (%p636) target = $region60
        $region59: #{decoder_forward.1} parent=11 // pred_region
          %s640 = ssub.s32 16, 16
          %641 = vsyncadd [#allocation18], %s640
          %s643 = sshll.u32 [#allocation19], 4
          %s644 = int_to_ptr.vmem [resolvable:$true] %s643
          %646 = dma.hbm_to_vmem [thread:$0]  %s12, 16, %s644, [#allocation18]
        $region60: #{decoder_forward.1} parent=11 // pred_fallthru
          _
        // Predicated region
        $region61: #{decoder_forward.1} parent=11 // pred_check
          %p647 = pneg %p337
        $region62: #{decoder_forward.1} parent=11 // pred_check_branch
          %649 = sbr.rel (%p647) target = $region64
        $region63: #{decoder_forward.1} parent=11 // pred_region
          _
        $region64: #{decoder_forward.1} parent=11 // pred_fallthru
          _
        // Predicated region
        $region65: #{decoder_forward.1} parent=11 // pred_check
          %p650 = pneg %p358
        $region66: #{decoder_forward.1} parent=11 // pred_check_branch
          %652 = sbr.rel (%p650) target = $region68
        $region67: #{decoder_forward.1} parent=11 // pred_region
          %s654 = ssub.s32 3072, 3072
          %655 = vsyncadd [#allocation21], %s654
          %s656 = sshll.u32 [#allocation20], 4
          %s657 = int_to_ptr.vmem [resolvable:$true] %s656
          %662 = dma.hbm_to_vmem [thread:$0]  %s14, 3072, %s657, [#allocation21], 192, 192, 12
        $region68: #{decoder_forward.1} parent=11 // pred_fallthru
          _
        // Predicated region
        $region69: #{decoder_forward.1} parent=11 // pred_check
          %p663 = pneg %p379
        $region70: #{decoder_forward.1} parent=11 // pred_check_branch
          %665 = sbr.rel (%p663) target = $region72
        $region71: #{decoder_forward.1} parent=11 // pred_region
          %s667 = ssub.s32 16, 16
          %668 = vsyncadd [#allocation21], %s667
          %s670 = sshll.u32 [#allocation22], 4
          %s671 = int_to_ptr.vmem [resolvable:$true] %s670
          %673 = dma.hbm_to_vmem [thread:$0]  %s15, 16, %s671, [#allocation21]
        $region72: #{decoder_forward.1} parent=11 // pred_fallthru
          _
        // Predicated region
        $region73: #{decoder_forward.1} parent=11 // pred_check
          %p674 = pneg %p400
        $region74: #{decoder_forward.1} parent=11 // pred_check_branch
          %676 = sbr.rel (%p674) target = $region76
        $region75: #{decoder_forward.1} parent=11 // pred_region
          %s678 = ssub.s32 16, 16
          %679 = vsyncadd [#allocation24], %s678
          %s681 = sshll.u32 [#allocation23], 4
          %s682 = int_to_ptr.vmem [resolvable:$true] %s681
          %684 = dma.hbm_to_vmem [thread:$0]  %s16, 16, %s682, [#allocation24]
        $region76: #{decoder_forward.1} parent=11 // pred_fallthru
          _
        // Predicated region
        $region77: #{decoder_forward.1} parent=11 // pred_check
          %p685 = pneg %p421
        $region78: #{decoder_forward.1} parent=11 // pred_check_branch
          %687 = sbr.rel (%p685) target = $region80
        $region79: #{decoder_forward.1} parent=11 // pred_region
          %s689 = ssub.s32 16, 16
          %690 = vsyncadd [#allocation24], %s689
          %s692 = sshll.u32 [#allocation25], 4
          %s693 = int_to_ptr.vmem [resolvable:$true] %s692
          %695 = dma.hbm_to_vmem [thread:$0]  %s17, 16, %s693, [#allocation24]
        $region80: #{decoder_forward.1} parent=11 // pred_fallthru
          _
        // Predicated region
        $region81: #{decoder_forward.1} parent=11 // pred_check
          %p696 = pneg %p442
        $region82: #{decoder_forward.1} parent=11 // pred_check_branch
          %698 = sbr.rel (%p696) target = $region84
        $region83: #{decoder_forward.1} parent=11 // pred_region
          _
        $region84: #{decoder_forward.1} parent=11 // pred_fallthru
          _
        // Predicated region
        $region85: #{decoder_forward.1} parent=11 // pred_check
          %p699 = pneg %p463
        $region86: #{decoder_forward.1} parent=11 // pred_check_branch
          %701 = sbr.rel (%p699) target = $region88
        $region87: #{decoder_forward.1} parent=11 // pred_region
          %s703 = ssub.s32 3072, 3072
          %704 = vsyncadd [#allocation27], %s703
          %s705 = sshll.u32 [#allocation26], 4
          %s706 = int_to_ptr.vmem [resolvable:$true] %s705
          %711 = dma.hbm_to_vmem [thread:$0]  %s19, 3072, %s706, [#allocation27], 192, 192, 12
        $region88: #{decoder_forward.1} parent=11 // pred_fallthru
          _
        // Predicated region
        $region89: #{decoder_forward.1} parent=11 // pred_check
          %p712 = pneg %p484
        $region90: #{decoder_forward.1} parent=11 // pred_check_branch
          %714 = sbr.rel (%p712) target = $region92
        $region91: #{decoder_forward.1} parent=11 // pred_region
          %s716 = ssub.s32 16, 16
          %717 = vsyncadd [#allocation27], %s716
          %s719 = sshll.u32 [#allocation28], 4
          %s720 = int_to_ptr.vmem [resolvable:$true] %s719
          %722 = dma.hbm_to_vmem [thread:$0]  %s20, 16, %s720, [#allocation27]
        $region92: #{decoder_forward.1} parent=11 // pred_fallthru
          _
      $region12: #{decoder_forward.1} parent=5 // pred_fallthru
        _
      %p723 = scmp.lt.s32.totalorder %s38, 2
      // Predicated region
      $region93: #{decoder_forward.1} parent=5 // pred_check
        %p724 = pneg %p723
      $region94: #{decoder_forward.1} parent=5 // pred_check_branch
        %726 = sbr.rel (%p724) target = $region96
      $region95: #{decoder_forward.1} parent=5 // pred_region
        // Predicated region
        $region97: #{decoder_forward.1} parent=95 // pred_check
          %p727 = pneg %p58
        $region98: #{decoder_forward.1} parent=95 // pred_check_branch
          %729 = sbr.rel (%p727) target = $region100
        $region99: #{decoder_forward.1} parent=95 // pred_region
          %s730 = sand.u32 %s48, 1
          %s731 = scalar_lea.sflag [#allocation4], %s730
          %s732 = sand.u32 %s48, 1
          %s733 = smul.addr %s732, 2
          %s734 = scalar_lea.vmem [#allocation3], %s733
          %s736 = ssub.s32 32, 32
          %737 = vsyncadd %s731, %s736
          %s738 = smul.addr %s38, 32
          %s739 = scalar_lea.hbm %s0, %s738
          %s741 = sshll.u32 %s734, 4
          %s742 = int_to_ptr.vmem [resolvable:$true] %s741
          %744 = dma.hbm_to_vmem [thread:$0]  %s739, 32, %s742, %s731
        $region100: #{decoder_forward.1} parent=95 // pred_fallthru
          _
      $region96: #{decoder_forward.1} parent=5 // pred_fallthru
        _
      %p745 = scmp.le.s32.totalorder 1, %s38
      %p746 = scmp.lt.s32.totalorder %s38, 3
      %p747 = pnand %p745, %p746
      %p748 = pneg %p747
      // Predicated region
      $region101: #{decoder_forward.1} parent=5 // pred_check
        _
      $region102: #{decoder_forward.1} parent=5 // pred_check_branch
        %750 = sbr.rel (%p747) target = $region104
      $region103: #{decoder_forward.1} parent=5 // pred_region
        %s751 = ssub.s32 %s38, 1
        %s752 = sand.u32 %s51, 1
        %s753 = scalar_lea.sflag [#allocation4], %s752
        %s754 = sand.u32 %s51, 1
        %s755 = smul.addr %s754, 2
        %s756 = scalar_lea.vmem [#allocation3], %s755
        // Predicated region
        $region105: #{decoder_forward.1} parent=103 // pred_check
          %p757 = pneg %p64
        $region106: #{decoder_forward.1} parent=103 // pred_check_branch
          %759 = sbr.rel (%p757) target = $region108
        $region107: #{decoder_forward.1} parent=103 // pred_region
          %760 = dma.done %s753, 32
        $region108: #{decoder_forward.1} parent=103 // pred_fallthru
          _
        // Predicated region
        $region109: #{decoder_forward.1} parent=103 // pred_check
          %p761 = pneg %p85
        $region110: #{decoder_forward.1} parent=103 // pred_check_branch
          %763 = sbr.rel (%p761) target = $region112
        $region111: #{decoder_forward.1} parent=103 // pred_region
          %764 = dma.done [#allocation6], 256
        $region112: #{decoder_forward.1} parent=103 // pred_fallthru
          _
        // Predicated region
        $region113: #{decoder_forward.1} parent=103 // pred_check
          %p765 = pneg %p106
        $region114: #{decoder_forward.1} parent=103 // pred_check_branch
          %767 = sbr.rel (%p765) target = $region116
        $region115: #{decoder_forward.1} parent=103 // pred_region
          %768 = dma.done [#allocation6], 32
        $region116: #{decoder_forward.1} parent=103 // pred_fallthru
          _
        // Predicated region
        $region117: #{decoder_forward.1} parent=103 // pred_check
          %p769 = pneg %p148
        $region118: #{decoder_forward.1} parent=103 // pred_check_branch
          %771 = sbr.rel (%p769) target = $region120
        $region119: #{decoder_forward.1} parent=103 // pred_region
          %772 = dma.done [#allocation9], 3072
        $region120: #{decoder_forward.1} parent=103 // pred_fallthru
          _
        // Predicated region
        $region121: #{decoder_forward.1} parent=103 // pred_check
          %p773 = pneg %p169
        $region122: #{decoder_forward.1} parent=103 // pred_check_branch
          %775 = sbr.rel (%p773) target = $region124
        $region123: #{decoder_forward.1} parent=103 // pred_region
          %776 = dma.done [#allocation9], 16
        $region124: #{decoder_forward.1} parent=103 // pred_fallthru
          _
        // Predicated region
        $region125: #{decoder_forward.1} parent=103 // pred_check
          %p777 = pneg %p190
        $region126: #{decoder_forward.1} parent=103 // pred_check_branch
          %779 = sbr.rel (%p777) target = $region128
        $region127: #{decoder_forward.1} parent=103 // pred_region
          %780 = dma.done [#allocation12], 16
        $region128: #{decoder_forward.1} parent=103 // pred_fallthru
          _
        // Predicated region
        $region129: #{decoder_forward.1} parent=103 // pred_check
          %p781 = pneg %p211
        $region130: #{decoder_forward.1} parent=103 // pred_check_branch
          %783 = sbr.rel (%p781) target = $region132
        $region131: #{decoder_forward.1} parent=103 // pred_region
          %784 = dma.done [#allocation12], 16
        $region132: #{decoder_forward.1} parent=103 // pred_fallthru
          _
        // Predicated region
        $region133: #{decoder_forward.1} parent=103 // pred_check
          %p785 = pneg %p253
        $region134: #{decoder_forward.1} parent=103 // pred_check_branch
          %787 = sbr.rel (%p785) target = $region136
        $region135: #{decoder_forward.1} parent=103 // pred_region
          %788 = dma.done [#allocation15], 3072
        $region136: #{decoder_forward.1} parent=103 // pred_fallthru
          _
        // Predicated region
        $region137: #{decoder_forward.1} parent=103 // pred_check
          %p789 = pneg %p274
        $region138: #{decoder_forward.1} parent=103 // pred_check_branch
          %791 = sbr.rel (%p789) target = $region140
        $region139: #{decoder_forward.1} parent=103 // pred_region
          %792 = dma.done [#allocation15], 16
        $region140: #{decoder_forward.1} parent=103 // pred_fallthru
          _
        // Predicated region
        $region141: #{decoder_forward.1} parent=103 // pred_check
          %p793 = pneg %p295
        $region142: #{decoder_forward.1} parent=103 // pred_check_branch
          %795 = sbr.rel (%p793) target = $region144
        $region143: #{decoder_forward.1} parent=103 // pred_region
          %796 = dma.done [#allocation18], 16
        $region144: #{decoder_forward.1} parent=103 // pred_fallthru
          _
        // Predicated region
        $region145: #{decoder_forward.1} parent=103 // pred_check
          %p797 = pneg %p316
        $region146: #{decoder_forward.1} parent=103 // pred_check_branch
          %799 = sbr.rel (%p797) target = $region148
        $region147: #{decoder_forward.1} parent=103 // pred_region
          %800 = dma.done [#allocation18], 16
        $region148: #{decoder_forward.1} parent=103 // pred_fallthru
          _
        // Predicated region
        $region149: #{decoder_forward.1} parent=103 // pred_check
          %p801 = pneg %p358
        $region150: #{decoder_forward.1} parent=103 // pred_check_branch
          %803 = sbr.rel (%p801) target = $region152
        $region151: #{decoder_forward.1} parent=103 // pred_region
          %804 = dma.done [#allocation21], 3072
        $region152: #{decoder_forward.1} parent=103 // pred_fallthru
          _
        // Predicated region
        $region153: #{decoder_forward.1} parent=103 // pred_check
          %p805 = pneg %p379
        $region154: #{decoder_forward.1} parent=103 // pred_check_branch
          %807 = sbr.rel (%p805) target = $region156
        $region155: #{decoder_forward.1} parent=103 // pred_region
          %808 = dma.done [#allocation21], 16
        $region156: #{decoder_forward.1} parent=103 // pred_fallthru
          _
        // Predicated region
        $region157: #{decoder_forward.1} parent=103 // pred_check
          %p809 = pneg %p400
        $region158: #{decoder_forward.1} parent=103 // pred_check_branch
          %811 = sbr.rel (%p809) target = $region160
        $region159: #{decoder_forward.1} parent=103 // pred_region
          %812 = dma.done [#allocation24], 16
        $region160: #{decoder_forward.1} parent=103 // pred_fallthru
          _
        // Predicated region
        $region161: #{decoder_forward.1} parent=103 // pred_check
          %p813 = pneg %p421
        $region162: #{decoder_forward.1} parent=103 // pred_check_branch
          %815 = sbr.rel (%p813) target = $region164
        $region163: #{decoder_forward.1} parent=103 // pred_region
          %816 = dma.done [#allocation24], 16
        $region164: #{decoder_forward.1} parent=103 // pred_fallthru
          _
        // Predicated region
        $region165: #{decoder_forward.1} parent=103 // pred_check
          %p817 = pneg %p463
        $region166: #{decoder_forward.1} parent=103 // pred_check_branch
          %819 = sbr.rel (%p817) target = $region168
        $region167: #{decoder_forward.1} parent=103 // pred_region
          %820 = dma.done [#allocation27], 3072
        $region168: #{decoder_forward.1} parent=103 // pred_fallthru
          _
        // Predicated region
        $region169: #{decoder_forward.1} parent=103 // pred_check
          %p821 = pneg %p484
        $region170: #{decoder_forward.1} parent=103 // pred_check_branch
          %823 = sbr.rel (%p821) target = $region172
        $region171: #{decoder_forward.1} parent=103 // pred_region
          %824 = dma.done [#allocation27], 16
        $region172: #{decoder_forward.1} parent=103 // pred_fallthru
          _
        %s825 = sand.u32 %s51, 1
        %s826 = scalar_lea.sflag [#allocation4], %s825
        %s827 = sand.u32 %s51, 1
        %s828 = smul.addr %s827, 2
        %s829 = scalar_lea.vmem [#allocation3], %s828
        %p830 = pneg %p64
        %p831 = pneg %p61
        %p832 = pneg %p85
        %p833 = pneg %p82
        %p834 = pneg %p106
        %p835 = pneg %p103
        %p836 = pneg %p127
        %p837 = pneg %p124
        %p838 = pneg %p148
        %p839 = pneg %p145
        %p840 = pneg %p169
        %p841 = pneg %p166
        %p842 = pneg %p190
        %p843 = pneg %p187
        %p844 = pneg %p211
        %p845 = pneg %p208
        %p846 = pneg %p232
        %p847 = pneg %p229
        %p848 = pneg %p253
        %p849 = pneg %p250
        %p850 = pneg %p274
        %p851 = pneg %p271
        %p852 = pneg %p295
        %p853 = pneg %p292
        %p854 = pneg %p316
        %p855 = pneg %p313
        %p856 = pneg %p337
        %p857 = pneg %p334
        %p858 = pneg %p358
        %p859 = pneg %p355
        %p860 = pneg %p379
        %p861 = pneg %p376
        %p862 = pneg %p400
        %p863 = pneg %p397
        %p864 = pneg %p421
        %p865 = pneg %p418
        %p866 = pneg %p442
        %p867 = pneg %p439
        %p868 = pneg %p463
        %p869 = pneg %p460
        %p870 = pneg %p484
        %p871 = pneg %p481
        %p872 = pneg %p510
        %p873 = pneg %p507
        %p874 = scmp.lt.s32.totalorder %s43, 1
        %s875 = scalar_select %p874, %s43, 1
        %s876 = smul.addr %s875, 8
        %s877 = smul.addr %s876, 8
        %s878 = scalar_lea.vmem %s21, %s877
        %p879 = scmp.lt.s32.totalorder %s43, 1
        %s880 = scalar_select %p879, %s43, 1
        %s881 = smul.addr %s880, 8
        %s882 = smul.addr %s881, 8
        %s883 = scalar_lea.vmem %s21, %s882
        %v885 = vld [vmem:[%s756] sm:$0x3]
        %v886 = vpack.c.bf16 %v885, %v885
        %v887 = vld [vmem:[#allocation5] sm:$0xff]
        %v888 = vld [vmem:[#allocation5 + $0x8] sm:$0xff]
        %v891 = vunpack.c.l.b16 %v887
        %v892 = vunpack.c.h.b16 %v887
        %v893 = vunpack.c.l.b16 %v888
        %v894 = vunpack.c.h.b16 %v888
        %v895 = vpack.c.b16 %v893, %v891
        %v896 = vpack.c.b16 %v894, %v892
        %vm899 = vcmask 130048
        %v901 = vsel %vm899, %v886, 0
        %903 = vmatprep.subr.bf16.mxu0 %v896
        %904 = vmatpush1.bf16.msra.mxu0 %v895
        %905 = vmatprep.subr.bf16.mxu0 0
        %906 = vmatpush1.bf16.msra.mxu0 0
        %907 = vmatprep.subr.bf16.mxu0 0
        %908 = vmatpush1.bf16.msra.mxu0 0
        %909 = vmatprep.subr.bf16.mxu0 0
        %910 = vmatpush1.bf16.msra.mxu0 0
        %911 = vmatprep.subr.bf16.mxu0 0
        %912 = vmatpush1.bf16.msra.mxu0 0
        %913 = vmatprep.subr.bf16.mxu0 0
        %914 = vmatpush1.bf16.msra.mxu0 0
        %915 = vmatprep.subr.bf16.mxu0 0
        %916 = vmatpush1.bf16.msra.mxu0 0
        %917 = vmatprep.subr.bf16.mxu0 0
        %918 = vmatpush1.bf16.msra.mxu0 0
        %919 = vmatprep.subr.bf16.mxu0 0
        %920 = vmatpush1.bf16.msra.mxu0 0
        %921 = vmatprep.subr.bf16.mxu0 0
        %922 = vmatpush1.bf16.msra.mxu0 0
        %923 = vmatprep.subr.bf16.mxu0 0
        %924 = vmatpush1.bf16.msra.mxu0 0
        %925 = vmatprep.subr.bf16.mxu0 0
        %926 = vmatpush1.bf16.msra.mxu0 0
        %927 = vmatprep.subr.bf16.mxu0 0
        %928 = vmatpush1.bf16.msra.mxu0 0
        %929 = vmatprep.subr.bf16.mxu0 0
        %930 = vmatpush1.bf16.msra.mxu0 0
        %931 = vmatprep.subr.bf16.mxu0 0
        %932 = vmatpush1.bf16.msra.mxu0 0
        %933 = vmatprep.subr.bf16.mxu0 0
        %934 = vmatpush1.bf16.msra.mxu0 0
        %935 = vmatprep.mubr.bf16.mxu0 0
        %936 = vmatmul.mubr.bf16.gmra.mrb[0].mxu0 %v901
        %v937 = vpop.f32.mrb[0].mxu0
        %v938 = vadd.f32 0.0, %v937
        %v939 = vpop.f32.mrb[0].mxu0
        %v940 = vadd.f32 0.0, %v939
        %v941 = vpop.f32.mrb[0].mxu0
        %v942 = vpop.f32.mrb[0].mxu0
        %943 = vdwg.mxu0
        %v944 = vld [vmem:[#allocation7] sm:$0x3]
        %v945 = vlaneseq
        %v946 = vshrl.u32 %v945, 7
        %v947 = vsub.s32 0, %v946
        %v948 = vrot.slane %v944, %v947
        %v949 = vadd.f32 %v938, %v948
        %v950 = vmax.f32 %v949, 0.0
        %951 = vst [vmem:[#allocation2] sm:$0x3] %v950
        %v952 = vlaneseq
        %v953 = vshrl.u32 %v952, 7
        %v954 = vsub.s32 1, %v953
        %v955 = vrot.slane %v944, %v954
        %v956 = vadd.f32 %v940, %v955
        %v957 = vmax.f32 %v956, 0.0
        %958 = vst [vmem:[#allocation2 + $0x2] sm:$0x3] %v957
        %v959 = vld [vmem:[#allocation2] sm:$0xf]
        %v960 = vpack.c.bf16 %v959, %v959
        %v961 = vld [vmem:[#allocation8] sm:$0xff]
        %v962 = vld [vmem:[#allocation8 + $0x8] sm:$0xf]
        %v963 = vld [vmem:[#allocation8 + $0xc] sm:$0xff]
        %v964 = vld [vmem:[#allocation8 + $0x14] sm:$0xf]
        %v965 = vld [vmem:[#allocation8 + $0x18] sm:$0xff]
        %v966 = vld [vmem:[#allocation8 + $0x20] sm:$0xf]
        %v967 = vld [vmem:[#allocation8 + $0x24] sm:$0xff]
        %v968 = vld [vmem:[#allocation8 + $0x2c] sm:$0xf]
        %v969 = vld [vmem:[#allocation8 + $0x30] sm:$0xff]
        %v970 = vld [vmem:[#allocation8 + $0x38] sm:$0xf]
        %v971 = vld [vmem:[#allocation8 + $0x3c] sm:$0xff]
        %v972 = vld [vmem:[#allocation8 + $0x44] sm:$0xf]
        %v973 = vld [vmem:[#allocation8 + $0x48] sm:$0xff]
        %v974 = vld [vmem:[#allocation8 + $0x50] sm:$0xf]
        %v975 = vld [vmem:[#allocation8 + $0x54] sm:$0xff]
        %v976 = vld [vmem:[#allocation8 + $0x5c] sm:$0xf]
        %v977 = vld [vmem:[#allocation8 + $0x60] sm:$0xff]
        %v978 = vld [vmem:[#allocation8 + $0x68] sm:$0xf]
        %v979 = vld [vmem:[#allocation8 + $0x6c] sm:$0xff]
        %v980 = vld [vmem:[#allocation8 + $0x74] sm:$0xf]
        %v981 = vld [vmem:[#allocation8 + $0x78] sm:$0xff]
        %v982 = vld [vmem:[#allocation8 + $0x80] sm:$0xf]
        %v983 = vld [vmem:[#allocation8 + $0x84] sm:$0xff]
        %v984 = vld [vmem:[#allocation8 + $0x8c] sm:$0xf]
        %v985 = vld [vmem:[#allocation8 + $0x90] sm:$0xff]
        %v986 = vld [vmem:[#allocation8 + $0x98] sm:$0xf]
        %v987 = vld [vmem:[#allocation8 + $0x9c] sm:$0xff]
        %v988 = vld [vmem:[#allocation8 + $0xa4] sm:$0xf]
        %v989 = vld [vmem:[#allocation8 + $0xa8] sm:$0xff]
        %v990 = vld [vmem:[#allocation8 + $0xb0] sm:$0xf]
        %v991 = vld [vmem:[#allocation8 + $0xb4] sm:$0xff]
        %v992 = vld [vmem:[#allocation8 + $0xbc] sm:$0xf]
        %v1025 = vunpack.c.l.b16 %v961
        %v1026 = vunpack.c.h.b16 %v961
        %v1027 = vunpack.c.l.b16 %v962
        %v1028 = vunpack.c.l.b16 %v963
        %v1029 = vunpack.c.h.b16 %v963
        %v1030 = vunpack.c.l.b16 %v964
        %v1031 = vunpack.c.l.b16 %v965
        %v1032 = vunpack.c.h.b16 %v965
        %v1033 = vunpack.c.l.b16 %v966
        %v1034 = vunpack.c.l.b16 %v967
        %v1035 = vunpack.c.h.b16 %v967
        %v1036 = vunpack.c.l.b16 %v968
        %v1037 = vunpack.c.l.b16 %v969
        %v1038 = vunpack.c.h.b16 %v969
        %v1039 = vunpack.c.l.b16 %v970
        %v1040 = vunpack.c.l.b16 %v971
        %v1041 = vunpack.c.h.b16 %v971
        %v1042 = vunpack.c.l.b16 %v972
        %v1043 = vunpack.c.l.b16 %v973
        %v1044 = vunpack.c.h.b16 %v973
        %v1045 = vunpack.c.l.b16 %v974
        %v1046 = vunpack.c.l.b16 %v975
        %v1047 = vunpack.c.h.b16 %v975
        %v1048 = vunpack.c.l.b16 %v976
        %v1049 = vunpack.c.l.b16 %v977
        %v1050 = vunpack.c.h.b16 %v977
        %v1051 = vunpack.c.l.b16 %v978
        %v1052 = vunpack.c.l.b16 %v979
        %v1053 = vunpack.c.h.b16 %v979
        %v1054 = vunpack.c.l.b16 %v980
        %v1055 = vunpack.c.l.b16 %v981
        %v1056 = vunpack.c.h.b16 %v981
        %v1057 = vunpack.c.l.b16 %v982
        %v1058 = vunpack.c.l.b16 %v983
        %v1059 = vunpack.c.h.b16 %v983
        %v1060 = vunpack.c.l.b16 %v984
        %v1061 = vunpack.c.l.b16 %v985
        %v1062 = vunpack.c.h.b16 %v985
        %v1063 = vunpack.c.l.b16 %v986
        %v1064 = vunpack.c.l.b16 %v987
        %v1065 = vunpack.c.h.b16 %v987
        %v1066 = vunpack.c.l.b16 %v988
        %v1067 = vunpack.c.l.b16 %v989
        %v1068 = vunpack.c.h.b16 %v989
        %v1069 = vunpack.c.l.b16 %v990
        %v1070 = vunpack.c.l.b16 %v991
        %v1071 = vunpack.c.h.b16 %v991
        %v1072 = vunpack.c.l.b16 %v992
        %v1073 = vpack.c.b16 %v1028, %v1025
        %v1074 = vpack.c.b16 %v1029, %v1026
        %v1075 = vpack.c.b16 %v1030, %v1027
        %v1076 = vpack.c.b16 %v1034, %v1031
        %v1077 = vpack.c.b16 %v1035, %v1032
        %v1078 = vpack.c.b16 %v1036, %v1033
        %v1079 = vpack.c.b16 %v1040, %v1037
        %v1080 = vpack.c.b16 %v1041, %v1038
        %v1081 = vpack.c.b16 %v1042, %v1039
        %v1082 = vpack.c.b16 %v1046, %v1043
        %v1083 = vpack.c.b16 %v1047, %v1044
        %v1084 = vpack.c.b16 %v1048, %v1045
        %v1085 = vpack.c.b16 %v1052, %v1049
        %v1086 = vpack.c.b16 %v1053, %v1050
        %v1087 = vpack.c.b16 %v1054, %v1051
        %v1088 = vpack.c.b16 %v1058, %v1055
        %v1089 = vpack.c.b16 %v1059, %v1056
        %v1090 = vpack.c.b16 %v1060, %v1057
        %v1091 = vpack.c.b16 %v1064, %v1061
        %v1092 = vpack.c.b16 %v1065, %v1062
        %v1093 = vpack.c.b16 %v1066, %v1063
        %v1094 = vpack.c.b16 %v1070, %v1067
        %v1095 = vpack.c.b16 %v1071, %v1068
        %v1096 = vpack.c.b16 %v1072, %v1069
        %1121 = vmatprep.subr.bf16.mxu0 %v1074
        %1122 = vmatpush1.bf16.msra.mxu0 %v1073
        %1123 = vmatprep.subr.bf16.mxu0 %v1077
        %1124 = vmatpush1.bf16.msra.mxu0 %v1076
        %1125 = vmatprep.subr.bf16.mxu0 %v1080
        %1126 = vmatpush1.bf16.msra.mxu0 %v1079
        %1127 = vmatprep.subr.bf16.mxu0 %v1083
        %1128 = vmatpush1.bf16.msra.mxu0 %v1082
        %1129 = vmatprep.subr.bf16.mxu0 %v1086
        %1130 = vmatpush1.bf16.msra.mxu0 %v1085
        %1131 = vmatprep.subr.bf16.mxu0 %v1089
        %1132 = vmatpush1.bf16.msra.mxu0 %v1088
        %1133 = vmatprep.subr.bf16.mxu0 %v1092
        %1134 = vmatpush1.bf16.msra.mxu0 %v1091
        %1135 = vmatprep.subr.bf16.mxu0 %v1095
        %1136 = vmatpush1.bf16.msra.mxu0 %v1094
        %1137 = vmatprep.subr.bf16.mxu0 0
        %1138 = vmatpush1.bf16.msra.mxu0 0
        %1139 = vmatprep.subr.bf16.mxu0 0
        %1140 = vmatpush1.bf16.msra.mxu0 0
        %1141 = vmatprep.subr.bf16.mxu0 0
        %1142 = vmatpush1.bf16.msra.mxu0 0
        %1143 = vmatprep.subr.bf16.mxu0 0
        %1144 = vmatpush1.bf16.msra.mxu0 0
        %1145 = vmatprep.subr.bf16.mxu0 0
        %1146 = vmatpush1.bf16.msra.mxu0 0
        %1147 = vmatprep.subr.bf16.mxu0 0
        %1148 = vmatpush1.bf16.msra.mxu0 0
        %1149 = vmatprep.subr.bf16.mxu0 0
        %1150 = vmatpush1.bf16.msra.mxu0 0
        %1151 = vmatprep.subr.bf16.mxu0 0
        %1152 = vmatpush1.bf16.msra.mxu0 0
        %1153 = vmatprep.mubr.bf16.mxu0 0
        %1154 = vmatmul.mubr.bf16.gmra.mrb[0].mxu0 %v960
        %v1155 = vpop.f32.mrb[0].mxu0
        %v1156 = vadd.f32 0.0, %v1155
        %v1157 = vpop.f32.mrb[0].mxu0
        %v1158 = vadd.f32 0.0, %v1157
        %v1159 = vpop.f32.mrb[0].mxu0
        %v1160 = vpop.f32.mrb[0].mxu0
        %1161 = vdwg.mxu0
        %1162 = vmatprep.subr.bf16.mxu0 0
        %1163 = vmatpush1.bf16.msra.mxu0 %v1075
        %1164 = vmatprep.subr.bf16.mxu0 0
        %1165 = vmatpush1.bf16.msra.mxu0 %v1078
        %1166 = vmatprep.subr.bf16.mxu0 0
        %1167 = vmatpush1.bf16.msra.mxu0 %v1081
        %1168 = vmatprep.subr.bf16.mxu0 0
        %1169 = vmatpush1.bf16.msra.mxu0 %v1084
        %1170 = vmatprep.subr.bf16.mxu0 0
        %1171 = vmatpush1.bf16.msra.mxu0 %v1087
        %1172 = vmatprep.subr.bf16.mxu0 0
        %1173 = vmatpush1.bf16.msra.mxu0 %v1090
        %1174 = vmatprep.subr.bf16.mxu0 0
        %1175 = vmatpush1.bf16.msra.mxu0 %v1093
        %1176 = vmatprep.subr.bf16.mxu0 0
        %1177 = vmatpush1.bf16.msra.mxu0 %v1096
        %1178 = vmatprep.subr.bf16.mxu0 0
        %1179 = vmatpush1.bf16.msra.mxu0 0
        %1180 = vmatprep.subr.bf16.mxu0 0
        %1181 = vmatpush1.bf16.msra.mxu0 0
        %1182 = vmatprep.subr.bf16.mxu0 0
        %1183 = vmatpush1.bf16.msra.mxu0 0
        %1184 = vmatprep.subr.bf16.mxu0 0
        %1185 = vmatpush1.bf16.msra.mxu0 0
        %1186 = vmatprep.subr.bf16.mxu0 0
        %1187 = vmatpush1.bf16.msra.mxu0 0
        %1188 = vmatprep.subr.bf16.mxu0 0
        %1189 = vmatpush1.bf16.msra.mxu0 0
        %1190 = vmatprep.subr.bf16.mxu0 0
        %1191 = vmatpush1.bf16.msra.mxu0 0
        %1192 = vmatprep.subr.bf16.mxu0 0
        %1193 = vmatpush1.bf16.msra.mxu0 0
        %1194 = vmatprep.mubr.bf16.mxu0 0
        %1195 = vmatmul.mubr.bf16.gmra.mrb[0].mxu0 %v960
        %v1196 = vpop.f32.mrb[0].mxu0
        %v1197 = vadd.f32 0.0, %v1196
        %v1198 = vpop.f32.mrb[0].mxu0
        %v1199 = vpop.f32.mrb[0].mxu0
        %v1200 = vpop.f32.mrb[0].mxu0
        %1201 = vdwg.mxu0
        %v1202 = vpack.c.bf16 %v1156, %v1156
        %v1203 = vpack.c.bf16 %v1158, %v1158
        %v1204 = vpack.c.bf16 %v1197, %v1197
        %v1205 = vld [vmem:[#allocation10] sm:$0x1]
        %v1206 = vld [vmem:[%s3] sm:$0xf]
        %vm1207 = vcmask 31744
        %v1209 = vsel %vm1207, %v1206, 0
        %vm1211 = vcmask 1041408
        %v1213 = vsel %vm1211, %v1202, 0
        %1215 = vmatprep.subr.bf16.mxu0 0
        %1216 = vmatpush1.bf16.msra.mxu0 %v1213
        %1217 = vmatprep.subr.bf16.mxu0 0
        %1218 = vmatpush1.bf16.msra.mxu0 0
        %1219 = vmatprep.subr.bf16.mxu0 0
        %1220 = vmatpush1.bf16.msra.mxu0 0
        %1221 = vmatprep.subr.bf16.mxu0 0
        %1222 = vmatpush1.bf16.msra.mxu0 0
        %1223 = vmatprep.subr.bf16.mxu0 0
        %1224 = vmatpush1.bf16.msra.mxu0 0
        %1225 = vmatprep.subr.bf16.mxu0 0
        %1226 = vmatpush1.bf16.msra.mxu0 0
        %1227 = vmatprep.subr.bf16.mxu0 0
        %1228 = vmatpush1.bf16.msra.mxu0 0
        %1229 = vmatprep.subr.bf16.mxu0 0
        %1230 = vmatpush1.bf16.msra.mxu0 0
        %1231 = vmatprep.subr.bf16.mxu0 0
        %1232 = vmatpush1.bf16.msra.mxu0 0
        %1233 = vmatprep.subr.bf16.mxu0 0
        %1234 = vmatpush1.bf16.msra.mxu0 0
        %1235 = vmatprep.subr.bf16.mxu0 0
        %1236 = vmatpush1.bf16.msra.mxu0 0
        %1237 = vmatprep.subr.bf16.mxu0 0
        %1238 = vmatpush1.bf16.msra.mxu0 0
        %1239 = vmatprep.subr.bf16.mxu0 0
        %1240 = vmatpush1.bf16.msra.mxu0 0
        %1241 = vmatprep.subr.bf16.mxu0 0
        %1242 = vmatpush1.bf16.msra.mxu0 0
        %1243 = vmatprep.subr.bf16.mxu0 0
        %1244 = vmatpush1.bf16.msra.mxu0 0
        %1245 = vmatprep.subr.bf16.mxu0 0
        %1246 = vmatpush1.bf16.msra.mxu0 0
        %1247 = vmatprep.mubr.bf16.mxu0 0
        %1248 = vmatmul.mubr.bf16.gmra.mrb[0].mxu0 %v1209
        %v1249 = vpop.f32.mrb[0].mxu0
        %v1250 = vadd.f32 0.0, %v1249
        %v1251 = vpop.f32.mrb[0].mxu0
        %v1252 = vpop.f32.mrb[0].mxu0
        %v1253 = vpop.f32.mrb[0].mxu0
        %1254 = vdwg.mxu0
        %v1256 = vlaneseq
        %v1257 = vshrl.u32 %v1256, 7
        %v1258 = vsub.s32 0, %v1257
        %v1259 = vrot.slane %v1205, %v1258
        %v1261 = vadd.f32 %v1259, %v1250
        %s1262 = scalar_lea.vmem %s3, 4
        %v1263 = vld [vmem:[%s1262] sm:$0xf]
        %v1265 = vsel %vm1207, %v1263, 0
        %v1268 = vsel %vm1211, %v1203, 0
        %1270 = vmatprep.subr.bf16.mxu0 0
        %1271 = vmatpush1.bf16.msra.mxu0 %v1268
        %1272 = vmatprep.subr.bf16.mxu0 0
        %1273 = vmatpush1.bf16.msra.mxu0 0
        %1274 = vmatprep.subr.bf16.mxu0 0
        %1275 = vmatpush1.bf16.msra.mxu0 0
        %1276 = vmatprep.subr.bf16.mxu0 0
        %1277 = vmatpush1.bf16.msra.mxu0 0
        %1278 = vmatprep.subr.bf16.mxu0 0
        %1279 = vmatpush1.bf16.msra.mxu0 0
        %1280 = vmatprep.subr.bf16.mxu0 0
        %1281 = vmatpush1.bf16.msra.mxu0 0
        %1282 = vmatprep.subr.bf16.mxu0 0
        %1283 = vmatpush1.bf16.msra.mxu0 0
        %1284 = vmatprep.subr.bf16.mxu0 0
        %1285 = vmatpush1.bf16.msra.mxu0 0
        %1286 = vmatprep.subr.bf16.mxu0 0
        %1287 = vmatpush1.bf16.msra.mxu0 0
        %1288 = vmatprep.subr.bf16.mxu0 0
        %1289 = vmatpush1.bf16.msra.mxu0 0
        %1290 = vmatprep.subr.bf16.mxu0 0
        %1291 = vmatpush1.bf16.msra.mxu0 0
        %1292 = vmatprep.subr.bf16.mxu0 0
        %1293 = vmatpush1.bf16.msra.mxu0 0
        %1294 = vmatprep.subr.bf16.mxu0 0
        %1295 = vmatpush1.bf16.msra.mxu0 0
        %1296 = vmatprep.subr.bf16.mxu0 0
        %1297 = vmatpush1.bf16.msra.mxu0 0
        %1298 = vmatprep.subr.bf16.mxu0 0
        %1299 = vmatpush1.bf16.msra.mxu0 0
        %1300 = vmatprep.subr.bf16.mxu0 0
        %1301 = vmatpush1.bf16.msra.mxu0 0
        %1302 = vmatprep.mubr.bf16.mxu0 0
        %1303 = vmatmul.mubr.bf16.gmra.mrb[0].mxu0 %v1265
        %v1304 = vpop.f32.mrb[0].mxu0
        %v1305 = vadd.f32 0.0, %v1304
        %v1306 = vpop.f32.mrb[0].mxu0
        %v1307 = vpop.f32.mrb[0].mxu0
        %v1308 = vpop.f32.mrb[0].mxu0
        %1309 = vdwg.mxu0
        %v1310 = vadd.f32 %v1261, %v1305
        %s1311 = scalar_lea.vmem %s3, 8
        %v1312 = vld [vmem:[%s1311] sm:$0xf]
        %v1314 = vsel %vm1207, %v1312, 0
        %v1317 = vsel %vm1211, %v1204, 0
        %1319 = vmatprep.subr.bf16.mxu0 0
        %1320 = vmatpush1.bf16.msra.mxu0 %v1317
        %1321 = vmatprep.subr.bf16.mxu0 0
        %1322 = vmatpush1.bf16.msra.mxu0 0
        %1323 = vmatprep.subr.bf16.mxu0 0
        %1324 = vmatpush1.bf16.msra.mxu0 0
        %1325 = vmatprep.subr.bf16.mxu0 0
        %1326 = vmatpush1.bf16.msra.mxu0 0
        %1327 = vmatprep.subr.bf16.mxu0 0
        %1328 = vmatpush1.bf16.msra.mxu0 0
        %1329 = vmatprep.subr.bf16.mxu0 0
        %1330 = vmatpush1.bf16.msra.mxu0 0
        %1331 = vmatprep.subr.bf16.mxu0 0
        %1332 = vmatpush1.bf16.msra.mxu0 0
        %1333 = vmatprep.subr.bf16.mxu0 0
        %1334 = vmatpush1.bf16.msra.mxu0 0
        %1335 = vmatprep.subr.bf16.mxu0 0
        %1336 = vmatpush1.bf16.msra.mxu0 0
        %1337 = vmatprep.subr.bf16.mxu0 0
        %1338 = vmatpush1.bf16.msra.mxu0 0
        %1339 = vmatprep.subr.bf16.mxu0 0
        %1340 = vmatpush1.bf16.msra.mxu0 0
        %1341 = vmatprep.subr.bf16.mxu0 0
        %1342 = vmatpush1.bf16.msra.mxu0 0
        %1343 = vmatprep.subr.bf16.mxu0 0
        %1344 = vmatpush1.bf16.msra.mxu0 0
        %1345 = vmatprep.subr.bf16.mxu0 0
        %1346 = vmatpush1.bf16.msra.mxu0 0
        %1347 = vmatprep.subr.bf16.mxu0 0
        %1348 = vmatpush1.bf16.msra.mxu0 0
        %1349 = vmatprep.subr.bf16.mxu0 0
        %1350 = vmatpush1.bf16.msra.mxu0 0
        %1351 = vmatprep.mubr.bf16.mxu0 0
        %1352 = vmatmul.mubr.bf16.gmra.mrb[0].mxu0 %v1314
        %v1353 = vpop.f32.mrb[0].mxu0
        %v1354 = vadd.f32 0.0, %v1353
        %v1355 = vpop.f32.mrb[0].mxu0
        %v1356 = vpop.f32.mrb[0].mxu0
        %v1357 = vpop.f32.mrb[0].mxu0
        %1358 = vdwg.mxu0
        %v1359 = vadd.f32 %v1310, %v1354
        %vm1360 = vcmp.gt.f32.partialorder %v1359, 0.0
        %v1361 = vmul.f32 %v1359, 0.2
        %v1362 = vsel %vm1360, %v1359, %v1361
        %v1363 = vld [vmem:[#allocation11] sm:$0x1]
        %v1365 = vlaneseq
        %v1366 = vshrl.u32 %v1365, 7
        %v1367 = vsub.s32 0, %v1366
        %v1368 = vrot.slane %v1363, %v1367
        %v1370 = vmul.f32 %v1362, %v1368
        %v1371 = vld [vmem:[#allocation13] sm:$0x1]
        %v1373 = vlaneseq
        %v1374 = vshrl.u32 %v1373, 7
        %v1375 = vsub.s32 0, %v1374
        %v1376 = vrot.slane %v1371, %v1375
        %v1378 = vadd.f32 %v1370, %v1376
        %v1379 = vpack.c.bf16 %v1378, %v1378
        %v1380 = vld [vmem:[#allocation14] sm:$0xff]
        %v1381 = vld [vmem:[#allocation14 + $0x8] sm:$0xf]
        %v1382 = vld [vmem:[#allocation14 + $0xc] sm:$0xff]
        %v1383 = vld [vmem:[#allocation14 + $0x14] sm:$0xf]
        %v1384 = vld [vmem:[#allocation14 + $0x18] sm:$0xff]
        %v1385 = vld [vmem:[#allocation14 + $0x20] sm:$0xf]
        %v1386 = vld [vmem:[#allocation14 + $0x24] sm:$0xff]
        %v1387 = vld [vmem:[#allocation14 + $0x2c] sm:$0xf]
        %v1388 = vld [vmem:[#allocation14 + $0x30] sm:$0xff]
        %v1389 = vld [vmem:[#allocation14 + $0x38] sm:$0xf]
        %v1390 = vld [vmem:[#allocation14 + $0x3c] sm:$0xff]
        %v1391 = vld [vmem:[#allocation14 + $0x44] sm:$0xf]
        %v1392 = vld [vmem:[#allocation14 + $0x48] sm:$0xff]
        %v1393 = vld [vmem:[#allocation14 + $0x50] sm:$0xf]
        %v1394 = vld [vmem:[#allocation14 + $0x54] sm:$0xff]
        %v1395 = vld [vmem:[#allocation14 + $0x5c] sm:$0xf]
        %v1396 = vld [vmem:[#allocation14 + $0x60] sm:$0xff]
        %v1397 = vld [vmem:[#allocation14 + $0x68] sm:$0xf]
        %v1398 = vld [vmem:[#allocation14 + $0x6c] sm:$0xff]
        %v1399 = vld [vmem:[#allocation14 + $0x74] sm:$0xf]
        %v1400 = vld [vmem:[#allocation14 + $0x78] sm:$0xff]
        %v1401 = vld [vmem:[#allocation14 + $0x80] sm:$0xf]
        %v1402 = vld [vmem:[#allocation14 + $0x84] sm:$0xff]
        %v1403 = vld [vmem:[#allocation14 + $0x8c] sm:$0xf]
        %v1404 = vld [vmem:[#allocation14 + $0x90] sm:$0xff]
        %v1405 = vld [vmem:[#allocation14 + $0x98] sm:$0xf]
        %v1406 = vld [vmem:[#allocation14 + $0x9c] sm:$0xff]
        %v1407 = vld [vmem:[#allocation14 + $0xa4] sm:$0xf]
        %v1408 = vld [vmem:[#allocation14 + $0xa8] sm:$0xff]
        %v1409 = vld [vmem:[#allocation14 + $0xb0] sm:$0xf]
        %v1410 = vld [vmem:[#allocation14 + $0xb4] sm:$0xff]
        %v1411 = vld [vmem:[#allocation14 + $0xbc] sm:$0xf]
        %v1444 = vunpack.c.l.b16 %v1380
        %v1445 = vunpack.c.h.b16 %v1380
        %v1446 = vunpack.c.l.b16 %v1381
        %v1447 = vunpack.c.l.b16 %v1382
        %v1448 = vunpack.c.h.b16 %v1382
        %v1449 = vunpack.c.l.b16 %v1383
        %v1450 = vunpack.c.l.b16 %v1384
        %v1451 = vunpack.c.h.b16 %v1384
        %v1452 = vunpack.c.l.b16 %v1385
        %v1453 = vunpack.c.l.b16 %v1386
        %v1454 = vunpack.c.h.b16 %v1386
        %v1455 = vunpack.c.l.b16 %v1387
        %v1456 = vunpack.c.l.b16 %v1388
        %v1457 = vunpack.c.h.b16 %v1388
        %v1458 = vunpack.c.l.b16 %v1389
        %v1459 = vunpack.c.l.b16 %v1390
        %v1460 = vunpack.c.h.b16 %v1390
        %v1461 = vunpack.c.l.b16 %v1391
        %v1462 = vunpack.c.l.b16 %v1392
        %v1463 = vunpack.c.h.b16 %v1392
        %v1464 = vunpack.c.l.b16 %v1393
        %v1465 = vunpack.c.l.b16 %v1394
        %v1466 = vunpack.c.h.b16 %v1394
        %v1467 = vunpack.c.l.b16 %v1395
        %v1468 = vunpack.c.l.b16 %v1396
        %v1469 = vunpack.c.h.b16 %v1396
        %v1470 = vunpack.c.l.b16 %v1397
        %v1471 = vunpack.c.l.b16 %v1398
        %v1472 = vunpack.c.h.b16 %v1398
        %v1473 = vunpack.c.l.b16 %v1399
        %v1474 = vunpack.c.l.b16 %v1400
        %v1475 = vunpack.c.h.b16 %v1400
        %v1476 = vunpack.c.l.b16 %v1401
        %v1477 = vunpack.c.l.b16 %v1402
        %v1478 = vunpack.c.h.b16 %v1402
        %v1479 = vunpack.c.l.b16 %v1403
        %v1480 = vunpack.c.l.b16 %v1404
        %v1481 = vunpack.c.h.b16 %v1404
        %v1482 = vunpack.c.l.b16 %v1405
        %v1483 = vunpack.c.l.b16 %v1406
        %v1484 = vunpack.c.h.b16 %v1406
        %v1485 = vunpack.c.l.b16 %v1407
        %v1486 = vunpack.c.l.b16 %v1408
        %v1487 = vunpack.c.h.b16 %v1408
        %v1488 = vunpack.c.l.b16 %v1409
        %v1489 = vunpack.c.l.b16 %v1410
        %v1490 = vunpack.c.h.b16 %v1410
        %v1491 = vunpack.c.l.b16 %v1411
        %v1492 = vpack.c.b16 %v1447, %v1444
        %v1493 = vpack.c.b16 %v1448, %v1445
        %v1494 = vpack.c.b16 %v1449, %v1446
        %v1495 = vpack.c.b16 %v1453, %v1450
        %v1496 = vpack.c.b16 %v1454, %v1451
        %v1497 = vpack.c.b16 %v1455, %v1452
        %v1498 = vpack.c.b16 %v1459, %v1456
        %v1499 = vpack.c.b16 %v1460, %v1457
        %v1500 = vpack.c.b16 %v1461, %v1458
        %v1501 = vpack.c.b16 %v1465, %v1462
        %v1502 = vpack.c.b16 %v1466, %v1463
        %v1503 = vpack.c.b16 %v1467, %v1464
        %v1504 = vpack.c.b16 %v1471, %v1468
        %v1505 = vpack.c.b16 %v1472, %v1469
        %v1506 = vpack.c.b16 %v1473, %v1470
        %v1507 = vpack.c.b16 %v1477, %v1474
        %v1508 = vpack.c.b16 %v1478, %v1475
        %v1509 = vpack.c.b16 %v1479, %v1476
        %v1510 = vpack.c.b16 %v1483, %v1480
        %v1511 = vpack.c.b16 %v1484, %v1481
        %v1512 = vpack.c.b16 %v1485, %v1482
        %v1513 = vpack.c.b16 %v1489, %v1486
        %v1514 = vpack.c.b16 %v1490, %v1487
        %v1515 = vpack.c.b16 %v1491, %v1488
        %1540 = vmatprep.subr.bf16.mxu0 %v1493
        %1541 = vmatpush1.bf16.msra.mxu0 %v1492
        %1542 = vmatprep.subr.bf16.mxu0 %v1496
        %1543 = vmatpush1.bf16.msra.mxu0 %v1495
        %1544 = vmatprep.subr.bf16.mxu0 %v1499
        %1545 = vmatpush1.bf16.msra.mxu0 %v1498
        %1546 = vmatprep.subr.bf16.mxu0 %v1502
        %1547 = vmatpush1.bf16.msra.mxu0 %v1501
        %1548 = vmatprep.subr.bf16.mxu0 %v1505
        %1549 = vmatpush1.bf16.msra.mxu0 %v1504
        %1550 = vmatprep.subr.bf16.mxu0 %v1508
        %1551 = vmatpush1.bf16.msra.mxu0 %v1507
        %1552 = vmatprep.subr.bf16.mxu0 %v1511
        %1553 = vmatpush1.bf16.msra.mxu0 %v1510
        %1554 = vmatprep.subr.bf16.mxu0 %v1514
        %1555 = vmatpush1.bf16.msra.mxu0 %v1513
        %1556 = vmatprep.subr.bf16.mxu0 0
        %1557 = vmatpush1.bf16.msra.mxu0 0
        %1558 = vmatprep.subr.bf16.mxu0 0
        %1559 = vmatpush1.bf16.msra.mxu0 0
        %1560 = vmatprep.subr.bf16.mxu0 0
        %1561 = vmatpush1.bf16.msra.mxu0 0
        %1562 = vmatprep.subr.bf16.mxu0 0
        %1563 = vmatpush1.bf16.msra.mxu0 0
        %1564 = vmatprep.subr.bf16.mxu0 0
        %1565 = vmatpush1.bf16.msra.mxu0 0
        %1566 = vmatprep.subr.bf16.mxu0 0
        %1567 = vmatpush1.bf16.msra.mxu0 0
        %1568 = vmatprep.subr.bf16.mxu0 0
        %1569 = vmatpush1.bf16.msra.mxu0 0
        %1570 = vmatprep.subr.bf16.mxu0 0
        %1571 = vmatpush1.bf16.msra.mxu0 0
        %1572 = vmatprep.mubr.bf16.mxu0 0
        %1573 = vmatmul.mubr.bf16.gmra.mrb[0].mxu0 %v1379
        %v1574 = vpop.f32.mrb[0].mxu0
        %v1575 = vadd.f32 0.0, %v1574
        %v1576 = vpop.f32.mrb[0].mxu0
        %v1577 = vadd.f32 0.0, %v1576
        %v1578 = vpop.f32.mrb[0].mxu0
        %v1579 = vpop.f32.mrb[0].mxu0
        %1580 = vdwg.mxu0
        %1581 = vmatprep.subr.bf16.mxu0 0
        %1582 = vmatpush1.bf16.msra.mxu0 %v1494
        %1583 = vmatprep.subr.bf16.mxu0 0
        %1584 = vmatpush1.bf16.msra.mxu0 %v1497
        %1585 = vmatprep.subr.bf16.mxu0 0
        %1586 = vmatpush1.bf16.msra.mxu0 %v1500
        %1587 = vmatprep.subr.bf16.mxu0 0
        %1588 = vmatpush1.bf16.msra.mxu0 %v1503
        %1589 = vmatprep.subr.bf16.mxu0 0
        %1590 = vmatpush1.bf16.msra.mxu0 %v1506
        %1591 = vmatprep.subr.bf16.mxu0 0
        %1592 = vmatpush1.bf16.msra.mxu0 %v1509
        %1593 = vmatprep.subr.bf16.mxu0 0
        %1594 = vmatpush1.bf16.msra.mxu0 %v1512
        %1595 = vmatprep.subr.bf16.mxu0 0
        %1596 = vmatpush1.bf16.msra.mxu0 %v1515
        %1597 = vmatprep.subr.bf16.mxu0 0
        %1598 = vmatpush1.bf16.msra.mxu0 0
        %1599 = vmatprep.subr.bf16.mxu0 0
        %1600 = vmatpush1.bf16.msra.mxu0 0
        %1601 = vmatprep.subr.bf16.mxu0 0
        %1602 = vmatpush1.bf16.msra.mxu0 0
        %1603 = vmatprep.subr.bf16.mxu0 0
        %1604 = vmatpush1.bf16.msra.mxu0 0
        %1605 = vmatprep.subr.bf16.mxu0 0
        %1606 = vmatpush1.bf16.msra.mxu0 0
        %1607 = vmatprep.subr.bf16.mxu0 0
        %1608 = vmatpush1.bf16.msra.mxu0 0
        %1609 = vmatprep.subr.bf16.mxu0 0
        %1610 = vmatpush1.bf16.msra.mxu0 0
        %1611 = vmatprep.subr.bf16.mxu0 0
        %1612 = vmatpush1.bf16.msra.mxu0 0
        %1613 = vmatprep.mubr.bf16.mxu0 0
        %1614 = vmatmul.mubr.bf16.gmra.mrb[0].mxu0 %v1379
        %v1615 = vpop.f32.mrb[0].mxu0
        %v1616 = vadd.f32 0.0, %v1615
        %v1617 = vpop.f32.mrb[0].mxu0
        %v1618 = vpop.f32.mrb[0].mxu0
        %v1619 = vpop.f32.mrb[0].mxu0
        %1620 = vdwg.mxu0
        %v1621 = vpack.c.bf16 %v1575, %v1575
        %v1622 = vpack.c.bf16 %v1577, %v1577
        %v1623 = vpack.c.bf16 %v1616, %v1616
        %v1624 = vld [vmem:[#allocation16] sm:$0x1]
        %v1625 = vld [vmem:[%s8] sm:$0xf]
        %v1626 = vld [vmem:[%s8 + $0x4] sm:$0xf]
        %v1629 = vunpack.c.l.b16 %v1625
        %v1630 = vunpack.c.l.b16 %v1626
        %v1631 = vpack.c.b16 %v1630, %v1629
        %vm1632 = vcmask 64512
        %v1634 = vsel %vm1632, %v1631, 0
        %vm1636 = vcmask 1043456
        %v1638 = vsel %vm1636, %v1621, 0
        %1640 = vmatprep.subr.bf16.mxu0 0
        %1641 = vmatpush1.bf16.msra.mxu0 %v1638
        %1642 = vmatprep.subr.bf16.mxu0 0
        %1643 = vmatpush1.bf16.msra.mxu0 0
        %1644 = vmatprep.subr.bf16.mxu0 0
        %1645 = vmatpush1.bf16.msra.mxu0 0
        %1646 = vmatprep.subr.bf16.mxu0 0
        %1647 = vmatpush1.bf16.msra.mxu0 0
        %1648 = vmatprep.subr.bf16.mxu0 0
        %1649 = vmatpush1.bf16.msra.mxu0 0
        %1650 = vmatprep.subr.bf16.mxu0 0
        %1651 = vmatpush1.bf16.msra.mxu0 0
        %1652 = vmatprep.subr.bf16.mxu0 0
        %1653 = vmatpush1.bf16.msra.mxu0 0
        %1654 = vmatprep.subr.bf16.mxu0 0
        %1655 = vmatpush1.bf16.msra.mxu0 0
        %1656 = vmatprep.subr.bf16.mxu0 0
        %1657 = vmatpush1.bf16.msra.mxu0 0
        %1658 = vmatprep.subr.bf16.mxu0 0
        %1659 = vmatpush1.bf16.msra.mxu0 0
        %1660 = vmatprep.subr.bf16.mxu0 0
        %1661 = vmatpush1.bf16.msra.mxu0 0
        %1662 = vmatprep.subr.bf16.mxu0 0
        %1663 = vmatpush1.bf16.msra.mxu0 0
        %1664 = vmatprep.subr.bf16.mxu0 0
        %1665 = vmatpush1.bf16.msra.mxu0 0
        %1666 = vmatprep.subr.bf16.mxu0 0
        %1667 = vmatpush1.bf16.msra.mxu0 0
        %1668 = vmatprep.subr.bf16.mxu0 0
        %1669 = vmatpush1.bf16.msra.mxu0 0
        %1670 = vmatprep.subr.bf16.mxu0 0
        %1671 = vmatpush1.bf16.msra.mxu0 0
        %1672 = vmatprep.mubr.bf16.mxu0 0
        %1673 = vmatmul.mubr.bf16.gmra.mrb[0].mxu0 %v1634
        %v1674 = vpop.f32.mrb[0].mxu0
        %v1675 = vadd.f32 0.0, %v1674
        %v1676 = vpop.f32.mrb[0].mxu0
        %v1677 = vpop.f32.mrb[0].mxu0
        %v1678 = vadd.f32 0.0, %v1677
        %v1679 = vpop.f32.mrb[0].mxu0
        %1680 = vdwg.mxu0
        %v1682 = vlaneseq
        %v1683 = vshrl.u32 %v1682, 7
        %v1684 = vsub.s32 0, %v1683
        %v1685 = vrot.slane %v1624, %v1684
        %v1687 = vadd.f32 %v1685, %v1675
        %v1688 = vadd.f32 %v1685, %v1678
        %s1689 = scalar_lea.vmem %s8, 8
        %v1690 = vld [vmem:[%s1689] sm:$0xf]
        %v1691 = vld [vmem:[%s1689 + $0x4] sm:$0xf]
        %v1694 = vunpack.c.l.b16 %v1690
        %v1695 = vunpack.c.l.b16 %v1691
        %v1696 = vpack.c.b16 %v1695, %v1694
        %v1698 = vsel %vm1632, %v1696, 0
        %v1701 = vsel %vm1636, %v1622, 0
        %1703 = vmatprep.subr.bf16.mxu0 0
        %1704 = vmatpush1.bf16.msra.mxu0 %v1701
        %1705 = vmatprep.subr.bf16.mxu0 0
        %1706 = vmatpush1.bf16.msra.mxu0 0
        %1707 = vmatprep.subr.bf16.mxu0 0
        %1708 = vmatpush1.bf16.msra.mxu0 0
        %1709 = vmatprep.subr.bf16.mxu0 0
        %1710 = vmatpush1.bf16.msra.mxu0 0
        %1711 = vmatprep.subr.bf16.mxu0 0
        %1712 = vmatpush1.bf16.msra.mxu0 0
        %1713 = vmatprep.subr.bf16.mxu0 0
        %1714 = vmatpush1.bf16.msra.mxu0 0
        %1715 = vmatprep.subr.bf16.mxu0 0
        %1716 = vmatpush1.bf16.msra.mxu0 0
        %1717 = vmatprep.subr.bf16.mxu0 0
        %1718 = vmatpush1.bf16.msra.mxu0 0
        %1719 = vmatprep.subr.bf16.mxu0 0
        %1720 = vmatpush1.bf16.msra.mxu0 0
        %1721 = vmatprep.subr.bf16.mxu0 0
        %1722 = vmatpush1.bf16.msra.mxu0 0
        %1723 = vmatprep.subr.bf16.mxu0 0
        %1724 = vmatpush1.bf16.msra.mxu0 0
        %1725 = vmatprep.subr.bf16.mxu0 0
        %1726 = vmatpush1.bf16.msra.mxu0 0
        %1727 = vmatprep.subr.bf16.mxu0 0
        %1728 = vmatpush1.bf16.msra.mxu0 0
        %1729 = vmatprep.subr.bf16.mxu0 0
        %1730 = vmatpush1.bf16.msra.mxu0 0
        %1731 = vmatprep.subr.bf16.mxu0 0
        %1732 = vmatpush1.bf16.msra.mxu0 0
        %1733 = vmatprep.subr.bf16.mxu0 0
        %1734 = vmatpush1.bf16.msra.mxu0 0
        %1735 = vmatprep.mubr.bf16.mxu0 0
        %1736 = vmatmul.mubr.bf16.gmra.mrb[0].mxu0 %v1698
        %v1737 = vpop.f32.mrb[0].mxu0
        %v1738 = vadd.f32 0.0, %v1737
        %v1739 = vpop.f32.mrb[0].mxu0
        %v1740 = vpop.f32.mrb[0].mxu0
        %v1741 = vadd.f32 0.0, %v1740
        %v1742 = vpop.f32.mrb[0].mxu0
        %1743 = vdwg.mxu0
        %v1744 = vadd.f32 %v1687, %v1738
        %v1745 = vadd.f32 %v1688, %v1741
        %s1746 = scalar_lea.vmem %s8, 16
        %v1747 = vld [vmem:[%s1746] sm:$0xf]
        %v1748 = vld [vmem:[%s1746 + $0x4] sm:$0xf]
        %v1751 = vunpack.c.l.b16 %v1747
        %v1752 = vunpack.c.l.b16 %v1748
        %v1753 = vpack.c.b16 %v1752, %v1751
        %v1755 = vsel %vm1632, %v1753, 0
        %v1758 = vsel %vm1636, %v1623, 0
        %1760 = vmatprep.subr.bf16.mxu0 0
        %1761 = vmatpush1.bf16.msra.mxu0 %v1758
        %1762 = vmatprep.subr.bf16.mxu0 0
        %1763 = vmatpush1.bf16.msra.mxu0 0
        %1764 = vmatprep.subr.bf16.mxu0 0
        %1765 = vmatpush1.bf16.msra.mxu0 0
        %1766 = vmatprep.subr.bf16.mxu0 0
        %1767 = vmatpush1.bf16.msra.mxu0 0
        %1768 = vmatprep.subr.bf16.mxu0 0
        %1769 = vmatpush1.bf16.msra.mxu0 0
        %1770 = vmatprep.subr.bf16.mxu0 0
        %1771 = vmatpush1.bf16.msra.mxu0 0
        %1772 = vmatprep.subr.bf16.mxu0 0
        %1773 = vmatpush1.bf16.msra.mxu0 0
        %1774 = vmatprep.subr.bf16.mxu0 0
        %1775 = vmatpush1.bf16.msra.mxu0 0
        %1776 = vmatprep.subr.bf16.mxu0 0
        %1777 = vmatpush1.bf16.msra.mxu0 0
        %1778 = vmatprep.subr.bf16.mxu0 0
        %1779 = vmatpush1.bf16.msra.mxu0 0
        %1780 = vmatprep.subr.bf16.mxu0 0
        %1781 = vmatpush1.bf16.msra.mxu0 0
        %1782 = vmatprep.subr.bf16.mxu0 0
        %1783 = vmatpush1.bf16.msra.mxu0 0
        %1784 = vmatprep.subr.bf16.mxu0 0
        %1785 = vmatpush1.bf16.msra.mxu0 0
        %1786 = vmatprep.subr.bf16.mxu0 0
        %1787 = vmatpush1.bf16.msra.mxu0 0
        %1788 = vmatprep.subr.bf16.mxu0 0
        %1789 = vmatpush1.bf16.msra.mxu0 0
        %1790 = vmatprep.subr.bf16.mxu0 0
        %1791 = vmatpush1.bf16.msra.mxu0 0
        %1792 = vmatprep.mubr.bf16.mxu0 0
        %1793 = vmatmul.mubr.bf16.gmra.mrb[0].mxu0 %v1755
        %v1794 = vpop.f32.mrb[0].mxu0
        %v1795 = vadd.f32 0.0, %v1794
        %v1796 = vpop.f32.mrb[0].mxu0
        %v1797 = vpop.f32.mrb[0].mxu0
        %v1798 = vadd.f32 0.0, %v1797
        %v1799 = vpop.f32.mrb[0].mxu0
        %1800 = vdwg.mxu0
        %v1801 = vadd.f32 %v1744, %v1795
        %v1802 = vadd.f32 %v1745, %v1798
        %vm1803 = vcmp.gt.f32.partialorder %v1801, 0.0
        %vm1804 = vcmp.gt.f32.partialorder %v1802, 0.0
        %v1805 = vmul.f32 %v1801, 0.2
        %v1806 = vmul.f32 %v1802, 0.2
        %v1807 = vsel %vm1803, %v1801, %v1805
        %v1808 = vsel %vm1804, %v1802, %v1806
        %v1809 = vld [vmem:[#allocation17] sm:$0x1]
        %v1811 = vlaneseq
        %v1812 = vshrl.u32 %v1811, 7
        %v1813 = vsub.s32 0, %v1812
        %v1814 = vrot.slane %v1809, %v1813
        %v1816 = vmul.f32 %v1807, %v1814
        %v1817 = vmul.f32 %v1808, %v1814
        %v1818 = vld [vmem:[#allocation19] sm:$0x1]
        %v1820 = vlaneseq
        %v1821 = vshrl.u32 %v1820, 7
        %v1822 = vsub.s32 0, %v1821
        %v1823 = vrot.slane %v1818, %v1822
        %v1825 = vadd.f32 %v1816, %v1823
        %v1826 = vadd.f32 %v1817, %v1823
        %v1827 = vpack.c.bf16 %v1826, %v1825
        %v1828 = vld [vmem:[#allocation20] sm:$0xff]
        %v1829 = vld [vmem:[#allocation20 + $0x8] sm:$0xf]
        %v1830 = vld [vmem:[#allocation20 + $0xc] sm:$0xff]
        %v1831 = vld [vmem:[#allocation20 + $0x14] sm:$0xf]
        %v1832 = vld [vmem:[#allocation20 + $0x18] sm:$0xff]
        %v1833 = vld [vmem:[#allocation20 + $0x20] sm:$0xf]
        %v1834 = vld [vmem:[#allocation20 + $0x24] sm:$0xff]
        %v1835 = vld [vmem:[#allocation20 + $0x2c] sm:$0xf]
        %v1836 = vld [vmem:[#allocation20 + $0x30] sm:$0xff]
        %v1837 = vld [vmem:[#allocation20 + $0x38] sm:$0xf]
        %v1838 = vld [vmem:[#allocation20 + $0x3c] sm:$0xff]
        %v1839 = vld [vmem:[#allocation20 + $0x44] sm:$0xf]
        %v1840 = vld [vmem:[#allocation20 + $0x48] sm:$0xff]
        %v1841 = vld [vmem:[#allocation20 + $0x50] sm:$0xf]
        %v1842 = vld [vmem:[#allocation20 + $0x54] sm:$0xff]
        %v1843 = vld [vmem:[#allocation20 + $0x5c] sm:$0xf]
        %v1844 = vld [vmem:[#allocation20 + $0x60] sm:$0xff]
        %v1845 = vld [vmem:[#allocation20 + $0x68] sm:$0xf]
        %v1846 = vld [vmem:[#allocation20 + $0x6c] sm:$0xff]
        %v1847 = vld [vmem:[#allocation20 + $0x74] sm:$0xf]
        %v1848 = vld [vmem:[#allocation20 + $0x78] sm:$0xff]
        %v1849 = vld [vmem:[#allocation20 + $0x80] sm:$0xf]
        %v1850 = vld [vmem:[#allocation20 + $0x84] sm:$0xff]
        %v1851 = vld [vmem:[#allocation20 + $0x8c] sm:$0xf]
        %v1852 = vld [vmem:[#allocation20 + $0x90] sm:$0xff]
        %v1853 = vld [vmem:[#allocation20 + $0x98] sm:$0xf]
        %v1854 = vld [vmem:[#allocation20 + $0x9c] sm:$0xff]
        %v1855 = vld [vmem:[#allocation20 + $0xa4] sm:$0xf]
        %v1856 = vld [vmem:[#allocation20 + $0xa8] sm:$0xff]
        %v1857 = vld [vmem:[#allocation20 + $0xb0] sm:$0xf]
        %v1858 = vld [vmem:[#allocation20 + $0xb4] sm:$0xff]
        %v1859 = vld [vmem:[#allocation20 + $0xbc] sm:$0xf]
        %v1892 = vunpack.c.l.b16 %v1828
        %v1893 = vunpack.c.h.b16 %v1828
        %v1894 = vunpack.c.l.b16 %v1829
        %v1895 = vunpack.c.l.b16 %v1830
        %v1896 = vunpack.c.h.b16 %v1830
        %v1897 = vunpack.c.l.b16 %v1831
        %v1898 = vunpack.c.l.b16 %v1832
        %v1899 = vunpack.c.h.b16 %v1832
        %v1900 = vunpack.c.l.b16 %v1833
        %v1901 = vunpack.c.l.b16 %v1834
        %v1902 = vunpack.c.h.b16 %v1834
        %v1903 = vunpack.c.l.b16 %v1835
        %v1904 = vunpack.c.l.b16 %v1836
        %v1905 = vunpack.c.h.b16 %v1836
        %v1906 = vunpack.c.l.b16 %v1837
        %v1907 = vunpack.c.l.b16 %v1838
        %v1908 = vunpack.c.h.b16 %v1838
        %v1909 = vunpack.c.l.b16 %v1839
        %v1910 = vunpack.c.l.b16 %v1840
        %v1911 = vunpack.c.h.b16 %v1840
        %v1912 = vunpack.c.l.b16 %v1841
        %v1913 = vunpack.c.l.b16 %v1842
        %v1914 = vunpack.c.h.b16 %v1842
        %v1915 = vunpack.c.l.b16 %v1843
        %v1916 = vunpack.c.l.b16 %v1844
        %v1917 = vunpack.c.h.b16 %v1844
        %v1918 = vunpack.c.l.b16 %v1845
        %v1919 = vunpack.c.l.b16 %v1846
        %v1920 = vunpack.c.h.b16 %v1846
        %v1921 = vunpack.c.l.b16 %v1847
        %v1922 = vunpack.c.l.b16 %v1848
        %v1923 = vunpack.c.h.b16 %v1848
        %v1924 = vunpack.c.l.b16 %v1849
        %v1925 = vunpack.c.l.b16 %v1850
        %v1926 = vunpack.c.h.b16 %v1850
        %v1927 = vunpack.c.l.b16 %v1851
        %v1928 = vunpack.c.l.b16 %v1852
        %v1929 = vunpack.c.h.b16 %v1852
        %v1930 = vunpack.c.l.b16 %v1853
        %v1931 = vunpack.c.l.b16 %v1854
        %v1932 = vunpack.c.h.b16 %v1854
        %v1933 = vunpack.c.l.b16 %v1855
        %v1934 = vunpack.c.l.b16 %v1856
        %v1935 = vunpack.c.h.b16 %v1856
        %v1936 = vunpack.c.l.b16 %v1857
        %v1937 = vunpack.c.l.b16 %v1858
        %v1938 = vunpack.c.h.b16 %v1858
        %v1939 = vunpack.c.l.b16 %v1859
        %v1940 = vpack.c.b16 %v1895, %v1892
        %v1941 = vpack.c.b16 %v1896, %v1893
        %v1942 = vpack.c.b16 %v1897, %v1894
        %v1943 = vpack.c.b16 %v1901, %v1898
        %v1944 = vpack.c.b16 %v1902, %v1899
        %v1945 = vpack.c.b16 %v1903, %v1900
        %v1946 = vpack.c.b16 %v1907, %v1904
        %v1947 = vpack.c.b16 %v1908, %v1905
        %v1948 = vpack.c.b16 %v1909, %v1906
        %v1949 = vpack.c.b16 %v1913, %v1910
        %v1950 = vpack.c.b16 %v1914, %v1911
        %v1951 = vpack.c.b16 %v1915, %v1912
        %v1952 = vpack.c.b16 %v1919, %v1916
        %v1953 = vpack.c.b16 %v1920, %v1917
        %v1954 = vpack.c.b16 %v1921, %v1918
        %v1955 = vpack.c.b16 %v1925, %v1922
        %v1956 = vpack.c.b16 %v1926, %v1923
        %v1957 = vpack.c.b16 %v1927, %v1924
        %v1958 = vpack.c.b16 %v1931, %v1928
        %v1959 = vpack.c.b16 %v1932, %v1929
        %v1960 = vpack.c.b16 %v1933, %v1930
        %v1961 = vpack.c.b16 %v1937, %v1934
        %v1962 = vpack.c.b16 %v1938, %v1935
        %v1963 = vpack.c.b16 %v1939, %v1936
        %1988 = vmatprep.subr.bf16.mxu0 %v1941
        %1989 = vmatpush1.bf16.msra.mxu0 %v1940
        %1990 = vmatprep.subr.bf16.mxu0 %v1944
        %1991 = vmatpush1.bf16.msra.mxu0 %v1943
        %1992 = vmatprep.subr.bf16.mxu0 %v1947
        %1993 = vmatpush1.bf16.msra.mxu0 %v1946
        %1994 = vmatprep.subr.bf16.mxu0 %v1950
        %1995 = vmatpush1.bf16.msra.mxu0 %v1949
        %1996 = vmatprep.subr.bf16.mxu0 %v1953
        %1997 = vmatpush1.bf16.msra.mxu0 %v1952
        %1998 = vmatprep.subr.bf16.mxu0 %v1956
        %1999 = vmatpush1.bf16.msra.mxu0 %v1955
        %2000 = vmatprep.subr.bf16.mxu0 %v1959
        %2001 = vmatpush1.bf16.msra.mxu0 %v1958
        %2002 = vmatprep.subr.bf16.mxu0 %v1962
        %2003 = vmatpush1.bf16.msra.mxu0 %v1961
        %2004 = vmatprep.subr.bf16.mxu0 0
        %2005 = vmatpush1.bf16.msra.mxu0 0
        %2006 = vmatprep.subr.bf16.mxu0 0
        %2007 = vmatpush1.bf16.msra.mxu0 0
        %2008 = vmatprep.subr.bf16.mxu0 0
        %2009 = vmatpush1.bf16.msra.mxu0 0
        %2010 = vmatprep.subr.bf16.mxu0 0
        %2011 = vmatpush1.bf16.msra.mxu0 0
        %2012 = vmatprep.subr.bf16.mxu0 0
        %2013 = vmatpush1.bf16.msra.mxu0 0
        %2014 = vmatprep.subr.bf16.mxu0 0
        %2015 = vmatpush1.bf16.msra.mxu0 0
        %2016 = vmatprep.subr.bf16.mxu0 0
        %2017 = vmatpush1.bf16.msra.mxu0 0
        %2018 = vmatprep.subr.bf16.mxu0 0
        %2019 = vmatpush1.bf16.msra.mxu0 0
        %2020 = vmatprep.mubr.bf16.mxu0 0
        %2021 = vmatmul.mubr.bf16.gmra.mrb[0].mxu0 %v1827
        %v2022 = vpop.f32.mrb[0].mxu0
        %v2023 = vadd.f32 0.0, %v2022
        %v2024 = vpop.f32.mrb[0].mxu0
        %v2025 = vadd.f32 0.0, %v2024
        %v2026 = vpop.f32.mrb[0].mxu0
        %v2027 = vadd.f32 0.0, %v2026
        %v2028 = vpop.f32.mrb[0].mxu0
        %v2029 = vadd.f32 0.0, %v2028
        %2030 = vdwg.mxu0
        %2031 = vmatprep.subr.bf16.mxu0 0
        %2032 = vmatpush1.bf16.msra.mxu0 %v1942
        %2033 = vmatprep.subr.bf16.mxu0 0
        %2034 = vmatpush1.bf16.msra.mxu0 %v1945
        %2035 = vmatprep.subr.bf16.mxu0 0
        %2036 = vmatpush1.bf16.msra.mxu0 %v1948
        %2037 = vmatprep.subr.bf16.mxu0 0
        %2038 = vmatpush1.bf16.msra.mxu0 %v1951
        %2039 = vmatprep.subr.bf16.mxu0 0
        %2040 = vmatpush1.bf16.msra.mxu0 %v1954
        %2041 = vmatprep.subr.bf16.mxu0 0
        %2042 = vmatpush1.bf16.msra.mxu0 %v1957
        %2043 = vmatprep.subr.bf16.mxu0 0
        %2044 = vmatpush1.bf16.msra.mxu0 %v1960
        %2045 = vmatprep.subr.bf16.mxu0 0
        %2046 = vmatpush1.bf16.msra.mxu0 %v1963
        %2047 = vmatprep.subr.bf16.mxu0 0
        %2048 = vmatpush1.bf16.msra.mxu0 0
        %2049 = vmatprep.subr.bf16.mxu0 0
        %2050 = vmatpush1.bf16.msra.mxu0 0
        %2051 = vmatprep.subr.bf16.mxu0 0
        %2052 = vmatpush1.bf16.msra.mxu0 0
        %2053 = vmatprep.subr.bf16.mxu0 0
        %2054 = vmatpush1.bf16.msra.mxu0 0
        %2055 = vmatprep.subr.bf16.mxu0 0
        %2056 = vmatpush1.bf16.msra.mxu0 0
        %2057 = vmatprep.subr.bf16.mxu0 0
        %2058 = vmatpush1.bf16.msra.mxu0 0
        %2059 = vmatprep.subr.bf16.mxu0 0
        %2060 = vmatpush1.bf16.msra.mxu0 0
        %2061 = vmatprep.subr.bf16.mxu0 0
        %2062 = vmatpush1.bf16.msra.mxu0 0
        %2063 = vmatprep.mubr.bf16.mxu0 0
        %2064 = vmatmul.mubr.bf16.gmra.mrb[0].mxu0 %v1827
        %v2065 = vpop.f32.mrb[0].mxu0
        %v2066 = vadd.f32 0.0, %v2065
        %v2067 = vpop.f32.mrb[0].mxu0
        %v2068 = vpop.f32.mrb[0].mxu0
        %v2069 = vadd.f32 0.0, %v2068
        %v2070 = vpop.f32.mrb[0].mxu0
        %2071 = vdwg.mxu0
        %v2072 = vpack.c.bf16 %v2027, %v2023
        %v2073 = vpack.c.bf16 %v2029, %v2025
        %v2074 = vpack.c.bf16 %v2069, %v2066
        %v2075 = vld [vmem:[#allocation22] sm:$0x1]
        %v2076 = vld [vmem:[%s13] sm:$0xf]
        %v2077 = vld [vmem:[%s13 + $0x4] sm:$0xf]
        %v2078 = vld [vmem:[%s13 + $0x8] sm:$0xf]
        %v2079 = vld [vmem:[%s13 + $0xc] sm:$0xf]
        %v2084 = vunpack.c.l.b16 %v2076
        %v2085 = vunpack.c.l.b16 %v2077
        %v2086 = vunpack.c.l.b16 %v2078
        %v2087 = vunpack.c.l.b16 %v2079
        %v2088 = vpack.c.b16 %v2085, %v2084
        %v2089 = vpack.c.b16 %v2087, %v2086
        %v2091 = vsel %vm899, %v2088, 0
        %v2094 = vsel %vm899, %v2089, 0
        %2096 = vmatprep.subr.bf16.mxu0 0
        %2097 = vmatpush1.bf16.msra.mxu0 %v2072
        %2098 = vmatprep.subr.bf16.mxu0 0
        %2099 = vmatpush1.bf16.msra.mxu0 0
        %2100 = vmatprep.subr.bf16.mxu0 0
        %2101 = vmatpush1.bf16.msra.mxu0 0
        %2102 = vmatprep.subr.bf16.mxu0 0
        %2103 = vmatpush1.bf16.msra.mxu0 0
        %2104 = vmatprep.subr.bf16.mxu0 0
        %2105 = vmatpush1.bf16.msra.mxu0 0
        %2106 = vmatprep.subr.bf16.mxu0 0
        %2107 = vmatpush1.bf16.msra.mxu0 0
        %2108 = vmatprep.subr.bf16.mxu0 0
        %2109 = vmatpush1.bf16.msra.mxu0 0
        %2110 = vmatprep.subr.bf16.mxu0 0
        %2111 = vmatpush1.bf16.msra.mxu0 0
        %2112 = vmatprep.subr.bf16.mxu0 0
        %2113 = vmatpush1.bf16.msra.mxu0 0
        %2114 = vmatprep.subr.bf16.mxu0 0
        %2115 = vmatpush1.bf16.msra.mxu0 0
        %2116 = vmatprep.subr.bf16.mxu0 0
        %2117 = vmatpush1.bf16.msra.mxu0 0
        %2118 = vmatprep.subr.bf16.mxu0 0
        %2119 = vmatpush1.bf16.msra.mxu0 0
        %2120 = vmatprep.subr.bf16.mxu0 0
        %2121 = vmatpush1.bf16.msra.mxu0 0
        %2122 = vmatprep.subr.bf16.mxu0 0
        %2123 = vmatpush1.bf16.msra.mxu0 0
        %2124 = vmatprep.subr.bf16.mxu0 0
        %2125 = vmatpush1.bf16.msra.mxu0 0
        %2126 = vmatprep.subr.bf16.mxu0 0
        %2127 = vmatpush1.bf16.msra.mxu0 0
        %2128 = vmatprep.mubr.bf16.mxu0 0
        %2129 = vmatmul.mubr.bf16.gmra.mrb[0].mxu0 %v2091
        %v2130 = vpop.f32.mrb[0].mxu0
        %v2131 = vadd.f32 0.0, %v2130
        %v2132 = vpop.f32.mrb[0].mxu0
        %v2133 = vpop.f32.mrb[0].mxu0
        %v2134 = vadd.f32 0.0, %v2133
        %v2135 = vpop.f32.mrb[0].mxu0
        %2136 = vmatprep.mubr.bf16.mxu0 0
        %2137 = vmatmul.mubr.bf16.gmra.mrb[0].mxu0 %v2094
        %v2138 = vpop.f32.mrb[0].mxu0
        %v2139 = vadd.f32 0.0, %v2138
        %v2140 = vpop.f32.mrb[0].mxu0
        %v2141 = vpop.f32.mrb[0].mxu0
        %v2142 = vadd.f32 0.0, %v2141
        %v2143 = vpop.f32.mrb[0].mxu0
        %2144 = vdwg.mxu0
        %v2146 = vlaneseq
        %v2147 = vshrl.u32 %v2146, 7
        %v2148 = vsub.s32 0, %v2147
        %v2149 = vrot.slane %v2075, %v2148
        %v2151 = vadd.f32 %v2149, %v2131
        %v2152 = vadd.f32 %v2149, %v2134
        %v2153 = vadd.f32 %v2149, %v2139
        %v2154 = vadd.f32 %v2149, %v2142
        %s2155 = scalar_lea.vmem %s13, 16
        %v2156 = vld [vmem:[%s2155] sm:$0xf]
        %v2157 = vld [vmem:[%s2155 + $0x4] sm:$0xf]
        %v2158 = vld [vmem:[%s2155 + $0x8] sm:$0xf]
        %v2159 = vld [vmem:[%s2155 + $0xc] sm:$0xf]
        %v2164 = vunpack.c.l.b16 %v2156
        %v2165 = vunpack.c.l.b16 %v2157
        %v2166 = vunpack.c.l.b16 %v2158
        %v2167 = vunpack.c.l.b16 %v2159
        %v2168 = vpack.c.b16 %v2165, %v2164
        %v2169 = vpack.c.b16 %v2167, %v2166
        %v2171 = vsel %vm899, %v2168, 0
        %v2174 = vsel %vm899, %v2169, 0
        %2176 = vmatprep.subr.bf16.mxu0 0
        %2177 = vmatpush1.bf16.msra.mxu0 %v2073
        %2178 = vmatprep.subr.bf16.mxu0 0
        %2179 = vmatpush1.bf16.msra.mxu0 0
        %2180 = vmatprep.subr.bf16.mxu0 0
        %2181 = vmatpush1.bf16.msra.mxu0 0
        %2182 = vmatprep.subr.bf16.mxu0 0
        %2183 = vmatpush1.bf16.msra.mxu0 0
        %2184 = vmatprep.subr.bf16.mxu0 0
        %2185 = vmatpush1.bf16.msra.mxu0 0
        %2186 = vmatprep.subr.bf16.mxu0 0
        %2187 = vmatpush1.bf16.msra.mxu0 0
        %2188 = vmatprep.subr.bf16.mxu0 0
        %2189 = vmatpush1.bf16.msra.mxu0 0
        %2190 = vmatprep.subr.bf16.mxu0 0
        %2191 = vmatpush1.bf16.msra.mxu0 0
        %2192 = vmatprep.subr.bf16.mxu0 0
        %2193 = vmatpush1.bf16.msra.mxu0 0
        %2194 = vmatprep.subr.bf16.mxu0 0
        %2195 = vmatpush1.bf16.msra.mxu0 0
        %2196 = vmatprep.subr.bf16.mxu0 0
        %2197 = vmatpush1.bf16.msra.mxu0 0
        %2198 = vmatprep.subr.bf16.mxu0 0
        %2199 = vmatpush1.bf16.msra.mxu0 0
        %2200 = vmatprep.subr.bf16.mxu0 0
        %2201 = vmatpush1.bf16.msra.mxu0 0
        %2202 = vmatprep.subr.bf16.mxu0 0
        %2203 = vmatpush1.bf16.msra.mxu0 0
        %2204 = vmatprep.subr.bf16.mxu0 0
        %2205 = vmatpush1.bf16.msra.mxu0 0
        %2206 = vmatprep.subr.bf16.mxu0 0
        %2207 = vmatpush1.bf16.msra.mxu0 0
        %2208 = vmatprep.mubr.bf16.mxu0 0
        %2209 = vmatmul.mubr.bf16.gmra.mrb[0].mxu0 %v2171
        %v2210 = vpop.f32.mrb[0].mxu0
        %v2211 = vadd.f32 0.0, %v2210
        %v2212 = vpop.f32.mrb[0].mxu0
        %v2213 = vpop.f32.mrb[0].mxu0
        %v2214 = vadd.f32 0.0, %v2213
        %v2215 = vpop.f32.mrb[0].mxu0
        %2216 = vmatprep.mubr.bf16.mxu0 0
        %2217 = vmatmul.mubr.bf16.gmra.mrb[0].mxu0 %v2174
        %v2218 = vpop.f32.mrb[0].mxu0
        %v2219 = vadd.f32 0.0, %v2218
        %v2220 = vpop.f32.mrb[0].mxu0
        %v2221 = vpop.f32.mrb[0].mxu0
        %v2222 = vadd.f32 0.0, %v2221
        %v2223 = vpop.f32.mrb[0].mxu0
        %2224 = vdwg.mxu0
        %v2225 = vadd.f32 %v2151, %v2211
        %v2226 = vadd.f32 %v2152, %v2214
        %v2227 = vadd.f32 %v2153, %v2219
        %v2228 = vadd.f32 %v2154, %v2222
        %s2229 = scalar_lea.vmem %s13, 32
        %v2230 = vld [vmem:[%s2229] sm:$0xf]
        %v2231 = vld [vmem:[%s2229 + $0x4] sm:$0xf]
        %v2232 = vld [vmem:[%s2229 + $0x8] sm:$0xf]
        %v2233 = vld [vmem:[%s2229 + $0xc] sm:$0xf]
        %v2238 = vunpack.c.l.b16 %v2230
        %v2239 = vunpack.c.l.b16 %v2231
        %v2240 = vunpack.c.l.b16 %v2232
        %v2241 = vunpack.c.l.b16 %v2233
        %v2242 = vpack.c.b16 %v2239, %v2238
        %v2243 = vpack.c.b16 %v2241, %v2240
        %v2245 = vsel %vm899, %v2242, 0
        %v2248 = vsel %vm899, %v2243, 0
        %2250 = vmatprep.subr.bf16.mxu0 0
        %2251 = vmatpush1.bf16.msra.mxu0 %v2074
        %2252 = vmatprep.subr.bf16.mxu0 0
        %2253 = vmatpush1.bf16.msra.mxu0 0
        %2254 = vmatprep.subr.bf16.mxu0 0
        %2255 = vmatpush1.bf16.msra.mxu0 0
        %2256 = vmatprep.subr.bf16.mxu0 0
        %2257 = vmatpush1.bf16.msra.mxu0 0
        %2258 = vmatprep.subr.bf16.mxu0 0
        %2259 = vmatpush1.bf16.msra.mxu0 0
        %2260 = vmatprep.subr.bf16.mxu0 0
        %2261 = vmatpush1.bf16.msra.mxu0 0
        %2262 = vmatprep.subr.bf16.mxu0 0
        %2263 = vmatpush1.bf16.msra.mxu0 0
        %2264 = vmatprep.subr.bf16.mxu0 0
        %2265 = vmatpush1.bf16.msra.mxu0 0
        %2266 = vmatprep.subr.bf16.mxu0 0
        %2267 = vmatpush1.bf16.msra.mxu0 0
        %2268 = vmatprep.subr.bf16.mxu0 0
        %2269 = vmatpush1.bf16.msra.mxu0 0
        %2270 = vmatprep.subr.bf16.mxu0 0
        %2271 = vmatpush1.bf16.msra.mxu0 0
        %2272 = vmatprep.subr.bf16.mxu0 0
        %2273 = vmatpush1.bf16.msra.mxu0 0
        %2274 = vmatprep.subr.bf16.mxu0 0
        %2275 = vmatpush1.bf16.msra.mxu0 0
        %2276 = vmatprep.subr.bf16.mxu0 0
        %2277 = vmatpush1.bf16.msra.mxu0 0
        %2278 = vmatprep.subr.bf16.mxu0 0
        %2279 = vmatpush1.bf16.msra.mxu0 0
        %2280 = vmatprep.subr.bf16.mxu0 0
        %2281 = vmatpush1.bf16.msra.mxu0 0
        %2282 = vmatprep.mubr.bf16.mxu0 0
        %2283 = vmatmul.mubr.bf16.gmra.mrb[0].mxu0 %v2245
        %v2284 = vpop.f32.mrb[0].mxu0
        %v2285 = vadd.f32 0.0, %v2284
        %v2286 = vpop.f32.mrb[0].mxu0
        %v2287 = vpop.f32.mrb[0].mxu0
        %v2288 = vadd.f32 0.0, %v2287
        %v2289 = vpop.f32.mrb[0].mxu0
        %2290 = vmatprep.mubr.bf16.mxu0 0
        %2291 = vmatmul.mubr.bf16.gmra.mrb[0].mxu0 %v2248
        %v2292 = vpop.f32.mrb[0].mxu0
        %v2293 = vadd.f32 0.0, %v2292
        %v2294 = vpop.f32.mrb[0].mxu0
        %v2295 = vpop.f32.mrb[0].mxu0
        %v2296 = vadd.f32 0.0, %v2295
        %v2297 = vpop.f32.mrb[0].mxu0
        %2298 = vdwg.mxu0
        %v2299 = vadd.f32 %v2225, %v2285
        %v2300 = vadd.f32 %v2226, %v2288
        %v2301 = vadd.f32 %v2227, %v2293
        %v2302 = vadd.f32 %v2228, %v2296
        %vm2303 = vcmp.gt.f32.partialorder %v2299, 0.0
        %vm2304 = vcmp.gt.f32.partialorder %v2300, 0.0
        %vm2305 = vcmp.gt.f32.partialorder %v2301, 0.0
        %vm2306 = vcmp.gt.f32.partialorder %v2302, 0.0
        %v2307 = vmul.f32 %v2299, 0.2
        %v2308 = vmul.f32 %v2300, 0.2
        %v2309 = vmul.f32 %v2301, 0.2
        %v2310 = vmul.f32 %v2302, 0.2
        %v2311 = vsel %vm2303, %v2299, %v2307
        %v2312 = vsel %vm2304, %v2300, %v2308
        %v2313 = vsel %vm2305, %v2301, %v2309
        %v2314 = vsel %vm2306, %v2302, %v2310
        %v2315 = vld [vmem:[#allocation23] sm:$0x1]
        %v2317 = vlaneseq
        %v2318 = vshrl.u32 %v2317, 7
        %v2319 = vsub.s32 0, %v2318
        %v2320 = vrot.slane %v2315, %v2319
        %v2322 = vmul.f32 %v2311, %v2320
        %v2323 = vmul.f32 %v2312, %v2320
        %v2324 = vmul.f32 %v2313, %v2320
        %v2325 = vmul.f32 %v2314, %v2320
        %v2326 = vld [vmem:[#allocation25] sm:$0x1]
        %v2328 = vlaneseq
        %v2329 = vshrl.u32 %v2328, 7
        %v2330 = vsub.s32 0, %v2329
        %v2331 = vrot.slane %v2326, %v2330
        %v2333 = vadd.f32 %v2322, %v2331
        %v2334 = vadd.f32 %v2323, %v2331
        %v2335 = vadd.f32 %v2324, %v2331
        %v2336 = vadd.f32 %v2325, %v2331
        %v2337 = vpack.c.bf16 %v2334, %v2333
        %v2338 = vpack.c.bf16 %v2336, %v2335
        %v2339 = vld [vmem:[#allocation26] sm:$0xff]
        %v2340 = vld [vmem:[#allocation26 + $0x8] sm:$0xf]
        %v2341 = vld [vmem:[#allocation26 + $0xc] sm:$0xff]
        %v2342 = vld [vmem:[#allocation26 + $0x14] sm:$0xf]
        %v2343 = vld [vmem:[#allocation26 + $0x18] sm:$0xff]
        %v2344 = vld [vmem:[#allocation26 + $0x20] sm:$0xf]
        %v2345 = vld [vmem:[#allocation26 + $0x24] sm:$0xff]
        %v2346 = vld [vmem:[#allocation26 + $0x2c] sm:$0xf]
        %v2347 = vld [vmem:[#allocation26 + $0x30] sm:$0xff]
        %v2348 = vld [vmem:[#allocation26 + $0x38] sm:$0xf]
        %v2349 = vld [vmem:[#allocation26 + $0x3c] sm:$0xff]
        %v2350 = vld [vmem:[#allocation26 + $0x44] sm:$0xf]
        %v2351 = vld [vmem:[#allocation26 + $0x48] sm:$0xff]
        %v2352 = vld [vmem:[#allocation26 + $0x50] sm:$0xf]
        %v2353 = vld [vmem:[#allocation26 + $0x54] sm:$0xff]
        %v2354 = vld [vmem:[#allocation26 + $0x5c] sm:$0xf]
        %v2355 = vld [vmem:[#allocation26 + $0x60] sm:$0xff]
        %v2356 = vld [vmem:[#allocation26 + $0x68] sm:$0xf]
        %v2357 = vld [vmem:[#allocation26 + $0x6c] sm:$0xff]
        %v2358 = vld [vmem:[#allocation26 + $0x74] sm:$0xf]
        %v2359 = vld [vmem:[#allocation26 + $0x78] sm:$0xff]
        %v2360 = vld [vmem:[#allocation26 + $0x80] sm:$0xf]
        %v2361 = vld [vmem:[#allocation26 + $0x84] sm:$0xff]
        %v2362 = vld [vmem:[#allocation26 + $0x8c] sm:$0xf]
        %v2363 = vld [vmem:[#allocation26 + $0x90] sm:$0xff]
        %v2364 = vld [vmem:[#allocation26 + $0x98] sm:$0xf]
        %v2365 = vld [vmem:[#allocation26 + $0x9c] sm:$0xff]
        %v2366 = vld [vmem:[#allocation26 + $0xa4] sm:$0xf]
        %v2367 = vld [vmem:[#allocation26 + $0xa8] sm:$0xff]
        %v2368 = vld [vmem:[#allocation26 + $0xb0] sm:$0xf]
        %v2369 = vld [vmem:[#allocation26 + $0xb4] sm:$0xff]
        %v2370 = vld [vmem:[#allocation26 + $0xbc] sm:$0xf]
        %v2403 = vunpack.c.l.b16 %v2339
        %v2404 = vunpack.c.h.b16 %v2339
        %v2405 = vunpack.c.l.b16 %v2340
        %v2406 = vunpack.c.l.b16 %v2341
        %v2407 = vunpack.c.h.b16 %v2341
        %v2408 = vunpack.c.l.b16 %v2342
        %v2409 = vunpack.c.l.b16 %v2343
        %v2410 = vunpack.c.h.b16 %v2343
        %v2411 = vunpack.c.l.b16 %v2344
        %v2412 = vunpack.c.l.b16 %v2345
        %v2413 = vunpack.c.h.b16 %v2345
        %v2414 = vunpack.c.l.b16 %v2346
        %v2415 = vunpack.c.l.b16 %v2347
        %v2416 = vunpack.c.h.b16 %v2347
        %v2417 = vunpack.c.l.b16 %v2348
        %v2418 = vunpack.c.l.b16 %v2349
        %v2419 = vunpack.c.h.b16 %v2349
        %v2420 = vunpack.c.l.b16 %v2350
        %v2421 = vunpack.c.l.b16 %v2351
        %v2422 = vunpack.c.h.b16 %v2351
        %v2423 = vunpack.c.l.b16 %v2352
        %v2424 = vunpack.c.l.b16 %v2353
        %v2425 = vunpack.c.h.b16 %v2353
        %v2426 = vunpack.c.l.b16 %v2354
        %v2427 = vunpack.c.l.b16 %v2355
        %v2428 = vunpack.c.h.b16 %v2355
        %v2429 = vunpack.c.l.b16 %v2356
        %v2430 = vunpack.c.l.b16 %v2357
        %v2431 = vunpack.c.h.b16 %v2357
        %v2432 = vunpack.c.l.b16 %v2358
        %v2433 = vunpack.c.l.b16 %v2359
        %v2434 = vunpack.c.h.b16 %v2359
        %v2435 = vunpack.c.l.b16 %v2360
        %v2436 = vunpack.c.l.b16 %v2361
        %v2437 = vunpack.c.h.b16 %v2361
        %v2438 = vunpack.c.l.b16 %v2362
        %v2439 = vunpack.c.l.b16 %v2363
        %v2440 = vunpack.c.h.b16 %v2363
        %v2441 = vunpack.c.l.b16 %v2364
        %v2442 = vunpack.c.l.b16 %v2365
        %v2443 = vunpack.c.h.b16 %v2365
        %v2444 = vunpack.c.l.b16 %v2366
        %v2445 = vunpack.c.l.b16 %v2367
        %v2446 = vunpack.c.h.b16 %v2367
        %v2447 = vunpack.c.l.b16 %v2368
        %v2448 = vunpack.c.l.b16 %v2369
        %v2449 = vunpack.c.h.b16 %v2369
        %v2450 = vunpack.c.l.b16 %v2370
        %v2451 = vpack.c.b16 %v2406, %v2403
        %v2452 = vpack.c.b16 %v2407, %v2404
        %v2453 = vpack.c.b16 %v2408, %v2405
        %v2454 = vpack.c.b16 %v2412, %v2409
        %v2455 = vpack.c.b16 %v2413, %v2410
        %v2456 = vpack.c.b16 %v2414, %v2411
        %v2457 = vpack.c.b16 %v2418, %v2415
        %v2458 = vpack.c.b16 %v2419, %v2416
        %v2459 = vpack.c.b16 %v2420, %v2417
        %v2460 = vpack.c.b16 %v2424, %v2421
        %v2461 = vpack.c.b16 %v2425, %v2422
        %v2462 = vpack.c.b16 %v2426, %v2423
        %v2463 = vpack.c.b16 %v2430, %v2427
        %v2464 = vpack.c.b16 %v2431, %v2428
        %v2465 = vpack.c.b16 %v2432, %v2429
        %v2466 = vpack.c.b16 %v2436, %v2433
        %v2467 = vpack.c.b16 %v2437, %v2434
        %v2468 = vpack.c.b16 %v2438, %v2435
        %v2469 = vpack.c.b16 %v2442, %v2439
        %v2470 = vpack.c.b16 %v2443, %v2440
        %v2471 = vpack.c.b16 %v2444, %v2441
        %v2472 = vpack.c.b16 %v2448, %v2445
        %v2473 = vpack.c.b16 %v2449, %v2446
        %v2474 = vpack.c.b16 %v2450, %v2447
        %2499 = vmatprep.subr.bf16.mxu0 %v2452
        %2500 = vmatpush1.bf16.msra.mxu0 %v2451
        %2501 = vmatprep.subr.bf16.mxu0 %v2455
        %2502 = vmatpush1.bf16.msra.mxu0 %v2454
        %2503 = vmatprep.subr.bf16.mxu0 %v2458
        %2504 = vmatpush1.bf16.msra.mxu0 %v2457
        %2505 = vmatprep.subr.bf16.mxu0 %v2461
        %2506 = vmatpush1.bf16.msra.mxu0 %v2460
        %2507 = vmatprep.subr.bf16.mxu0 %v2464
        %2508 = vmatpush1.bf16.msra.mxu0 %v2463
        %2509 = vmatprep.subr.bf16.mxu0 %v2467
        %2510 = vmatpush1.bf16.msra.mxu0 %v2466
        %2511 = vmatprep.subr.bf16.mxu0 %v2470
        %2512 = vmatpush1.bf16.msra.mxu0 %v2469
        %2513 = vmatprep.subr.bf16.mxu0 %v2473
        %2514 = vmatpush1.bf16.msra.mxu0 %v2472
        %2515 = vmatprep.subr.bf16.mxu0 0
        %2516 = vmatpush1.bf16.msra.mxu0 0
        %2517 = vmatprep.subr.bf16.mxu0 0
        %2518 = vmatpush1.bf16.msra.mxu0 0
        %2519 = vmatprep.subr.bf16.mxu0 0
        %2520 = vmatpush1.bf16.msra.mxu0 0
        %2521 = vmatprep.subr.bf16.mxu0 0
        %2522 = vmatpush1.bf16.msra.mxu0 0
        %2523 = vmatprep.subr.bf16.mxu0 0
        %2524 = vmatpush1.bf16.msra.mxu0 0
        %2525 = vmatprep.subr.bf16.mxu0 0
        %2526 = vmatpush1.bf16.msra.mxu0 0
        %2527 = vmatprep.subr.bf16.mxu0 0
        %2528 = vmatpush1.bf16.msra.mxu0 0
        %2529 = vmatprep.subr.bf16.mxu0 0
        %2530 = vmatpush1.bf16.msra.mxu0 0
        %2531 = vmatprep.mubr.bf16.mxu0 0
        %2532 = vmatmul.mubr.bf16.gmra.mrb[0].mxu0 %v2337
        %v2533 = vpop.f32.mrb[0].mxu0
        %v2534 = vadd.f32 0.0, %v2533
        %v2535 = vpop.f32.mrb[0].mxu0
        %v2536 = vadd.f32 0.0, %v2535
        %v2537 = vpop.f32.mrb[0].mxu0
        %v2538 = vadd.f32 0.0, %v2537
        %v2539 = vpop.f32.mrb[0].mxu0
        %v2540 = vadd.f32 0.0, %v2539
        %2541 = vmatprep.mubr.bf16.mxu0 0
        %2542 = vmatmul.mubr.bf16.gmra.mrb[0].mxu0 %v2338
        %v2543 = vpop.f32.mrb[0].mxu0
        %v2544 = vadd.f32 0.0, %v2543
        %v2545 = vpop.f32.mrb[0].mxu0
        %v2546 = vadd.f32 0.0, %v2545
        %v2547 = vpop.f32.mrb[0].mxu0
        %v2548 = vadd.f32 0.0, %v2547
        %v2549 = vpop.f32.mrb[0].mxu0
        %v2550 = vadd.f32 0.0, %v2549
        %2551 = vdwg.mxu0
        %2552 = vmatprep.subr.bf16.mxu0 0
        %2553 = vmatpush1.bf16.msra.mxu0 %v2453
        %2554 = vmatprep.subr.bf16.mxu0 0
        %2555 = vmatpush1.bf16.msra.mxu0 %v2456
        %2556 = vmatprep.subr.bf16.mxu0 0
        %2557 = vmatpush1.bf16.msra.mxu0 %v2459
        %2558 = vmatprep.subr.bf16.mxu0 0
        %2559 = vmatpush1.bf16.msra.mxu0 %v2462
        %2560 = vmatprep.subr.bf16.mxu0 0
        %2561 = vmatpush1.bf16.msra.mxu0 %v2465
        %2562 = vmatprep.subr.bf16.mxu0 0
        %2563 = vmatpush1.bf16.msra.mxu0 %v2468
        %2564 = vmatprep.subr.bf16.mxu0 0
        %2565 = vmatpush1.bf16.msra.mxu0 %v2471
        %2566 = vmatprep.subr.bf16.mxu0 0
        %2567 = vmatpush1.bf16.msra.mxu0 %v2474
        %2568 = vmatprep.subr.bf16.mxu0 0
        %2569 = vmatpush1.bf16.msra.mxu0 0
        %2570 = vmatprep.subr.bf16.mxu0 0
        %2571 = vmatpush1.bf16.msra.mxu0 0
        %2572 = vmatprep.subr.bf16.mxu0 0
        %2573 = vmatpush1.bf16.msra.mxu0 0
        %2574 = vmatprep.subr.bf16.mxu0 0
        %2575 = vmatpush1.bf16.msra.mxu0 0
        %2576 = vmatprep.subr.bf16.mxu0 0
        %2577 = vmatpush1.bf16.msra.mxu0 0
        %2578 = vmatprep.subr.bf16.mxu0 0
        %2579 = vmatpush1.bf16.msra.mxu0 0
        %2580 = vmatprep.subr.bf16.mxu0 0
        %2581 = vmatpush1.bf16.msra.mxu0 0
        %2582 = vmatprep.subr.bf16.mxu0 0
        %2583 = vmatpush1.bf16.msra.mxu0 0
        %2584 = vmatprep.mubr.bf16.mxu0 0
        %2585 = vmatmul.mubr.bf16.gmra.mrb[0].mxu0 %v2337
        %v2586 = vpop.f32.mrb[0].mxu0
        %v2587 = vadd.f32 0.0, %v2586
        %v2588 = vpop.f32.mrb[0].mxu0
        %v2589 = vpop.f32.mrb[0].mxu0
        %v2590 = vadd.f32 0.0, %v2589
        %v2591 = vpop.f32.mrb[0].mxu0
        %2592 = vmatprep.mubr.bf16.mxu0 0
        %2593 = vmatmul.mubr.bf16.gmra.mrb[0].mxu0 %v2338
        %v2594 = vpop.f32.mrb[0].mxu0
        %v2595 = vadd.f32 0.0, %v2594
        %v2596 = vpop.f32.mrb[0].mxu0
        %v2597 = vpop.f32.mrb[0].mxu0
        %v2598 = vadd.f32 0.0, %v2597
        %v2599 = vpop.f32.mrb[0].mxu0
        %2600 = vdwg.mxu0
        %v2601 = vpack.c.bf16 %v2538, %v2534
        %v2602 = vpack.c.bf16 %v2540, %v2536
        %v2603 = vpack.c.bf16 %v2590, %v2587
        %v2604 = vpack.c.bf16 %v2548, %v2544
        %v2605 = vpack.c.bf16 %v2550, %v2546
        %v2606 = vpack.c.bf16 %v2598, %v2595
        %v2607 = vld [vmem:[#allocation28] sm:$0x1]
        %v2608 = vld [vmem:[%s18] sm:$0xf]
        %v2609 = vld [vmem:[%s18 + $0x4] sm:$0xf]
        %v2610 = vld [vmem:[%s18 + $0x8] sm:$0xf]
        %v2611 = vld [vmem:[%s18 + $0xc] sm:$0xf]
        %v2612 = vld [vmem:[%s18 + $0x10] sm:$0xf]
        %v2613 = vld [vmem:[%s18 + $0x14] sm:$0xf]
        %v2614 = vld [vmem:[%s18 + $0x18] sm:$0xf]
        %v2615 = vld [vmem:[%s18 + $0x1c] sm:$0xf]
        %v2624 = vunpack.c.l.b16 %v2608
        %v2625 = vunpack.c.l.b16 %v2609
        %v2626 = vunpack.c.l.b16 %v2610
        %v2627 = vunpack.c.l.b16 %v2611
        %v2628 = vunpack.c.l.b16 %v2612
        %v2629 = vunpack.c.l.b16 %v2613
        %v2630 = vunpack.c.l.b16 %v2614
        %v2631 = vunpack.c.l.b16 %v2615
        %v2632 = vpack.c.b16 %v2625, %v2624
        %v2633 = vpack.c.b16 %v2627, %v2626
        %v2634 = vpack.c.b16 %v2629, %v2628
        %v2635 = vpack.c.b16 %v2631, %v2630
        %vm2636 = vcmask 261120
        %v2638 = vsel %vm2636, %v2632, 0
        %v2641 = vsel %vm2636, %v2633, 0
        %v2644 = vsel %vm2636, %v2634, 0
        %v2647 = vsel %vm2636, %v2635, 0
        %2649 = vmatprep.subr.bf16.mxu0 0
        %2650 = vmatpush1.bf16.msra.mxu0 %v2601
        %2651 = vmatprep.subr.bf16.mxu0 0
        %2652 = vmatpush1.bf16.msra.mxu0 %v2604
        %2653 = vmatprep.subr.bf16.mxu0 0
        %2654 = vmatpush1.bf16.msra.mxu0 0
        %2655 = vmatprep.subr.bf16.mxu0 0
        %2656 = vmatpush1.bf16.msra.mxu0 0
        %2657 = vmatprep.subr.bf16.mxu0 0
        %2658 = vmatpush1.bf16.msra.mxu0 0
        %2659 = vmatprep.subr.bf16.mxu0 0
        %2660 = vmatpush1.bf16.msra.mxu0 0
        %2661 = vmatprep.subr.bf16.mxu0 0
        %2662 = vmatpush1.bf16.msra.mxu0 0
        %2663 = vmatprep.subr.bf16.mxu0 0
        %2664 = vmatpush1.bf16.msra.mxu0 0
        %2665 = vmatprep.subr.bf16.mxu0 0
        %2666 = vmatpush1.bf16.msra.mxu0 0
        %2667 = vmatprep.subr.bf16.mxu0 0
        %2668 = vmatpush1.bf16.msra.mxu0 0
        %2669 = vmatprep.subr.bf16.mxu0 0
        %2670 = vmatpush1.bf16.msra.mxu0 0
        %2671 = vmatprep.subr.bf16.mxu0 0
        %2672 = vmatpush1.bf16.msra.mxu0 0
        %2673 = vmatprep.subr.bf16.mxu0 0
        %2674 = vmatpush1.bf16.msra.mxu0 0
        %2675 = vmatprep.subr.bf16.mxu0 0
        %2676 = vmatpush1.bf16.msra.mxu0 0
        %2677 = vmatprep.subr.bf16.mxu0 0
        %2678 = vmatpush1.bf16.msra.mxu0 0
        %2679 = vmatprep.subr.bf16.mxu0 0
        %2680 = vmatpush1.bf16.msra.mxu0 0
        %2681 = vmatprep.mubr.bf16.mxu0 0
        %2682 = vmatmul.mubr.bf16.gmra.mrb[0].mxu0 %v2638
        %v2683 = vpop.f32.mrb[0].mxu0
        %v2684 = vadd.f32 0.0, %v2683
        %v2685 = vpop.f32.mrb[0].mxu0
        %v2686 = vpop.f32.mrb[0].mxu0
        %v2687 = vadd.f32 0.0, %v2686
        %v2688 = vpop.f32.mrb[0].mxu0
        %2689 = vmatprep.mubr.bf16.mxu0 0
        %2690 = vmatmul.mubr.bf16.gmra.mrb[0].mxu0 %v2641
        %v2691 = vpop.f32.mrb[0].mxu0
        %v2692 = vadd.f32 0.0, %v2691
        %v2693 = vpop.f32.mrb[0].mxu0
        %v2694 = vpop.f32.mrb[0].mxu0
        %v2695 = vadd.f32 0.0, %v2694
        %v2696 = vpop.f32.mrb[0].mxu0
        %2697 = vmatprep.mubr.bf16.mxu0 0
        %2698 = vmatmul.mubr.bf16.gmra.mrb[0].mxu0 %v2644
        %v2699 = vpop.f32.mrb[0].mxu0
        %v2700 = vadd.f32 0.0, %v2699
        %v2701 = vpop.f32.mrb[0].mxu0
        %v2702 = vpop.f32.mrb[0].mxu0
        %v2703 = vadd.f32 0.0, %v2702
        %v2704 = vpop.f32.mrb[0].mxu0
        %2705 = vmatprep.mubr.bf16.mxu0 0
        %2706 = vmatmul.mubr.bf16.gmra.mrb[0].mxu0 %v2647
        %v2707 = vpop.f32.mrb[0].mxu0
        %v2708 = vadd.f32 0.0, %v2707
        %v2709 = vpop.f32.mrb[0].mxu0
        %v2710 = vpop.f32.mrb[0].mxu0
        %v2711 = vadd.f32 0.0, %v2710
        %v2712 = vpop.f32.mrb[0].mxu0
        %2713 = vdwg.mxu0
        %v2715 = vlaneseq
        %v2716 = vshrl.u32 %v2715, 7
        %v2717 = vsub.s32 0, %v2716
        %v2718 = vrot.slane %v2607, %v2717
        %v2720 = vadd.f32 %v2718, %v2684
        %v2721 = vadd.f32 %v2718, %v2687
        %v2722 = vadd.f32 %v2718, %v2692
        %v2723 = vadd.f32 %v2718, %v2695
        %v2724 = vadd.f32 %v2718, %v2700
        %v2725 = vadd.f32 %v2718, %v2703
        %v2726 = vadd.f32 %v2718, %v2708
        %v2727 = vadd.f32 %v2718, %v2711
        %s2728 = scalar_lea.vmem %s18, 32
        %v2729 = vld [vmem:[%s2728] sm:$0xf]
        %v2730 = vld [vmem:[%s2728 + $0x4] sm:$0xf]
        %v2731 = vld [vmem:[%s2728 + $0x8] sm:$0xf]
        %v2732 = vld [vmem:[%s2728 + $0xc] sm:$0xf]
        %v2733 = vld [vmem:[%s2728 + $0x10] sm:$0xf]
        %v2734 = vld [vmem:[%s2728 + $0x14] sm:$0xf]
        %v2735 = vld [vmem:[%s2728 + $0x18] sm:$0xf]
        %v2736 = vld [vmem:[%s2728 + $0x1c] sm:$0xf]
        %v2745 = vunpack.c.l.b16 %v2729
        %v2746 = vunpack.c.l.b16 %v2730
        %v2747 = vunpack.c.l.b16 %v2731
        %v2748 = vunpack.c.l.b16 %v2732
        %v2749 = vunpack.c.l.b16 %v2733
        %v2750 = vunpack.c.l.b16 %v2734
        %v2751 = vunpack.c.l.b16 %v2735
        %v2752 = vunpack.c.l.b16 %v2736
        %v2753 = vpack.c.b16 %v2746, %v2745
        %v2754 = vpack.c.b16 %v2748, %v2747
        %v2755 = vpack.c.b16 %v2750, %v2749
        %v2756 = vpack.c.b16 %v2752, %v2751
        %v2758 = vsel %vm2636, %v2753, 0
        %v2761 = vsel %vm2636, %v2754, 0
        %v2764 = vsel %vm2636, %v2755, 0
        %v2767 = vsel %vm2636, %v2756, 0
        %2769 = vmatprep.subr.bf16.mxu0 0
        %2770 = vmatpush1.bf16.msra.mxu0 %v2602
        %2771 = vmatprep.subr.bf16.mxu0 0
        %2772 = vmatpush1.bf16.msra.mxu0 %v2605
        %2773 = vmatprep.subr.bf16.mxu0 0
        %2774 = vmatpush1.bf16.msra.mxu0 0
        %2775 = vmatprep.subr.bf16.mxu0 0
        %2776 = vmatpush1.bf16.msra.mxu0 0
        %2777 = vmatprep.subr.bf16.mxu0 0
        %2778 = vmatpush1.bf16.msra.mxu0 0
        %2779 = vmatprep.subr.bf16.mxu0 0
        %2780 = vmatpush1.bf16.msra.mxu0 0
        %2781 = vmatprep.subr.bf16.mxu0 0
        %2782 = vmatpush1.bf16.msra.mxu0 0
        %2783 = vmatprep.subr.bf16.mxu0 0
        %2784 = vmatpush1.bf16.msra.mxu0 0
        %2785 = vmatprep.subr.bf16.mxu0 0
        %2786 = vmatpush1.bf16.msra.mxu0 0
        %2787 = vmatprep.subr.bf16.mxu0 0
        %2788 = vmatpush1.bf16.msra.mxu0 0
        %2789 = vmatprep.subr.bf16.mxu0 0
        %2790 = vmatpush1.bf16.msra.mxu0 0
        %2791 = vmatprep.subr.bf16.mxu0 0
        %2792 = vmatpush1.bf16.msra.mxu0 0
        %2793 = vmatprep.subr.bf16.mxu0 0
        %2794 = vmatpush1.bf16.msra.mxu0 0
        %2795 = vmatprep.subr.bf16.mxu0 0
        %2796 = vmatpush1.bf16.msra.mxu0 0
        %2797 = vmatprep.subr.bf16.mxu0 0
        %2798 = vmatpush1.bf16.msra.mxu0 0
        %2799 = vmatprep.subr.bf16.mxu0 0
        %2800 = vmatpush1.bf16.msra.mxu0 0
        %2801 = vmatprep.mubr.bf16.mxu0 0
        %2802 = vmatmul.mubr.bf16.gmra.mrb[0].mxu0 %v2758
        %v2803 = vpop.f32.mrb[0].mxu0
        %v2804 = vadd.f32 0.0, %v2803
        %v2805 = vpop.f32.mrb[0].mxu0
        %v2806 = vpop.f32.mrb[0].mxu0
        %v2807 = vadd.f32 0.0, %v2806
        %v2808 = vpop.f32.mrb[0].mxu0
        %2809 = vmatprep.mubr.bf16.mxu0 0
        %2810 = vmatmul.mubr.bf16.gmra.mrb[0].mxu0 %v2761
        %v2811 = vpop.f32.mrb[0].mxu0
        %v2812 = vadd.f32 0.0, %v2811
        %v2813 = vpop.f32.mrb[0].mxu0
        %v2814 = vpop.f32.mrb[0].mxu0
        %v2815 = vadd.f32 0.0, %v2814
        %v2816 = vpop.f32.mrb[0].mxu0
        %2817 = vmatprep.mubr.bf16.mxu0 0
        %2818 = vmatmul.mubr.bf16.gmra.mrb[0].mxu0 %v2764
        %v2819 = vpop.f32.mrb[0].mxu0
        %v2820 = vadd.f32 0.0, %v2819
        %v2821 = vpop.f32.mrb[0].mxu0
        %v2822 = vpop.f32.mrb[0].mxu0
        %v2823 = vadd.f32 0.0, %v2822
        %v2824 = vpop.f32.mrb[0].mxu0
        %2825 = vmatprep.mubr.bf16.mxu0 0
        %2826 = vmatmul.mubr.bf16.gmra.mrb[0].mxu0 %v2767
        %v2827 = vpop.f32.mrb[0].mxu0
        %v2828 = vadd.f32 0.0, %v2827
        %v2829 = vpop.f32.mrb[0].mxu0
        %v2830 = vpop.f32.mrb[0].mxu0
        %v2831 = vadd.f32 0.0, %v2830
        %v2832 = vpop.f32.mrb[0].mxu0
        %2833 = vdwg.mxu0
        %v2834 = vadd.f32 %v2720, %v2804
        %v2835 = vadd.f32 %v2721, %v2807
        %v2836 = vadd.f32 %v2722, %v2812
        %v2837 = vadd.f32 %v2723, %v2815
        %v2838 = vadd.f32 %v2724, %v2820
        %v2839 = vadd.f32 %v2725, %v2823
        %v2840 = vadd.f32 %v2726, %v2828
        %v2841 = vadd.f32 %v2727, %v2831
        %s2842 = scalar_lea.vmem %s18, 64
        %v2843 = vld [vmem:[%s2842] sm:$0xf]
        %v2844 = vld [vmem:[%s2842 + $0x4] sm:$0xf]
        %v2845 = vld [vmem:[%s2842 + $0x8] sm:$0xf]
        %v2846 = vld [vmem:[%s2842 + $0xc] sm:$0xf]
        %v2847 = vld [vmem:[%s2842 + $0x10] sm:$0xf]
        %v2848 = vld [vmem:[%s2842 + $0x14] sm:$0xf]
        %v2849 = vld [vmem:[%s2842 + $0x18] sm:$0xf]
        %v2850 = vld [vmem:[%s2842 + $0x1c] sm:$0xf]
        %v2859 = vunpack.c.l.b16 %v2843
        %v2860 = vunpack.c.l.b16 %v2844
        %v2861 = vunpack.c.l.b16 %v2845
        %v2862 = vunpack.c.l.b16 %v2846
        %v2863 = vunpack.c.l.b16 %v2847
        %v2864 = vunpack.c.l.b16 %v2848
        %v2865 = vunpack.c.l.b16 %v2849
        %v2866 = vunpack.c.l.b16 %v2850
        %v2867 = vpack.c.b16 %v2860, %v2859
        %v2868 = vpack.c.b16 %v2862, %v2861
        %v2869 = vpack.c.b16 %v2864, %v2863
        %v2870 = vpack.c.b16 %v2866, %v2865
        %v2872 = vsel %vm2636, %v2867, 0
        %v2875 = vsel %vm2636, %v2868, 0
        %v2878 = vsel %vm2636, %v2869, 0
        %v2881 = vsel %vm2636, %v2870, 0
        %2883 = vmatprep.subr.bf16.mxu0 0
        %2884 = vmatpush1.bf16.msra.mxu0 %v2603
        %2885 = vmatprep.subr.bf16.mxu0 0
        %2886 = vmatpush1.bf16.msra.mxu0 %v2606
        %2887 = vmatprep.subr.bf16.mxu0 0
        %2888 = vmatpush1.bf16.msra.mxu0 0
        %2889 = vmatprep.subr.bf16.mxu0 0
        %2890 = vmatpush1.bf16.msra.mxu0 0
        %2891 = vmatprep.subr.bf16.mxu0 0
        %2892 = vmatpush1.bf16.msra.mxu0 0
        %2893 = vmatprep.subr.bf16.mxu0 0
        %2894 = vmatpush1.bf16.msra.mxu0 0
        %2895 = vmatprep.subr.bf16.mxu0 0
        %2896 = vmatpush1.bf16.msra.mxu0 0
        %2897 = vmatprep.subr.bf16.mxu0 0
        %2898 = vmatpush1.bf16.msra.mxu0 0
        %2899 = vmatprep.subr.bf16.mxu0 0
        %2900 = vmatpush1.bf16.msra.mxu0 0
        %2901 = vmatprep.subr.bf16.mxu0 0
        %2902 = vmatpush1.bf16.msra.mxu0 0
        %2903 = vmatprep.subr.bf16.mxu0 0
        %2904 = vmatpush1.bf16.msra.mxu0 0
        %2905 = vmatprep.subr.bf16.mxu0 0
        %2906 = vmatpush1.bf16.msra.mxu0 0
        %2907 = vmatprep.subr.bf16.mxu0 0
        %2908 = vmatpush1.bf16.msra.mxu0 0
        %2909 = vmatprep.subr.bf16.mxu0 0
        %2910 = vmatpush1.bf16.msra.mxu0 0
        %2911 = vmatprep.subr.bf16.mxu0 0
        %2912 = vmatpush1.bf16.msra.mxu0 0
        %2913 = vmatprep.subr.bf16.mxu0 0
        %2914 = vmatpush1.bf16.msra.mxu0 0
        %2915 = vmatprep.mubr.bf16.mxu0 0
        %2916 = vmatmul.mubr.bf16.gmra.mrb[0].mxu0 %v2872
        %v2917 = vpop.f32.mrb[0].mxu0
        %v2918 = vadd.f32 0.0, %v2917
        %v2919 = vpop.f32.mrb[0].mxu0
        %v2920 = vpop.f32.mrb[0].mxu0
        %v2921 = vadd.f32 0.0, %v2920
        %v2922 = vpop.f32.mrb[0].mxu0
        %2923 = vmatprep.mubr.bf16.mxu0 0
        %2924 = vmatmul.mubr.bf16.gmra.mrb[0].mxu0 %v2875
        %v2925 = vpop.f32.mrb[0].mxu0
        %v2926 = vadd.f32 0.0, %v2925
        %v2927 = vpop.f32.mrb[0].mxu0
        %v2928 = vpop.f32.mrb[0].mxu0
        %v2929 = vadd.f32 0.0, %v2928
        %v2930 = vpop.f32.mrb[0].mxu0
        %2931 = vmatprep.mubr.bf16.mxu0 0
        %2932 = vmatmul.mubr.bf16.gmra.mrb[0].mxu0 %v2878
        %v2933 = vpop.f32.mrb[0].mxu0
        %v2934 = vadd.f32 0.0, %v2933
        %v2935 = vpop.f32.mrb[0].mxu0
        %v2936 = vpop.f32.mrb[0].mxu0
        %v2937 = vadd.f32 0.0, %v2936
        %v2938 = vpop.f32.mrb[0].mxu0
        %2939 = vmatprep.mubr.bf16.mxu0 0
        %2940 = vmatmul.mubr.bf16.gmra.mrb[0].mxu0 %v2881
        %v2941 = vpop.f32.mrb[0].mxu0
        %v2942 = vadd.f32 0.0, %v2941
        %v2943 = vpop.f32.mrb[0].mxu0
        %v2944 = vpop.f32.mrb[0].mxu0
        %v2945 = vadd.f32 0.0, %v2944
        %v2946 = vpop.f32.mrb[0].mxu0
        %2947 = vdwg.mxu0
        %v2948 = vadd.f32 %v2834, %v2918
        %v2949 = vadd.f32 %v2835, %v2921
        %v2950 = vadd.f32 %v2836, %v2926
        %v2951 = vadd.f32 %v2837, %v2929
        %v2952 = vadd.f32 %v2838, %v2934
        %v2953 = vadd.f32 %v2839, %v2937
        %v2954 = vadd.f32 %v2840, %v2942
        %v2955 = vadd.f32 %v2841, %v2945
        %2956 = vst [vmem:[%s883] sm:$0xff] %v2948
        %2957 = vst [vmem:[%s883 + $0x8] sm:$0xff] %v2949
        %2958 = vst [vmem:[%s883 + $0x10] sm:$0xff] %v2950
        %2959 = vst [vmem:[%s883 + $0x18] sm:$0xff] %v2951
        %2960 = vst [vmem:[%s883 + $0x20] sm:$0xff] %v2952
        %2961 = vst [vmem:[%s883 + $0x28] sm:$0xff] %v2953
        %2962 = vst [vmem:[%s883 + $0x30] sm:$0xff] %v2954
        %2963 = vst [vmem:[%s883 + $0x38] sm:$0xff] %v2955
        %p2964 = scmp.lt.s32.totalorder %s43, 1
        %s2965 = scalar_select %p2964, %s43, 1
        %s2966 = smul.addr %s2965, 8
        %s2967 = smul.addr %s2966, 8
        %s2968 = scalar_lea.vmem %s21, %s2967
        // Predicated region
        $region173: #{decoder_forward.1} parent=103 // pred_check
          %p2969 = pneg %p507
        $region174: #{decoder_forward.1} parent=103 // pred_check_branch
          %2971 = sbr.rel (%p2969) target = $region176
        $region175: #{decoder_forward.1} parent=103 // pred_region
          _
        $region176: #{decoder_forward.1} parent=103 // pred_fallthru
          _
      $region104: #{decoder_forward.1} parent=5 // pred_fallthru
        _
      %p2972 = scmp.le.s32.totalorder 2, %s38
      // Predicated region
      $region177: #{decoder_forward.1} parent=5 // pred_check
        %p2973 = pneg %p2972
      $region178: #{decoder_forward.1} parent=5 // pred_check_branch
        %2975 = sbr.rel (%p2973) target = $region180
      $region179: #{decoder_forward.1} parent=5 // pred_region
        %s2976 = ssub.s32 %s38, 2
        // Predicated region
        $region181: #{decoder_forward.1} parent=179 // pred_check
          %p2977 = pneg %p513
        $region182: #{decoder_forward.1} parent=179 // pred_check_branch
          %2979 = sbr.rel (%p2977) target = $region184
        $region183: #{decoder_forward.1} parent=179 // pred_region
          %p2980 = scmp.lt.s32.totalorder %s44, 1
          %s2981 = scalar_select %p2980, %s44, 1
          %s2982 = smul.addr %s2981, 8
          %s2983 = smul.addr %s2982, 8
          %s2984 = scalar_lea.vmem %s21, %s2983
        $region184: #{decoder_forward.1} parent=179 // pred_fallthru
          _
      $region180: #{decoder_forward.1} parent=5 // pred_fallthru
        _
    $region6: #{decoder_forward.1} parent=1 // loop_footer
      %s42 = sadd.s32 1, %s38
    $region7: #{decoder_forward.1} parent=1 // loop_footer_branch
      %37 = sbr.rel target = $region3
    $region8: #{decoder_forward.1} parent=1 // loop_exit
      _
    %2985 = vsyncpa [#allocation4], 1
    %s2986 = scalar_lea.sflag [#allocation4], 1
    %2987 = vsyncpa %s2986, 1
    %2988 = vsyncpa [#allocation6], 1
    %2989 = vsyncpa [#allocation9], 1
    %2990 = vsyncpa [#allocation12], 1
    %2991 = vsyncpa [#allocation15], 1
    %2992 = vsyncpa [#allocation18], 1
    %2993 = vsyncpa [#allocation21], 1
    %2994 = vsyncpa [#allocation24], 1
    %2995 = vsyncpa [#allocation27], 1

</llo_original>
